<compile_context>
chip_gen: v5e
topology: v5e:2x2
jax: 0.10.0
libtpu: 0.0.40
codegen_flags: <defaults>
</compile_context>

<pallas_src>
import functools

import jax
import jax.numpy as jnp
from jax.experimental import pallas as pl
from jax.experimental.pallas import tpu as pltpu

# ----------------------------- config ---------------------------------------
CARDINALITY = 4          # real model: 64
STEM_OUT = 16            # real model: 64
NUM_CLASSES = 6
LANES = 128              # all channel dims padded to one 128-lane slab
VMEM_LIMIT = 32 * 1024 * 1024
NEG_INF = -3.0e38        # representable in bf16

# one bottleneck block per stage: (group-conv width D, block output channels, stride)
STAGES = [
    dict(width=16, out=32, stride=1),
    dict(width=32, out=64, stride=2),
]


def _round_up(x, m):
    return ((x + m - 1) // m) * m


def _pad_to(a, shape):
    pads = [(0, t - s) for s, t in zip(a.shape, shape)]
    return jnp.pad(a, pads)


def _detect_multi_tc():
    # v7x has 2 TensorCores per chip: prefer >= 2 grid steps on the M axis.
    # v5e/v6e (1 TC) prefer the largest tile.
    try:
        kind = jax.devices()[0].device_kind.lower()
        return ("v7" in kind) or ("7x" in kind)
    except Exception:
        return False


_MULTI_TC = _detect_multi_tc()


def _choose_tm(mp, cap):
    """Largest divisor of mp (a multiple of 8) that is a multiple of 8, <= cap."""
    best = 8
    for d in range(8, min(mp, cap) + 1, 8):
        if mp % d == 0:
            best = d
    return best


# ----------------------------- Pallas kernels --------------------------------
def _mm_kernel(a_ref, b_ref, bias_ref, o_ref, *, relu):
    # relu?( A @ B + bias ); bf16 MXU operands, f32 accumulate + epilogue.
    acc = jnp.dot(a_ref[...], b_ref[...], preferred_element_type=jnp.float32)
    acc = acc + bias_ref[...]
    if relu:
        acc = jnp.maximum(acc, 0.0)
    o_ref[...] = acc.astype(o_ref.dtype)


def _mm_proj_res_kernel(a_ref, b_ref, bias_ref, pa_ref, pw_ref, pb_ref, o_ref):
    # Fused c3 + projection shortcut:  relu( A@B + b  +  PA@PW + pb ).
    acc = jnp.dot(a_ref[...], b_ref[...], preferred_element_type=jnp.float32)
    acc = acc + jnp.dot(pa_ref[...], pw_ref[...],
                        preferred_element_type=jnp.float32)
    acc = acc + bias_ref[...] + pb_ref[...]
    acc = jnp.maximum(acc, 0.0)
    o_ref[...] = acc.astype(o_ref.dtype)


def _conv_tap_kernel(x_ref, w_ref, b_ref, o_ref, *, k, s, ho, wo_eff,
                     plane_rows, relu):
    # One image per grid step.  x_ref: (1, s*s*plane_rows, plane_cols, Cin_p)
    # phase-split (or just padded, for s=1) input; w_ref: (k*k, Cin_p, Cout_p);
    # reduction over the k*k taps happens in-register (f32 accumulator).
    co = o_ref.shape[-1]
    acc = jnp.zeros((ho * wo_eff, co), jnp.float32)
    for dy in range(k):
        for dx in range(k):
            ph = (dy % s) * s + (dx % s)
            base = ph * plane_rows + dy // s
            qx = dx // s
            xt = x_ref[0, base:base + ho, qx:qx + wo_eff, :]
            xt = xt.reshape(ho * wo_eff, xt.shape[-1])
            acc = acc + jnp.dot(xt, w_ref[dy * k + dx],
                                preferred_element_type=jnp.float32)
    acc = acc + b_ref[...]
    if relu:
        acc = jnp.maximum(acc, 0.0)
    o_ref[0] = acc.astype(o_ref.dtype)


def _maxpool_kernel(x_ref, o_ref, *, k, s, ho, wo_eff, plane_rows):
    # Running max over the k*k taps in bf16 (no stacked-window materialization).
    # TODO(synk): on v5e (no bf16 VALU) an f32 accumulator may be preferable.
    c = o_ref.shape[-1]
    m = jnp.full((ho, wo_eff, c), NEG_INF, o_ref.dtype)
    for dy in range(k):
        for dx in range(k):
            ph = (dy % s) * s + (dx % s)
            base = ph * plane_rows + dy // s
            qx = dx // s
            m = jnp.maximum(m, x_ref[0, base:base + ho, qx:qx + wo_eff, :])
    o_ref[0] = m


def _pool_fc_kernel(x_ref, w_ref, b_ref, o_ref):
    # Global average pool + FC; classes padded to 128 (lane-dense output).
    x = x_ref[...].astype(jnp.float32)          # (N, H*W, C)
    pooled = jnp.mean(x, axis=1)                # (N, C) f32
    o_ref[...] = (
        jnp.dot(pooled.astype(jnp.bfloat16), w_ref[...],
                preferred_element_type=jnp.float32)
        + b_ref[...]
    )


# ----------------------------- Pallas wrappers --------------------------------
def _m_tiling(m, tm):
    mp = _round_up(m, 8)
    t = _choose_tm(mp, tm)
    if _MULTI_TC and mp // t < 2 and mp % 16 == 0:
        t = mp // 2                       # give both v7x TensorCores a step
    return mp, t


def matmul_bias_act(x2d, w, bias, *, relu, tm=512):
    """relu?( x2d @ w + bias ); x2d/w bf16, bias f32, f32 epilogue."""
    m, k = x2d.shape
    kw, n = w.shape
    assert kw == k
    mp, tmm = _m_tiling(m, tm)
    if mp != m:
        x2d = _pad_to(x2d, (mp, k))

    out = pl.pallas_call(
        functools.partial(_mm_kernel, relu=relu),
        out_shape=jax.ShapeDtypeStruct((mp, n), jnp.bfloat16),
        grid=(mp // tmm,),
        in_specs=[
            pl.BlockSpec((tmm, k), lambda i: (i, 0)),
            pl.BlockSpec((k, n), lambda i: (0, 0)),
            pl.BlockSpec((1, n), lambda i: (0, 0)),
        ],
        out_specs=pl.BlockSpec((tmm, n), lambda i: (i, 0)),
        compiler_params=pltpu.CompilerParams(
            dimension_semantics=("parallel",),
            vmem_limit_bytes=VMEM_LIMIT,
        ),
    )(x2d, w, bias.reshape(1, n).astype(jnp.float32))
    return out[:m] if mp != m else out


def matmul_proj_residual(x2d, w, bias, proj_in, proj_w, proj_bias, *, tm=512):
    """relu( x2d @ w + bias + proj_in @ proj_w + proj_bias ) — fused c3 + shortcut."""
    m, k = x2d.shape
    _, n = w.shape
    kp = proj_in.shape[1]
    mp, tmm = _m_tiling(m, tm)
    if mp != m:
        x2d = _pad_to(x2d, (mp, k))
        proj_in = _pad_to(proj_in, (mp, kp))

    out = pl.pallas_call(
        _mm_proj_res_kernel,
        out_shape=jax.ShapeDtypeStruct((mp, n), jnp.bfloat16),
        grid=(mp // tmm,),
        in_specs=[
            pl.BlockSpec((tmm, k), lambda i: (i, 0)),
            pl.BlockSpec((k, n), lambda i: (0, 0)),
            pl.BlockSpec((1, n), lambda i: (0, 0)),
            pl.BlockSpec((tmm, kp), lambda i: (i, 0)),
            pl.BlockSpec((kp, n), lambda i: (0, 0)),
            pl.BlockSpec((1, n), lambda i: (0, 0)),
        ],
        out_specs=pl.BlockSpec((tmm, n), lambda i: (i, 0)),
        compiler_params=pltpu.CompilerParams(
            dimension_semantics=("parallel",),
            vmem_limit_bytes=VMEM_LIMIT,
        ),
    )(x2d, w, bias.reshape(1, n).astype(jnp.float32),
      proj_in, proj_w, proj_bias.reshape(1, n).astype(jnp.float32))
    return out[:m] if mp != m else out


def _phase_split(x, k, s, p, pad_value, wo_eff):
    """Pad (and for s>1, space-to-depth phase-split) so every tap is unstrided.

    Returns planes of shape (N, s*s*Pr, Pc, C); tap (dy, dx) reads rows
    [phase*Pr + dy//s, ... + Ho) and cols [dx//s, ... + wo_eff).
    """
    n, h, w, c = x.shape
    ho = (h + 2 * p - k) // s + 1
    wo = (w + 2 * p - k) // s + 1
    need_h = s * ((k - 1) // s + ho)
    need_w = s * ((k - 1) // s + wo_eff)
    hpe = _round_up(max(h + 2 * p, need_h), s)
    wpe = _round_up(max(w + 2 * p, need_w), s)
    xp = jnp.pad(x, ((0, 0), (p, hpe - h - p), (p, wpe - w - p), (0, 0)),
                 constant_values=pad_value)
    if s == 1:
        # Stride-1: the phase transpose is the identity -> skip the extra
        # reshape/transpose pass over the (bandwidth-bound) activation.
        return xp, ho, wo, hpe, wpe
    pr, pc = hpe // s, wpe // s
    planes = xp.reshape(n, pr, s, pc, s, c)
    planes = planes.transpose(0, 2, 4, 1, 3, 5).reshape(n, s * s * pr, pc, c)
    return planes, ho, wo, pr, pc


def conv2d_tap(x, w_taps, bias, *, k, s, p, relu):
    """k x k conv (stride s, pad p) with BN folded; bias+ReLU fused epilogue."""
    n, h, w, cp = x.shape
    co = w_taps.shape[-1]
    wo = (w + 2 * p - k) // s + 1
    wo_eff = _round_up(wo, 8)        # keep in-kernel reshapes sublane-aligned
    planes, ho, wo, pr, pc = _phase_split(x, k, s, p, 0.0, wo_eff)
    ss_pr = planes.shape[1]

    out = pl.pallas_call(
        functools.partial(_conv_tap_kernel, k=k, s=s, ho=ho, wo_eff=wo_eff,
                          plane_rows=pr, relu=relu),
        out_shape=jax.ShapeDtypeStruct((n, ho * wo_eff, co), jnp.bfloat16),
        grid=(n,),
        in_specs=[
            pl.BlockSpec((1, ss_pr, pc, cp), lambda i: (i, 0, 0, 0)),
            pl.BlockSpec(w_taps.shape, lambda i: (0, 0, 0)),
            pl.BlockSpec((1, co), lambda i: (0, 0)),
        ],
        out_specs=pl.BlockSpec((1, ho * wo_eff, co), lambda i: (i, 0, 0)),
        compiler_params=pltpu.CompilerParams(
            dimension_semantics=("parallel",),
            vmem_limit_bytes=VMEM_LIMIT,
        ),
    )(planes, w_taps, bias.reshape(1, co).astype(jnp.float32))

    out = out.reshape(n, ho, wo_eff, co)
    if wo_eff != wo:
        # padded columns hold relu(bias) garbage; slice them off immediately
        out = out[:, :, :wo, :]
    return out


def stem_conv(x, w_km, bias, *, k=7, s=2, p=3):
    """7x7/s2 stem on the raw 3-channel input: wrapper im2col (K = k*k*3 = 147,
    padded to 256) + ONE lane-dense MXU matmul with fused bias+ReLU."""
    n, h, w, c = x.shape
    ho = (h + 2 * p - k) // s + 1
    wo = (w + 2 * p - k) // s + 1
    xp = jnp.pad(x, ((0, 0), (p, p), (p, p), (0, 0))).astype(jnp.bfloat16)
    taps = []
    for dy in range(k):
        for dx in range(k):
            taps.append(xp[:, dy:dy + s * ho:s, dx:dx + s * wo:s, :])
    patches = jnp.concatenate(taps, axis=-1)              # (n, ho, wo, k*k*c)
    kk = k * k * c
    kpad = _round_up(kk, LANES)                           # 147 -> 256
    patches = _pad_to(patches.reshape(n * ho * wo, kk), (n * ho * wo, kpad))
    out = matmul_bias_act(patches.astype(jnp.bfloat16), w_km, bias, relu=True)
    return out.reshape(n, ho, wo, LANES)


def maxpool3x3s2(x):
    """3x3 max pool, stride 2, pad 1 (ResNeXt stem), NHWC bf16."""
    n, h, w, c = x.shape
    k, s, p = 3, 2, 1
    wo0 = (w + 2 * p - k) // s + 1
    planes, ho, wo, pr, pc = _phase_split(x, k, s, p, NEG_INF, wo0)
    ss_pr = planes.shape[1]
    out = pl.pallas_call(
        functools.partial(_maxpool_kernel, k=k, s=s, ho=ho, wo_eff=wo,
                          plane_rows=pr),
        out_shape=jax.ShapeDtypeStruct((n, ho, wo, c), jnp.bfloat16),
        grid=(n,),
        in_specs=[pl.BlockSpec((1, ss_pr, pc, c), lambda i: (i, 0, 0, 0))],
        out_specs=pl.BlockSpec((1, ho, wo, c), lambda i: (i, 0, 0, 0)),
        compiler_params=pltpu.CompilerParams(
            dimension_semantics=("parallel",),
            vmem_limit_bytes=VMEM_LIMIT,
        ),
    )(planes)
    return out


def pool_fc(x, w, b):
    """Global average pool + FC; classes padded to 128 lanes, sliced outside."""
    n, h, w_, c = x.shape
    xf = x.reshape(n, h * w_, c)
    co = w.shape[1]
    out = pl.pallas_call(
        _pool_fc_kernel,
        out_shape=jax.ShapeDtypeStruct((n, co), jnp.float32),
        grid=(1,),
        in_specs=[
            pl.BlockSpec((n, h * w_, c), lambda i: (0, 0, 0)),
            pl.BlockSpec((c, co), lambda i: (0, 0)),
            pl.BlockSpec((1, co), lambda i: (0, 0)),
        ],
        out_specs=pl.BlockSpec((n, co), lambda i: (0, 0)),
        compiler_params=pltpu.CompilerParams(vmem_limit_bytes=VMEM_LIMIT),
    )(xf, w, b.reshape(1, co))
    return out


# ----------------------------- parameters ------------------------------------
def _conv_bn_params(key, k, cin, cout):
    k1, k2, k3 = jax.random.split(key, 3)
    w = jax.random.normal(k1, (k, k, cin, cout), jnp.float32) / jnp.sqrt(
        float(k * k * cin))
    gamma = 1.0 + 0.1 * jax.random.normal(k2, (cout,), jnp.float32)
    beta = 0.1 * jax.random.normal(k3, (cout,), jnp.float32)
    mean = jnp.zeros((cout,), jnp.float32)
    var = jnp.ones((cout,), jnp.float32)
    eps = 1e-5
    scale = gamma / jnp.sqrt(var + eps)
    return w * scale, beta - mean * scale          # BN folded into (w, b)


def _as_taps(w):
    # (k, k, cin, cout) -> (k*k, 128, 128) zero-padded, bf16
    k = w.shape[0]
    w = w.reshape(k * k, w.shape[2], w.shape[3])
    return _pad_to(w, (k * k, LANES, LANES)).astype(jnp.bfloat16)


def _as_mm(w):
    # (1, 1, cin, cout) -> (128, 128) zero-padded, bf16
    w = w.reshape(w.shape[2], w.shape[3])
    return _pad_to(w, (LANES, LANES)).astype(jnp.bfloat16)


def _as_stem_mm(w):
    # (k, k, 3, cout) -> (round_up(k*k*3, 128), 128) zero-padded, bf16
    k = w.shape[0]
    kk = k * k * w.shape[2]
    w = w.reshape(kk, w.shape[3])
    return _pad_to(w, (_round_up(kk, LANES), LANES)).astype(jnp.bfloat16)


def _pad_bias(b):
    return _pad_to(b, (LANES,)).astype(jnp.float32)


def _group_to_dense(w, groups):
    # torch groups semantics: output-channel block g uses input-channel block g.
    kh, kw, cg_in, cout = w.shape
    cin = cg_in * groups
    cg_out = cout // groups
    dense = jnp.zeros((kh, kw, cin, cout), w.dtype)
    for g in range(groups):
        dense = dense.at[:, :, g * cg_in:(g + 1) * cg_in,
                         g * cg_out:(g + 1) * cg_out].set(
                             w[:, :, :, g * cg_out:(g + 1) * cg_out])
    return dense


def init_params(key):
    keys = iter(jax.random.split(key, 64))
    params = {}
    ws, bs = _conv_bn_params(next(keys), 7, 3, STEM_OUT)
    params["stem_w"] = _as_stem_mm(ws)
    params["stem_b"] = _pad_bias(bs)

    blocks = []
    cin = STEM_OUT
    for stg in STAGES:
        d, cout = stg["width"], stg["out"]
        w1, b1 = _conv_bn_params(next(keys), 1, cin, d)
        w2, b2 = _conv_bn_params(next(keys), 3, d // CARDINALITY, d)
        w3, b3 = _conv_bn_params(next(keys), 1, d, cout)
        wd, bd = _conv_bn_params(next(keys), 1, cin, cout)
        blocks.append({
            "c1_w": _as_mm(w1), "c1_b": _pad_bias(b1),
            "c2_w": _as_taps(_group_to_dense(w2, CARDINALITY)),
            "c2_b": _pad_bias(b2),
            "c3_w": _as_mm(w3), "c3_b": _pad_bias(b3),
            "down_w": _as_mm(wd), "down_b": _pad_bias(bd),
        })
        cin = cout
    params["blocks"] = blocks

    kf1, kf2 = jax.random.split(next(keys))
    fcw = jax.random.normal(kf1, (cin, NUM_CLASSES), jnp.float32) / jnp.sqrt(
        float(cin))
    fcb = 0.01 * jax.random.normal(kf2, (NUM_CLASSES,), jnp.float32)
    params["fc_w"] = _pad_to(fcw, (LANES, LANES)).astype(jnp.bfloat16)
    params["fc_b"] = _pad_to(fcb, (LANES,)).astype(jnp.float32)
    return params


# ----------------------------- forward ----------------------------------------
def bottleneck(x, blk, stride):
    # Both toy blocks have cin != cout, so (like torch ResNeXt's first block of
    # each stage) the shortcut is a 1x1 projection — fused into the c3 kernel.
    n, h, w, _ = x.shape
    xf = x.reshape(n * h * w, LANES)

    if stride == 1:
        idn_in = xf
    else:
        # TODO(synk): read the stride-2 identity in-kernel (strided pl.ds /
        # phase plane) instead of a wrapper-side strided slice.
        idn_in = x[:, ::stride, ::stride, :].reshape(-1, LANES)

    # 1x1 reduce + ReLU
    out = matmul_bias_act(xf, blk["c1_w"], blk["c1_b"], relu=True)
    out = out.reshape(n, h, w, LANES)
    # grouped 3x3 (single call, block-diagonal packed weight) + ReLU
    out = conv2d_tap(out, blk["c2_w"], blk["c2_b"], k=3, s=stride, p=1,
                     relu=True)
    n2, ho, wo, _ = out.shape
    # 1x1 expand with FUSED projection shortcut + residual add + ReLU
    out = matmul_proj_residual(out.reshape(n2 * ho * wo, LANES),
                               blk["c3_w"], blk["c3_b"],
                               idn_in, blk["down_w"], blk["down_b"])
    return out.reshape(n2, ho, wo, LANES)


def resnext_forward(params, x_nchw):
    x = jnp.transpose(x_nchw, (0, 2, 3, 1))                 # NCHW -> NHWC
    x = stem_conv(x, params["stem_w"], params["stem_b"])    # 7x7/s2 + BN + ReLU
    x = maxpool3x3s2(x)
    for stg, blk in zip(STAGES, params["blocks"]):
        x = bottleneck(x, blk, stg["stride"])
    logits = pool_fc(x, params["fc_w"], params["fc_b"])
    return logits[:, :NUM_CLASSES]


# ----------------------------- main --------------------------------------------
if __name__ == "__main__":
    key = jax.random.PRNGKey(0)
    kx, kp = jax.random.split(key)
    # PyTorch-style NCHW input, small: batch=2, 3 channels, 32x32 spatial
    x = jax.random.normal(kx, (2, 3, 32, 32), jnp.float32)
    params = init_params(kp)

    fwd = jax.jit(resnext_forward)
    out = fwd(params, x)
    out = jax.block_until_ready(out)

    assert out.shape == (2, NUM_CLASSES), out.shape
    assert out.dtype == jnp.float32
    assert bool(jnp.all(jnp.isfinite(out)))
    print("KERNEL_OK")
</pallas_src>

<mosaic_0001>
module attributes {stable_mosaic.version = 11 : i64} {
  func.func @_mm_kernel(%arg0: i32, %arg1: memref<512x256xbf16, #tpu.memory_space<vmem>>, %arg2: memref<256x128xbf16, #tpu.memory_space<vmem>>, %arg3: memref<1x128xf32, #tpu.memory_space<vmem>>, %arg4: memref<512x128xbf16, #tpu.memory_space<vmem>>) attributes {dimension_semantics = [#tpu.dimension_semantics<parallel>], iteration_bounds = array<i64: 1>, scalar_prefetch = 0 : i64, scratch_operands = 0 : i64, tpu.core_type = #tpu.core_type<tc>, window_params = [{transform_indices = @transform_0, window_bounds = array<i64: 512, 256>}, {pipeline_mode = #tpu.pipeline_mode<synchronous>, transform_indices = @transform_1, window_bounds = array<i64: 256, 128>}, {pipeline_mode = #tpu.pipeline_mode<synchronous>, transform_indices = @transform_2, window_bounds = array<i64: 1, 128>}, {transform_indices = @transform_3, window_bounds = array<i64: 512, 128>}]} {
    %c0 = arith.constant 0 : index
    %c0_0 = arith.constant 0 : index
    %0 = vector.load %arg1[%c0, %c0_0] : memref<512x256xbf16, #tpu.memory_space<vmem>>, vector<512x256xbf16>
    %c0_1 = arith.constant 0 : index
    %c0_2 = arith.constant 0 : index
    %1 = vector.load %arg2[%c0_1, %c0_2] : memref<256x128xbf16, #tpu.memory_space<vmem>>, vector<256x128xbf16>
    %cst = arith.constant dense<0.000000e+00> : vector<512x128xf32>
    %2 = tpu.matmul %0, %1, %cst {dimension_numbers = #tpu.dot_dimension_numbers<[1], [0], [0], [1], [0, 0, 1, 1], [], []>} : vector<512x256xbf16>, vector<256x128xbf16>, vector<512x128xf32> -> vector<512x128xf32>
    %c0_3 = arith.constant 0 : index
    %c0_4 = arith.constant 0 : index
    %3 = vector.load %arg3[%c0_3, %c0_4] : memref<1x128xf32, #tpu.memory_space<vmem>>, vector<1x128xf32>
    %4 = vector.broadcast %3 : vector<1x128xf32> to vector<512x128xf32>
    %5 = arith.addf %2, %4 : vector<512x128xf32>
    %cst_5 = arith.constant 0.000000e+00 : f32
    %6 = vector.broadcast %cst_5 : f32 to vector<512x128xf32>
    %7 = arith.maximumf %5, %6 : vector<512x128xf32>
    %8 = arith.truncf %7 : vector<512x128xf32> to vector<512x128xbf16>
    %c0_6 = arith.constant 0 : index
    %c0_7 = arith.constant 0 : index
    %9 = vector.load %arg4[%c0_6, %c0_7] : memref<512x128xbf16, #tpu.memory_space<vmem>>, vector<512x128xbf16>
    tpu.vector_store %arg4[%c0_6, %c0_7], %8 {strides = array<i32>} : memref<512x128xbf16, #tpu.memory_space<vmem>>, vector<512x128xbf16>,
    return
  }
  func.func @transform_0(%arg0: i32) -> (i32, i32) {
    %c0_i32 = arith.constant 0 : i32
    %c0_i32_0 = arith.constant 0 : i32
    return %arg0, %c0_i32 : i32, i32
  }
  func.func @transform_1(%arg0: i32) -> (i32, i32) {
    %c0_i32 = arith.constant 0 : i32
    %c0_i32_0 = arith.constant 0 : i32
    %c0_i32_1 = arith.constant 0 : i32
    return %c0_i32, %c0_i32_0 : i32, i32
  }
  func.func @transform_2(%arg0: i32) -> (i32, i32) {
    %c0_i32 = arith.constant 0 : i32
    %c0_i32_0 = arith.constant 0 : i32
    %c0_i32_1 = arith.constant 0 : i32
    return %c0_i32, %c0_i32_0 : i32, i32
  }
  func.func @transform_3(%arg0: i32) -> (i32, i32) {
    %c0_i32 = arith.constant 0 : i32
    %c0_i32_0 = arith.constant 0 : i32
    return %arg0, %c0_i32 : i32, i32
  }
}

module attributes {stable_mosaic.version = 11 : i64} {
  func.func @_maxpool_kernel(%arg0: i32, %arg1: memref<1x36x9x128xbf16, #tpu.memory_space<vmem>>, %arg2: memref<1x8x8x128xbf16, #tpu.memory_space<vmem>>) attributes {dimension_semantics = [#tpu.dimension_semantics<parallel>], iteration_bounds = array<i64: 2>, scalar_prefetch = 0 : i64, scratch_operands = 0 : i64, tpu.core_type = #tpu.core_type<tc>, window_params = [{transform_indices = @transform_0, window_bounds = array<i64: 1, 36, 9, 128>}, {transform_indices = @transform_1, window_bounds = array<i64: 1, 8, 8, 128>}]} {
    %cst = arith.constant -3.004060e+38 : bf16
    %0 = vector.broadcast %cst : bf16 to vector<8x8x128xbf16>
    %c0 = arith.constant 0 : index
    %c0_0 = arith.constant 0 : index
    %c0_1 = arith.constant 0 : index
    %c0_2 = arith.constant 0 : index
    %1 = vector.load %arg1[%c0, %c0_0, %c0_1, %c0_2] : memref<1x36x9x128xbf16, #tpu.memory_space<vmem>>, vector<1x8x8x128xbf16>
    %2 = vector.shape_cast %1 : vector<1x8x8x128xbf16> to vector<8x8x128xbf16>
    %3 = arith.maximumf %0, %2 : vector<8x8x128xbf16>
    %c0_3 = arith.constant 0 : index
    %c9 = arith.constant 9 : index
    %c0_4 = arith.constant 0 : index
    %c0_5 = arith.constant 0 : index
    %4 = vector.load %arg1[%c0_3, %c9, %c0_4, %c0_5] : memref<1x36x9x128xbf16, #tpu.memory_space<vmem>>, vector<1x8x8x128xbf16>
    %5 = vector.shape_cast %4 : vector<1x8x8x128xbf16> to vector<8x8x128xbf16>
    %6 = arith.maximumf %3, %5 : vector<8x8x128xbf16>
    %c0_6 = arith.constant 0 : index
    %c0_7 = arith.constant 0 : index
    %c1 = arith.constant 1 : index
    %c0_8 = arith.constant 0 : index
    %7 = vector.load %arg1[%c0_6, %c0_7, %c1, %c0_8] : memref<1x36x9x128xbf16, #tpu.memory_space<vmem>>, vector<1x8x8x128xbf16>
    %8 = vector.shape_cast %7 : vector<1x8x8x128xbf16> to vector<8x8x128xbf16>
    %9 = arith.maximumf %6, %8 : vector<8x8x128xbf16>
    %c0_9 = arith.constant 0 : index
    %c18 = arith.constant 18 : index
    %c0_10 = arith.constant 0 : index
    %c0_11 = arith.constant 0 : index
    %10 = vector.load %arg1[%c0_9, %c18, %c0_10, %c0_11] : memref<1x36x9x128xbf16, #tpu.memory_space<vmem>>, vector<1x8x8x128xbf16>
    %11 = vector.shape_cast %10 : vector<1x8x8x128xbf16> to vector<8x8x128xbf16>
    %12 = arith.maximumf %9, %11 : vector<8x8x128xbf16>
    %c0_12 = arith.constant 0 : index
    %c27 = arith.constant 27 : index
    %c0_13 = arith.constant 0 : index
    %c0_14 = arith.constant 0 : index
    %13 = vector.load %arg1[%c0_12, %c27, %c0_13, %c0_14] : memref<1x36x9x128xbf16, #tpu.memory_space<vmem>>, vector<1x8x8x128xbf16>
    %14 = vector.shape_cast %13 : vector<1x8x8x128xbf16> to vector<8x8x128xbf16>
    %15 = arith.maximumf %12, %14 : vector<8x8x128xbf16>
    %c0_15 = arith.constant 0 : index
    %c18_16 = arith.constant 18 : index
    %c1_17 = arith.constant 1 : index
    %c0_18 = arith.constant 0 : index
    %16 = vector.load %arg1[%c0_15, %c18_16, %c1_17, %c0_18] : memref<1x36x9x128xbf16, #tpu.memory_space<vmem>>, vector<1x8x8x128xbf16>
    %17 = vector.shape_cast %16 : vector<1x8x8x128xbf16> to vector<8x8x128xbf16>
    %18 = arith.maximumf %15, %17 : vector<8x8x128xbf16>
    %c0_19 = arith.constant 0 : index
    %c1_20 = arith.constant 1 : index
    %c0_21 = arith.constant 0 : index
    %c0_22 = arith.constant 0 : index
    %19 = vector.load %arg1[%c0_19, %c1_20, %c0_21, %c0_22] : memref<1x36x9x128xbf16, #tpu.memory_space<vmem>>, vector<1x8x8x128xbf16>
    %20 = vector.shape_cast %19 : vector<1x8x8x128xbf16> to vector<8x8x128xbf16>
    %21 = arith.maximumf %18, %20 : vector<8x8x128xbf16>
    %c0_23 = arith.constant 0 : index
    %c10 = arith.constant 10 : index
    %c0_24 = arith.constant 0 : index
    %c0_25 = arith.constant 0 : index
    %22 = vector.load %arg1[%c0_23, %c10, %c0_24, %c0_25] : memref<1x36x9x128xbf16, #tpu.memory_space<vmem>>, vector<1x8x8x128xbf16>
    %23 = vector.shape_cast %22 : vector<1x8x8x128xbf16> to vector<8x8x128xbf16>
    %24 = arith.maximumf %21, %23 : vector<8x8x128xbf16>
    %c0_26 = arith.constant 0 : index
    %c1_27 = arith.constant 1 : index
    %c1_28 = arith.constant 1 : index
    %c0_29 = arith.constant 0 : index
    %25 = vector.load %arg1[%c0_26, %c1_27, %c1_28, %c0_29] : memref<1x36x9x128xbf16, #tpu.memory_space<vmem>>, vector<1x8x8x128xbf16>
    %26 = vector.shape_cast %25 : vector<1x8x8x128xbf16> to vector<8x8x128xbf16>
    %27 = arith.maximumf %24, %26 : vector<8x8x128xbf16>
    %c0_30 = arith.constant 0 : index
    %c0_31 = arith.constant 0 : index
    %c0_32 = arith.constant 0 : index
    %c0_33 = arith.constant 0 : index
    %28 = vector.load %arg2[%c0_30, %c0_31, %c0_32, %c0_33] : memref<1x8x8x128xbf16, #tpu.memory_space<vmem>>, vector<1x8x8x128xbf16>
    %29 = vector.shape_cast %28 : vector<1x8x8x128xbf16> to vector<8x8x128xbf16>
    %30 = vector.shape_cast %27 : vector<8x8x128xbf16> to vector<1x8x8x128xbf16>
    tpu.vector_store %arg2[%c0_30, %c0_31, %c0_32, %c0_33], %30 {strides = array<i32>} : memref<1x8x8x128xbf16, #tpu.memory_space<vmem>>, vector<1x8x8x128xbf16>,
    return
  }
  func.func @transform_0(%arg0: i32) -> (i32, i32, i32, i32) {
    %c0_i32 = arith.constant 0 : i32
    %c0_i32_0 = arith.constant 0 : i32
    %c0_i32_1 = arith.constant 0 : i32
    %c0_i32_2 = arith.constant 0 : i32
    return %arg0, %c0_i32, %c0_i32_0, %c0_i32_1 : i32, i32, i32, i32
  }
  func.func @transform_1(%arg0: i32) -> (i32, i32, i32, i32) {
    %c0_i32 = arith.constant 0 : i32
    %c0_i32_0 = arith.constant 0 : i32
    %c0_i32_1 = arith.constant 0 : i32
    %c0_i32_2 = arith.constant 0 : i32
    return %arg0, %c0_i32, %c0_i32_0, %c0_i32_1 : i32, i32, i32, i32
  }
}

module attributes {stable_mosaic.version = 11 : i64} {
  func.func @_mm_kernel(%arg0: i32, %arg1: memref<128x128xbf16, #tpu.memory_space<vmem>>, %arg2: memref<128x128xbf16, #tpu.memory_space<vmem>>, %arg3: memref<1x128xf32, #tpu.memory_space<vmem>>, %arg4: memref<128x128xbf16, #tpu.memory_space<vmem>>) attributes {dimension_semantics = [#tpu.dimension_semantics<parallel>], iteration_bounds = array<i64: 1>, scalar_prefetch = 0 : i64, scratch_operands = 0 : i64, tpu.core_type = #tpu.core_type<tc>, window_params = [{transform_indices = @transform_0, window_bounds = array<i64: 128, 128>}, {pipeline_mode = #tpu.pipeline_mode<synchronous>, transform_indices = @transform_1, window_bounds = array<i64: 128, 128>}, {pipeline_mode = #tpu.pipeline_mode<synchronous>, transform_indices = @transform_2, window_bounds = array<i64: 1, 128>}, {transform_indices = @transform_3, window_bounds = array<i64: 128, 128>}]} {
    %c0 = arith.constant 0 : index
    %c0_0 = arith.constant 0 : index
    %0 = vector.load %arg1[%c0, %c0_0] : memref<128x128xbf16, #tpu.memory_space<vmem>>, vector<128x128xbf16>
    %c0_1 = arith.constant 0 : index
    %c0_2 = arith.constant 0 : index
    %1 = vector.load %arg2[%c0_1, %c0_2] : memref<128x128xbf16, #tpu.memory_space<vmem>>, vector<128x128xbf16>
    %cst = arith.constant dense<0.000000e+00> : vector<128x128xf32>
    %2 = tpu.matmul %0, %1, %cst {dimension_numbers = #tpu.dot_dimension_numbers<[1], [0], [0], [1], [0, 0, 1, 1], [], []>} : vector<128x128xbf16>, vector<128x128xbf16>, vector<128x128xf32> -> vector<128x128xf32>
    %c0_3 = arith.constant 0 : index
    %c0_4 = arith.constant 0 : index
    %3 = vector.load %arg3[%c0_3, %c0_4] : memref<1x128xf32, #tpu.memory_space<vmem>>, vector<1x128xf32>
    %4 = vector.broadcast %3 : vector<1x128xf32> to vector<128x128xf32>
    %5 = arith.addf %2, %4 : vector<128x128xf32>
    %cst_5 = arith.constant 0.000000e+00 : f32
    %6 = vector.broadcast %cst_5 : f32 to vector<128x128xf32>
    %7 = arith.maximumf %5, %6 : vector<128x128xf32>
    %8 = arith.truncf %7 : vector<128x128xf32> to vector<128x128xbf16>
    %c0_6 = arith.constant 0 : index
    %c0_7 = arith.constant 0 : index
    %9 = vector.load %arg4[%c0_6, %c0_7] : memref<128x128xbf16, #tpu.memory_space<vmem>>, vector<128x128xbf16>
    tpu.vector_store %arg4[%c0_6, %c0_7], %8 {strides = array<i32>} : memref<128x128xbf16, #tpu.memory_space<vmem>>, vector<128x128xbf16>,
    return
  }
  func.func @transform_0(%arg0: i32) -> (i32, i32) {
    %c0_i32 = arith.constant 0 : i32
    %c0_i32_0 = arith.constant 0 : i32
    return %arg0, %c0_i32 : i32, i32
  }
  func.func @transform_1(%arg0: i32) -> (i32, i32) {
    %c0_i32 = arith.constant 0 : i32
    %c0_i32_0 = arith.constant 0 : i32
    %c0_i32_1 = arith.constant 0 : i32
    return %c0_i32, %c0_i32_0 : i32, i32
  }
  func.func @transform_2(%arg0: i32) -> (i32, i32) {
    %c0_i32 = arith.constant 0 : i32
    %c0_i32_0 = arith.constant 0 : i32
    %c0_i32_1 = arith.constant 0 : i32
    return %c0_i32, %c0_i32_0 : i32, i32
  }
  func.func @transform_3(%arg0: i32) -> (i32, i32) {
    %c0_i32 = arith.constant 0 : i32
    %c0_i32_0 = arith.constant 0 : i32
    return %arg0, %c0_i32 : i32, i32
  }
}

module attributes {stable_mosaic.version = 11 : i64} {
  func.func @_conv_tap_kernel(%arg0: i32, %arg1: memref<1x10x10x128xbf16, #tpu.memory_space<vmem>>, %arg2: memref<9x128x128xbf16, #tpu.memory_space<vmem>>, %arg3: memref<1x128xf32, #tpu.memory_space<vmem>>, %arg4: memref<1x64x128xbf16, #tpu.memory_space<vmem>>) attributes {dimension_semantics = [#tpu.dimension_semantics<parallel>], iteration_bounds = array<i64: 2>, scalar_prefetch = 0 : i64, scratch_operands = 0 : i64, tpu.core_type = #tpu.core_type<tc>, window_params = [{transform_indices = @transform_0, window_bounds = array<i64: 1, 10, 10, 128>}, {pipeline_mode = #tpu.pipeline_mode<synchronous>, transform_indices = @transform_1, window_bounds = array<i64: 9, 128, 128>}, {pipeline_mode = #tpu.pipeline_mode<synchronous>, transform_indices = @transform_2, window_bounds = array<i64: 1, 128>}, {transform_indices = @transform_3, window_bounds = array<i64: 1, 64, 128>}]} {
    %cst = arith.constant 0.000000e+00 : f32
    %0 = vector.broadcast %cst : f32 to vector<64x128xf32>
    %c0 = arith.constant 0 : index
    %c0_0 = arith.constant 0 : index
    %c0_1 = arith.constant 0 : index
    %c0_2 = arith.constant 0 : index
    %1 = vector.load %arg1[%c0, %c0_0, %c0_1, %c0_2] : memref<1x10x10x128xbf16, #tpu.memory_space<vmem>>, vector<1x8x8x128xbf16>
    %2 = vector.shape_cast %1 : vector<1x8x8x128xbf16> to vector<8x8x128xbf16>
    %3 = vector.shape_cast %2 : vector<8x8x128xbf16> to vector<64x128xbf16>
    %c0_3 = arith.constant 0 : index
    %c0_4 = arith.constant 0 : index
    %c0_5 = arith.constant 0 : index
    %4 = vector.load %arg2[%c0_3, %c0_4, %c0_5] : memref<9x128x128xbf16, #tpu.memory_space<vmem>>, vector<1x128x128xbf16>
    %5 = vector.shape_cast %4 : vector<1x128x128xbf16> to vector<128x128xbf16>
    %cst_6 = arith.constant dense<0.000000e+00> : vector<64x128xf32>
    %6 = tpu.matmul %3, %5, %cst_6 {dimension_numbers = #tpu.dot_dimension_numbers<[1], [0], [0], [1], [0, 0, 1, 1], [], []>} : vector<64x128xbf16>, vector<128x128xbf16>, vector<64x128xf32> -> vector<64x128xf32>
    %7 = arith.addf %0, %6 : vector<64x128xf32>
    %c0_7 = arith.constant 0 : index
    %c0_8 = arith.constant 0 : index
    %c1 = arith.constant 1 : index
    %c0_9 = arith.constant 0 : index
    %8 = vector.load %arg1[%c0_7, %c0_8, %c1, %c0_9] : memref<1x10x10x128xbf16, #tpu.memory_space<vmem>>, vector<1x8x8x128xbf16>
    %9 = vector.shape_cast %8 : vector<1x8x8x128xbf16> to vector<8x8x128xbf16>
    %10 = vector.shape_cast %9 : vector<8x8x128xbf16> to vector<64x128xbf16>
    %c1_10 = arith.constant 1 : index
    %c0_11 = arith.constant 0 : index
    %c0_12 = arith.constant 0 : index
    %11 = vector.load %arg2[%c1_10, %c0_11, %c0_12] : memref<9x128x128xbf16, #tpu.memory_space<vmem>>, vector<1x128x128xbf16>
    %12 = vector.shape_cast %11 : vector<1x128x128xbf16> to vector<128x128xbf16>
    %cst_13 = arith.constant dense<0.000000e+00> : vector<64x128xf32>
    %13 = tpu.matmul %10, %12, %cst_13 {dimension_numbers = #tpu.dot_dimension_numbers<[1], [0], [0], [1], [0, 0, 1, 1], [], []>} : vector<64x128xbf16>, vector<128x128xbf16>, vector<64x128xf32> -> vector<64x128xf32>
    %14 = arith.addf %7, %13 : vector<64x128xf32>
    %c0_14 = arith.constant 0 : index
    %c0_15 = arith.constant 0 : index
    %c2 = arith.constant 2 : index
    %c0_16 = arith.constant 0 : index
    %15 = vector.load %arg1[%c0_14, %c0_15, %c2, %c0_16] : memref<1x10x10x128xbf16, #tpu.memory_space<vmem>>, vector<1x8x8x128xbf16>
    %16 = vector.shape_cast %15 : vector<1x8x8x128xbf16> to vector<8x8x128xbf16>
    %17 = vector.shape_cast %16 : vector<8x8x128xbf16> to vector<64x128xbf16>
    %c2_17 = arith.constant 2 : index
    %c0_18 = arith.constant 0 : index
    %c0_19 = arith.constant 0 : index
    %18 = vector.load %arg2[%c2_17, %c0_18, %c0_19] : memref<9x128x128xbf16, #tpu.memory_space<vmem>>, vector<1x128x128xbf16>
    %19 = vector.shape_cast %18 : vector<1x128x128xbf16> to vector<128x128xbf16>
    %cst_20 = arith.constant dense<0.000000e+00> : vector<64x128xf32>
    %20 = tpu.matmul %17, %19, %cst_20 {dimension_numbers = #tpu.dot_dimension_numbers<[1], [0], [0], [1], [0, 0, 1, 1], [], []>} : vector<64x128xbf16>, vector<128x128xbf16>, vector<64x128xf32> -> vector<64x128xf32>
    %21 = arith.addf %14, %20 : vector<64x128xf32>
    %c0_21 = arith.constant 0 : index
    %c1_22 = arith.constant 1 : index
    %c0_23 = arith.constant 0 : index
    %c0_24 = arith.constant 0 : index
    %22 = vector.load %arg1[%c0_21, %c1_22, %c0_23, %c0_24] : memref<1x10x10x128xbf16, #tpu.memory_space<vmem>>, vector<1x8x8x128xbf16>
    %23 = vector.shape_cast %22 : vector<1x8x8x128xbf16> to vector<8x8x128xbf16>
    %24 = vector.shape_cast %23 : vector<8x8x128xbf16> to vector<64x128xbf16>
    %c3 = arith.constant 3 : index
    %c0_25 = arith.constant 0 : index
    %c0_26 = arith.constant 0 : index
    %25 = vector.load %arg2[%c3, %c0_25, %c0_26] : memref<9x128x128xbf16, #tpu.memory_space<vmem>>, vector<1x128x128xbf16>
    %26 = vector.shape_cast %25 : vector<1x128x128xbf16> to vector<128x128xbf16>
    %cst_27 = arith.constant dense<0.000000e+00> : vector<64x128xf32>
    %27 = tpu.matmul %24, %26, %cst_27 {dimension_numbers = #tpu.dot_dimension_numbers<[1], [0], [0], [1], [0, 0, 1, 1], [], []>} : vector<64x128xbf16>, vector<128x128xbf16>, vector<64x128xf32> -> vector<64x128xf32>
    %28 = arith.addf %21, %27 : vector<64x128xf32>
    %c0_28 = arith.constant 0 : index
    %c1_29 = arith.constant 1 : index
    %c1_30 = arith.constant 1 : index
    %c0_31 = arith.constant 0 : index
    %29 = vector.load %arg1[%c0_28, %c1_29, %c1_30, %c0_31] : memref<1x10x10x128xbf16, #tpu.memory_space<vmem>>, vector<1x8x8x128xbf16>
    %30 = vector.shape_cast %29 : vector<1x8x8x128xbf16> to vector<8x8x128xbf16>
    %31 = vector.shape_cast %30 : vector<8x8x128xbf16> to vector<64x128xbf16>
    %c4 = arith.constant 4 : index
    %c0_32 = arith.constant 0 : index
    %c0_33 = arith.constant 0 : index
    %32 = vector.load %arg2[%c4, %c0_32, %c0_33] : memref<9x128x128xbf16, #tpu.memory_space<vmem>>, vector<1x128x128xbf16>
    %33 = vector.shape_cast %32 : vector<1x128x128xbf16> to vector<128x128xbf16>
    %cst_34 = arith.constant dense<0.000000e+00> : vector<64x128xf32>
    %34 = tpu.matmul %31, %33, %cst_34 {dimension_numbers = #tpu.dot_dimension_numbers<[1], [0], [0], [1], [0, 0, 1, 1], [], []>} : vector<64x128xbf16>, vector<128x128xbf16>, vector<64x128xf32> -> vector<64x128xf32>
    %35 = arith.addf %28, %34 : vector<64x128xf32>
    %c0_35 = arith.constant 0 : index
    %c1_36 = arith.constant 1 : index
    %c2_37 = arith.constant 2 : index
    %c0_38 = arith.constant 0 : index
    %36 = vector.load %arg1[%c0_35, %c1_36, %c2_37, %c0_38] : memref<1x10x10x128xbf16, #tpu.memory_space<vmem>>, vector<1x8x8x128xbf16>
    %37 = vector.shape_cast %36 : vector<1x8x8x128xbf16> to vector<8x8x128xbf16>
    %38 = vector.shape_cast %37 : vector<8x8x128xbf16> to vector<64x128xbf16>
    %c5 = arith.constant 5 : index
    %c0_39 = arith.constant 0 : index
    %c0_40 = arith.constant 0 : index
    %39 = vector.load %arg2[%c5, %c0_39, %c0_40] : memref<9x128x128xbf16, #tpu.memory_space<vmem>>, vector<1x128x128xbf16>
    %40 = vector.shape_cast %39 : vector<1x128x128xbf16> to vector<128x128xbf16>
    %cst_41 = arith.constant dense<0.000000e+00> : vector<64x128xf32>
    %41 = tpu.matmul %38, %40, %cst_41 {dimension_numbers = #tpu.dot_dimension_numbers<[1], [0], [0], [1], [0, 0, 1, 1], [], []>} : vector<64x128xbf16>, vector<128x128xbf16>, vector<64x128xf32> -> vector<64x128xf32>
    %42 = arith.addf %35, %41 : vector<64x128xf32>
    %c0_42 = arith.constant 0 : index
    %c2_43 = arith.constant 2 : index
    %c0_44 = arith.constant 0 : index
    %c0_45 = arith.constant 0 : index
    %43 = vector.load %arg1[%c0_42, %c2_43, %c0_44, %c0_45] : memref<1x10x10x128xbf16, #tpu.memory_space<vmem>>, vector<1x8x8x128xbf16>
    %44 = vector.shape_cast %43 : vector<1x8x8x128xbf16> to vector<8x8x128xbf16>
    %45 = vector.shape_cast %44 : vector<8x8x128xbf16> to vector<64x128xbf16>
    %c6 = arith.constant 6 : index
    %c0_46 = arith.constant 0 : index
    %c0_47 = arith.constant 0 : index
    %46 = vector.load %arg2[%c6, %c0_46, %c0_47] : memref<9x128x128xbf16, #tpu.memory_space<vmem>>, vector<1x128x128xbf16>
    %47 = vector.shape_cast %46 : vector<1x128x128xbf16> to vector<128x128xbf16>
    %cst_48 = arith.constant dense<0.000000e+00> : vector<64x128xf32>
    %48 = tpu.matmul %45, %47, %cst_48 {dimension_numbers = #tpu.dot_dimension_numbers<[1], [0], [0], [1], [0, 0, 1, 1], [], []>} : vector<64x128xbf16>, vector<128x128xbf16>, vector<64x128xf32> -> vector<64x128xf32>
    %49 = arith.addf %42, %48 : vector<64x128xf32>
    %c0_49 = arith.constant 0 : index
    %c2_50 = arith.constant 2 : index
    %c1_51 = arith.constant 1 : index
    %c0_52 = arith.constant 0 : index
    %50 = vector.load %arg1[%c0_49, %c2_50, %c1_51, %c0_52] : memref<1x10x10x128xbf16, #tpu.memory_space<vmem>>, vector<1x8x8x128xbf16>
    %51 = vector.shape_cast %50 : vector<1x8x8x128xbf16> to vector<8x8x128xbf16>
    %52 = vector.shape_cast %51 : vector<8x8x128xbf16> to vector<64x128xbf16>
    %c7 = arith.constant 7 : index
    %c0_53 = arith.constant 0 : index
    %c0_54 = arith.constant 0 : index
    %53 = vector.load %arg2[%c7, %c0_53, %c0_54] : memref<9x128x128xbf16, #tpu.memory_space<vmem>>, vector<1x128x128xbf16>
    %54 = vector.shape_cast %53 : vector<1x128x128xbf16> to vector<128x128xbf16>
    %cst_55 = arith.constant dense<0.000000e+00> : vector<64x128xf32>
    %55 = tpu.matmul %52, %54, %cst_55 {dimension_numbers = #tpu.dot_dimension_numbers<[1], [0], [0], [1], [0, 0, 1, 1], [], []>} : vector<64x128xbf16>, vector<128x128xbf16>, vector<64x128xf32> -> vector<64x128xf32>
    %56 = arith.addf %49, %55 : vector<64x128xf32>
    %c0_56 = arith.constant 0 : index
    %c2_57 = arith.constant 2 : index
    %c2_58 = arith.constant 2 : index
    %c0_59 = arith.constant 0 : index
    %57 = vector.load %arg1[%c0_56, %c2_57, %c2_58, %c0_59] : memref<1x10x10x128xbf16, #tpu.memory_space<vmem>>, vector<1x8x8x128xbf16>
    %58 = vector.shape_cast %57 : vector<1x8x8x128xbf16> to vector<8x8x128xbf16>
    %59 = vector.shape_cast %58 : vector<8x8x128xbf16> to vector<64x128xbf16>
    %c8 = arith.constant 8 : index
    %c0_60 = arith.constant 0 : index
    %c0_61 = arith.constant 0 : index
    %60 = vector.load %arg2[%c8, %c0_60, %c0_61] : memref<9x128x128xbf16, #tpu.memory_space<vmem>>, vector<1x128x128xbf16>
    %61 = vector.shape_cast %60 : vector<1x128x128xbf16> to vector<128x128xbf16>
    %cst_62 = arith.constant dense<0.000000e+00> : vector<64x128xf32>
    %62 = tpu.matmul %59, %61, %cst_62 {dimension_numbers = #tpu.dot_dimension_numbers<[1], [0], [0], [1], [0, 0, 1, 1], [], []>} : vector<64x128xbf16>, vector<128x128xbf16>, vector<64x128xf32> -> vector<64x128xf32>
    %63 = arith.addf %56, %62 : vector<64x128xf32>
    %c0_63 = arith.constant 0 : index
    %c0_64 = arith.constant 0 : index
    %64 = vector.load %arg3[%c0_63, %c0_64] : memref<1x128xf32, #tpu.memory_space<vmem>>, vector<1x128xf32>
    %65 = vector.broadcast %64 : vector<1x128xf32> to vector<64x128xf32>
    %66 = arith.addf %63, %65 : vector<64x128xf32>
    %cst_65 = arith.constant 0.000000e+00 : f32
    %67 = vector.broadcast %cst_65 : f32 to vector<64x128xf32>
    %68 = arith.maximumf %66, %67 : vector<64x128xf32>
    %69 = arith.truncf %68 : vector<64x128xf32> to vector<64x128xbf16>
    %c0_66 = arith.constant 0 : index
    %c0_67 = arith.constant 0 : index
    %c0_68 = arith.constant 0 : index
    %70 = vector.load %arg4[%c0_66, %c0_67, %c0_68] : memref<1x64x128xbf16, #tpu.memory_space<vmem>>, vector<1x64x128xbf16>
    %71 = vector.shape_cast %70 : vector<1x64x128xbf16> to vector<64x128xbf16>
    %72 = vector.shape_cast %69 : vector<64x128xbf16> to vector<1x64x128xbf16>
    tpu.vector_store %arg4[%c0_66, %c0_67, %c0_68], %72 {strides = array<i32>} : memref<1x64x128xbf16, #tpu.memory_space<vmem>>, vector<1x64x128xbf16>,
    return
  }
  func.func @transform_0(%arg0: i32) -> (i32, i32, i32, i32) {
    %c0_i32 = arith.constant 0 : i32
    %c0_i32_0 = arith.constant 0 : i32
    %c0_i32_1 = arith.constant 0 : i32
    %c0_i32_2 = arith.constant 0 : i32
    return %arg0, %c0_i32, %c0_i32_0, %c0_i32_1 : i32, i32, i32, i32
  }
  func.func @transform_1(%arg0: i32) -> (i32, i32, i32) {
    %c0_i32 = arith.constant 0 : i32
    %c0_i32_0 = arith.constant 0 : i32
    %c0_i32_1 = arith.constant 0 : i32
    %c0_i32_2 = arith.constant 0 : i32
    return %c0_i32, %c0_i32_0, %c0_i32_1 : i32, i32, i32
  }
  func.func @transform_2(%arg0: i32) -> (i32, i32) {
    %c0_i32 = arith.constant 0 : i32
    %c0_i32_0 = arith.constant 0 : i32
    %c0_i32_1 = arith.constant 0 : i32
    return %c0_i32, %c0_i32_0 : i32, i32
  }
  func.func @transform_3(%arg0: i32) -> (i32, i32, i32) {
    %c0_i32 = arith.constant 0 : i32
    %c0_i32_0 = arith.constant 0 : i32
    %c0_i32_1 = arith.constant 0 : i32
    return %arg0, %c0_i32, %c0_i32_0 : i32, i32, i32
  }
}

module attributes {stable_mosaic.version = 11 : i64} {
  func.func @_mm_proj_res_kernel(%arg0: i32, %arg1: memref<128x128xbf16, #tpu.memory_space<vmem>>, %arg2: memref<128x128xbf16, #tpu.memory_space<vmem>>, %arg3: memref<1x128xf32, #tpu.memory_space<vmem>>, %arg4: memref<128x128xbf16, #tpu.memory_space<vmem>>, %arg5: memref<128x128xbf16, #tpu.memory_space<vmem>>, %arg6: memref<1x128xf32, #tpu.memory_space<vmem>>, %arg7: memref<128x128xbf16, #tpu.memory_space<vmem>>) attributes {dimension_semantics = [#tpu.dimension_semantics<parallel>], iteration_bounds = array<i64: 1>, scalar_prefetch = 0 : i64, scratch_operands = 0 : i64, tpu.core_type = #tpu.core_type<tc>, window_params = [{transform_indices = @transform_0, window_bounds = array<i64: 128, 128>}, {pipeline_mode = #tpu.pipeline_mode<synchronous>, transform_indices = @transform_1, window_bounds = array<i64: 128, 128>}, {pipeline_mode = #tpu.pipeline_mode<synchronous>, transform_indices = @transform_2, window_bounds = array<i64: 1, 128>}, {transform_indices = @transform_3, window_bounds = array<i64: 128, 128>}, {pipeline_mode = #tpu.pipeline_mode<synchronous>, transform_indices = @transform_4, window_bounds = array<i64: 128, 128>}, {pipeline_mode = #tpu.pipeline_mode<synchronous>, transform_indices = @transform_5, window_bounds = array<i64: 1, 128>}, {transform_indices = @transform_6, window_bounds = array<i64: 128, 128>}]} {
    %c0 = arith.constant 0 : index
    %c0_0 = arith.constant 0 : index
    %0 = vector.load %arg1[%c0, %c0_0] : memref<128x128xbf16, #tpu.memory_space<vmem>>, vector<128x128xbf16>
    %c0_1 = arith.constant 0 : index
    %c0_2 = arith.constant 0 : index
    %1 = vector.load %arg2[%c0_1, %c0_2] : memref<128x128xbf16, #tpu.memory_space<vmem>>, vector<128x128xbf16>
    %cst = arith.constant dense<0.000000e+00> : vector<128x128xf32>
    %2 = tpu.matmul %0, %1, %cst {dimension_numbers = #tpu.dot_dimension_numbers<[1], [0], [0], [1], [0, 0, 1, 1], [], []>} : vector<128x128xbf16>, vector<128x128xbf16>, vector<128x128xf32> -> vector<128x128xf32>
    %c0_3 = arith.constant 0 : index
    %c0_4 = arith.constant 0 : index
    %3 = vector.load %arg4[%c0_3, %c0_4] : memref<128x128xbf16, #tpu.memory_space<vmem>>, vector<128x128xbf16>
    %c0_5 = arith.constant 0 : index
    %c0_6 = arith.constant 0 : index
    %4 = vector.load %arg5[%c0_5, %c0_6] : memref<128x128xbf16, #tpu.memory_space<vmem>>, vector<128x128xbf16>
    %cst_7 = arith.constant dense<0.000000e+00> : vector<128x128xf32>
    %5 = tpu.matmul %3, %4, %cst_7 {dimension_numbers = #tpu.dot_dimension_numbers<[1], [0], [0], [1], [0, 0, 1, 1], [], []>} : vector<128x128xbf16>, vector<128x128xbf16>, vector<128x128xf32> -> vector<128x128xf32>
    %6 = arith.addf %2, %5 : vector<128x128xf32>
    %c0_8 = arith.constant 0 : index
    %c0_9 = arith.constant 0 : index
    %7 = vector.load %arg3[%c0_8, %c0_9] : memref<1x128xf32, #tpu.memory_space<vmem>>, vector<1x128xf32>
    %8 = vector.broadcast %7 : vector<1x128xf32> to vector<128x128xf32>
    %9 = arith.addf %6, %8 : vector<128x128xf32>
    %c0_10 = arith.constant 0 : index
    %c0_11 = arith.constant 0 : index
    %10 = vector.load %arg6[%c0_10, %c0_11] : memref<1x128xf32, #tpu.memory_space<vmem>>, vector<1x128xf32>
    %11 = vector.broadcast %10 : vector<1x128xf32> to vector<128x128xf32>
    %12 = arith.addf %9, %11 : vector<128x128xf32>
    %cst_12 = arith.constant 0.000000e+00 : f32
    %13 = vector.broadcast %cst_12 : f32 to vector<128x128xf32>
    %14 = arith.maximumf %12, %13 : vector<128x128xf32>
    %15 = arith.truncf %14 : vector<128x128xf32> to vector<128x128xbf16>
    %c0_13 = arith.constant 0 : index
    %c0_14 = arith.constant 0 : index
    %16 = vector.load %arg7[%c0_13, %c0_14] : memref<128x128xbf16, #tpu.memory_space<vmem>>, vector<128x128xbf16>
    tpu.vector_store %arg7[%c0_13, %c0_14], %15 {strides = array<i32>} : memref<128x128xbf16, #tpu.memory_space<vmem>>, vector<128x128xbf16>,
    return
  }
  func.func @transform_0(%arg0: i32) -> (i32, i32) {
    %c0_i32 = arith.constant 0 : i32
    %c0_i32_0 = arith.constant 0 : i32
    return %arg0, %c0_i32 : i32, i32
  }
  func.func @transform_1(%arg0: i32) -> (i32, i32) {
    %c0_i32 = arith.constant 0 : i32
    %c0_i32_0 = arith.constant 0 : i32
    %c0_i32_1 = arith.constant 0 : i32
    return %c0_i32, %c0_i32_0 : i32, i32
  }
  func.func @transform_2(%arg0: i32) -> (i32, i32) {
    %c0_i32 = arith.constant 0 : i32
    %c0_i32_0 = arith.constant 0 : i32
    %c0_i32_1 = arith.constant 0 : i32
    return %c0_i32, %c0_i32_0 : i32, i32
  }
  func.func @transform_3(%arg0: i32) -> (i32, i32) {
    %c0_i32 = arith.constant 0 : i32
    %c0_i32_0 = arith.constant 0 : i32
    return %arg0, %c0_i32 : i32, i32
  }
  func.func @transform_4(%arg0: i32) -> (i32, i32) {
    %c0_i32 = arith.constant 0 : i32
    %c0_i32_0 = arith.constant 0 : i32
    %c0_i32_1 = arith.constant 0 : i32
    return %c0_i32, %c0_i32_0 : i32, i32
  }
  func.func @transform_5(%arg0: i32) -> (i32, i32) {
    %c0_i32 = arith.constant 0 : i32
    %c0_i32_0 = arith.constant 0 : i32
    %c0_i32_1 = arith.constant 0 : i32
    return %c0_i32, %c0_i32_0 : i32, i32
  }
  func.func @transform_6(%arg0: i32) -> (i32, i32) {
    %c0_i32 = arith.constant 0 : i32
    %c0_i32_0 = arith.constant 0 : i32
    return %arg0, %c0_i32 : i32, i32
  }
}

module attributes {stable_mosaic.version = 11 : i64} {
  func.func @_conv_tap_kernel(%arg0: i32, %arg1: memref<1x20x9x128xbf16, #tpu.memory_space<vmem>>, %arg2: memref<9x128x128xbf16, #tpu.memory_space<vmem>>, %arg3: memref<1x128xf32, #tpu.memory_space<vmem>>, %arg4: memref<1x32x128xbf16, #tpu.memory_space<vmem>>) attributes {dimension_semantics = [#tpu.dimension_semantics<parallel>], iteration_bounds = array<i64: 2>, scalar_prefetch = 0 : i64, scratch_operands = 0 : i64, tpu.core_type = #tpu.core_type<tc>, window_params = [{transform_indices = @transform_0, window_bounds = array<i64: 1, 20, 9, 128>}, {pipeline_mode = #tpu.pipeline_mode<synchronous>, transform_indices = @transform_1, window_bounds = array<i64: 9, 128, 128>}, {pipeline_mode = #tpu.pipeline_mode<synchronous>, transform_indices = @transform_2, window_bounds = array<i64: 1, 128>}, {transform_indices = @transform_3, window_bounds = array<i64: 1, 32, 128>}]} {
    %cst = arith.constant 0.000000e+00 : f32
    %0 = vector.broadcast %cst : f32 to vector<32x128xf32>
    %c0 = arith.constant 0 : index
    %c0_0 = arith.constant 0 : index
    %c0_1 = arith.constant 0 : index
    %c0_2 = arith.constant 0 : index
    %1 = vector.load %arg1[%c0, %c0_0, %c0_1, %c0_2] : memref<1x20x9x128xbf16, #tpu.memory_space<vmem>>, vector<1x4x8x128xbf16>
    %2 = vector.shape_cast %1 : vector<1x4x8x128xbf16> to vector<4x8x128xbf16>
    %3 = vector.shape_cast %2 : vector<4x8x128xbf16> to vector<32x128xbf16>
    %c0_3 = arith.constant 0 : index
    %c0_4 = arith.constant 0 : index
    %c0_5 = arith.constant 0 : index
    %4 = vector.load %arg2[%c0_3, %c0_4, %c0_5] : memref<9x128x128xbf16, #tpu.memory_space<vmem>>, vector<1x128x128xbf16>
    %5 = vector.shape_cast %4 : vector<1x128x128xbf16> to vector<128x128xbf16>
    %cst_6 = arith.constant dense<0.000000e+00> : vector<32x128xf32>
    %6 = tpu.matmul %3, %5, %cst_6 {dimension_numbers = #tpu.dot_dimension_numbers<[1], [0], [0], [1], [0, 0, 1, 1], [], []>} : vector<32x128xbf16>, vector<128x128xbf16>, vector<32x128xf32> -> vector<32x128xf32>
    %7 = arith.addf %0, %6 : vector<32x128xf32>
    %c0_7 = arith.constant 0 : index
    %c5 = arith.constant 5 : index
    %c0_8 = arith.constant 0 : index
    %c0_9 = arith.constant 0 : index
    %8 = vector.load %arg1[%c0_7, %c5, %c0_8, %c0_9] : memref<1x20x9x128xbf16, #tpu.memory_space<vmem>>, vector<1x4x8x128xbf16>
    %9 = vector.shape_cast %8 : vector<1x4x8x128xbf16> to vector<4x8x128xbf16>
    %10 = vector.shape_cast %9 : vector<4x8x128xbf16> to vector<32x128xbf16>
    %c1 = arith.constant 1 : index
    %c0_10 = arith.constant 0 : index
    %c0_11 = arith.constant 0 : index
    %11 = vector.load %arg2[%c1, %c0_10, %c0_11] : memref<9x128x128xbf16, #tpu.memory_space<vmem>>, vector<1x128x128xbf16>
    %12 = vector.shape_cast %11 : vector<1x128x128xbf16> to vector<128x128xbf16>
    %cst_12 = arith.constant dense<0.000000e+00> : vector<32x128xf32>
    %13 = tpu.matmul %10, %12, %cst_12 {dimension_numbers = #tpu.dot_dimension_numbers<[1], [0], [0], [1], [0, 0, 1, 1], [], []>} : vector<32x128xbf16>, vector<128x128xbf16>, vector<32x128xf32> -> vector<32x128xf32>
    %14 = arith.addf %7, %13 : vector<32x128xf32>
    %c0_13 = arith.constant 0 : index
    %c0_14 = arith.constant 0 : index
    %c1_15 = arith.constant 1 : index
    %c0_16 = arith.constant 0 : index
    %15 = vector.load %arg1[%c0_13, %c0_14, %c1_15, %c0_16] : memref<1x20x9x128xbf16, #tpu.memory_space<vmem>>, vector<1x4x8x128xbf16>
    %16 = vector.shape_cast %15 : vector<1x4x8x128xbf16> to vector<4x8x128xbf16>
    %17 = vector.shape_cast %16 : vector<4x8x128xbf16> to vector<32x128xbf16>
    %c2 = arith.constant 2 : index
    %c0_17 = arith.constant 0 : index
    %c0_18 = arith.constant 0 : index
    %18 = vector.load %arg2[%c2, %c0_17, %c0_18] : memref<9x128x128xbf16, #tpu.memory_space<vmem>>, vector<1x128x128xbf16>
    %19 = vector.shape_cast %18 : vector<1x128x128xbf16> to vector<128x128xbf16>
    %cst_19 = arith.constant dense<0.000000e+00> : vector<32x128xf32>
    %20 = tpu.matmul %17, %19, %cst_19 {dimension_numbers = #tpu.dot_dimension_numbers<[1], [0], [0], [1], [0, 0, 1, 1], [], []>} : vector<32x128xbf16>, vector<128x128xbf16>, vector<32x128xf32> -> vector<32x128xf32>
    %21 = arith.addf %14, %20 : vector<32x128xf32>
    %c0_20 = arith.constant 0 : index
    %c10 = arith.constant 10 : index
    %c0_21 = arith.constant 0 : index
    %c0_22 = arith.constant 0 : index
    %22 = vector.load %arg1[%c0_20, %c10, %c0_21, %c0_22] : memref<1x20x9x128xbf16, #tpu.memory_space<vmem>>, vector<1x4x8x128xbf16>
    %23 = vector.shape_cast %22 : vector<1x4x8x128xbf16> to vector<4x8x128xbf16>
    %24 = vector.shape_cast %23 : vector<4x8x128xbf16> to vector<32x128xbf16>
    %c3 = arith.constant 3 : index
    %c0_23 = arith.constant 0 : index
    %c0_24 = arith.constant 0 : index
    %25 = vector.load %arg2[%c3, %c0_23, %c0_24] : memref<9x128x128xbf16, #tpu.memory_space<vmem>>, vector<1x128x128xbf16>
    %26 = vector.shape_cast %25 : vector<1x128x128xbf16> to vector<128x128xbf16>
    %cst_25 = arith.constant dense<0.000000e+00> : vector<32x128xf32>
    %27 = tpu.matmul %24, %26, %cst_25 {dimension_numbers = #tpu.dot_dimension_numbers<[1], [0], [0], [1], [0, 0, 1, 1], [], []>} : vector<32x128xbf16>, vector<128x128xbf16>, vector<32x128xf32> -> vector<32x128xf32>
    %28 = arith.addf %21, %27 : vector<32x128xf32>
    %c0_26 = arith.constant 0 : index
    %c15 = arith.constant 15 : index
    %c0_27 = arith.constant 0 : index
    %c0_28 = arith.constant 0 : index
    %29 = vector.load %arg1[%c0_26, %c15, %c0_27, %c0_28] : memref<1x20x9x128xbf16, #tpu.memory_space<vmem>>, vector<1x4x8x128xbf16>
    %30 = vector.shape_cast %29 : vector<1x4x8x128xbf16> to vector<4x8x128xbf16>
    %31 = vector.shape_cast %30 : vector<4x8x128xbf16> to vector<32x128xbf16>
    %c4 = arith.constant 4 : index
    %c0_29 = arith.constant 0 : index
    %c0_30 = arith.constant 0 : index
    %32 = vector.load %arg2[%c4, %c0_29, %c0_30] : memref<9x128x128xbf16, #tpu.memory_space<vmem>>, vector<1x128x128xbf16>
    %33 = vector.shape_cast %32 : vector<1x128x128xbf16> to vector<128x128xbf16>
    %cst_31 = arith.constant dense<0.000000e+00> : vector<32x128xf32>
    %34 = tpu.matmul %31, %33, %cst_31 {dimension_numbers = #tpu.dot_dimension_numbers<[1], [0], [0], [1], [0, 0, 1, 1], [], []>} : vector<32x128xbf16>, vector<128x128xbf16>, vector<32x128xf32> -> vector<32x128xf32>
    %35 = arith.addf %28, %34 : vector<32x128xf32>
    %c0_32 = arith.constant 0 : index
    %c10_33 = arith.constant 10 : index
    %c1_34 = arith.constant 1 : index
    %c0_35 = arith.constant 0 : index
    %36 = vector.load %arg1[%c0_32, %c10_33, %c1_34, %c0_35] : memref<1x20x9x128xbf16, #tpu.memory_space<vmem>>, vector<1x4x8x128xbf16>
    %37 = vector.shape_cast %36 : vector<1x4x8x128xbf16> to vector<4x8x128xbf16>
    %38 = vector.shape_cast %37 : vector<4x8x128xbf16> to vector<32x128xbf16>
    %c5_36 = arith.constant 5 : index
    %c0_37 = arith.constant 0 : index
    %c0_38 = arith.constant 0 : index
    %39 = vector.load %arg2[%c5_36, %c0_37, %c0_38] : memref<9x128x128xbf16, #tpu.memory_space<vmem>>, vector<1x128x128xbf16>
    %40 = vector.shape_cast %39 : vector<1x128x128xbf16> to vector<128x128xbf16>
    %cst_39 = arith.constant dense<0.000000e+00> : vector<32x128xf32>
    %41 = tpu.matmul %38, %40, %cst_39 {dimension_numbers = #tpu.dot_dimension_numbers<[1], [0], [0], [1], [0, 0, 1, 1], [], []>} : vector<32x128xbf16>, vector<128x128xbf16>, vector<32x128xf32> -> vector<32x128xf32>
    %42 = arith.addf %35, %41 : vector<32x128xf32>
    %c0_40 = arith.constant 0 : index
    %c1_41 = arith.constant 1 : index
    %c0_42 = arith.constant 0 : index
    %c0_43 = arith.constant 0 : index
    %43 = vector.load %arg1[%c0_40, %c1_41, %c0_42, %c0_43] : memref<1x20x9x128xbf16, #tpu.memory_space<vmem>>, vector<1x4x8x128xbf16>
    %44 = vector.shape_cast %43 : vector<1x4x8x128xbf16> to vector<4x8x128xbf16>
    %45 = vector.shape_cast %44 : vector<4x8x128xbf16> to vector<32x128xbf16>
    %c6 = arith.constant 6 : index
    %c0_44 = arith.constant 0 : index
    %c0_45 = arith.constant 0 : index
    %46 = vector.load %arg2[%c6, %c0_44, %c0_45] : memref<9x128x128xbf16, #tpu.memory_space<vmem>>, vector<1x128x128xbf16>
    %47 = vector.shape_cast %46 : vector<1x128x128xbf16> to vector<128x128xbf16>
    %cst_46 = arith.constant dense<0.000000e+00> : vector<32x128xf32>
    %48 = tpu.matmul %45, %47, %cst_46 {dimension_numbers = #tpu.dot_dimension_numbers<[1], [0], [0], [1], [0, 0, 1, 1], [], []>} : vector<32x128xbf16>, vector<128x128xbf16>, vector<32x128xf32> -> vector<32x128xf32>
    %49 = arith.addf %42, %48 : vector<32x128xf32>
    %c0_47 = arith.constant 0 : index
    %c6_48 = arith.constant 6 : index
    %c0_49 = arith.constant 0 : index
    %c0_50 = arith.constant 0 : index
    %50 = vector.load %arg1[%c0_47, %c6_48, %c0_49, %c0_50] : memref<1x20x9x128xbf16, #tpu.memory_space<vmem>>, vector<1x4x8x128xbf16>
    %51 = vector.shape_cast %50 : vector<1x4x8x128xbf16> to vector<4x8x128xbf16>
    %52 = vector.shape_cast %51 : vector<4x8x128xbf16> to vector<32x128xbf16>
    %c7 = arith.constant 7 : index
    %c0_51 = arith.constant 0 : index
    %c0_52 = arith.constant 0 : index
    %53 = vector.load %arg2[%c7, %c0_51, %c0_52] : memref<9x128x128xbf16, #tpu.memory_space<vmem>>, vector<1x128x128xbf16>
    %54 = vector.shape_cast %53 : vector<1x128x128xbf16> to vector<128x128xbf16>
    %cst_53 = arith.constant dense<0.000000e+00> : vector<32x128xf32>
    %55 = tpu.matmul %52, %54, %cst_53 {dimension_numbers = #tpu.dot_dimension_numbers<[1], [0], [0], [1], [0, 0, 1, 1], [], []>} : vector<32x128xbf16>, vector<128x128xbf16>, vector<32x128xf32> -> vector<32x128xf32>
    %56 = arith.addf %49, %55 : vector<32x128xf32>
    %c0_54 = arith.constant 0 : index
    %c1_55 = arith.constant 1 : index
    %c1_56 = arith.constant 1 : index
    %c0_57 = arith.constant 0 : index
    %57 = vector.load %arg1[%c0_54, %c1_55, %c1_56, %c0_57] : memref<1x20x9x128xbf16, #tpu.memory_space<vmem>>, vector<1x4x8x128xbf16>
    %58 = vector.shape_cast %57 : vector<1x4x8x128xbf16> to vector<4x8x128xbf16>
    %59 = vector.shape_cast %58 : vector<4x8x128xbf16> to vector<32x128xbf16>
    %c8 = arith.constant 8 : index
    %c0_58 = arith.constant 0 : index
    %c0_59 = arith.constant 0 : index
    %60 = vector.load %arg2[%c8, %c0_58, %c0_59] : memref<9x128x128xbf16, #tpu.memory_space<vmem>>, vector<1x128x128xbf16>
    %61 = vector.shape_cast %60 : vector<1x128x128xbf16> to vector<128x128xbf16>
    %cst_60 = arith.constant dense<0.000000e+00> : vector<32x128xf32>
    %62 = tpu.matmul %59, %61, %cst_60 {dimension_numbers = #tpu.dot_dimension_numbers<[1], [0], [0], [1], [0, 0, 1, 1], [], []>} : vector<32x128xbf16>, vector<128x128xbf16>, vector<32x128xf32> -> vector<32x128xf32>
    %63 = arith.addf %56, %62 : vector<32x128xf32>
    %c0_61 = arith.constant 0 : index
    %c0_62 = arith.constant 0 : index
    %64 = vector.load %arg3[%c0_61, %c0_62] : memref<1x128xf32, #tpu.memory_space<vmem>>, vector<1x128xf32>
    %65 = vector.broadcast %64 : vector<1x128xf32> to vector<32x128xf32>
    %66 = arith.addf %63, %65 : vector<32x128xf32>
    %cst_63 = arith.constant 0.000000e+00 : f32
    %67 = vector.broadcast %cst_63 : f32 to vector<32x128xf32>
    %68 = arith.maximumf %66, %67 : vector<32x128xf32>
    %69 = arith.truncf %68 : vector<32x128xf32> to vector<32x128xbf16>
    %c0_64 = arith.constant 0 : index
    %c0_65 = arith.constant 0 : index
    %c0_66 = arith.constant 0 : index
    %70 = vector.load %arg4[%c0_64, %c0_65, %c0_66] : memref<1x32x128xbf16, #tpu.memory_space<vmem>>, vector<1x32x128xbf16>
    %71 = vector.shape_cast %70 : vector<1x32x128xbf16> to vector<32x128xbf16>
    %72 = vector.shape_cast %69 : vector<32x128xbf16> to vector<1x32x128xbf16>
    tpu.vector_store %arg4[%c0_64, %c0_65, %c0_66], %72 {strides = array<i32>} : memref<1x32x128xbf16, #tpu.memory_space<vmem>>, vector<1x32x128xbf16>,
    return
  }
  func.func @transform_0(%arg0: i32) -> (i32, i32, i32, i32) {
    %c0_i32 = arith.constant 0 : i32
    %c0_i32_0 = arith.constant 0 : i32
    %c0_i32_1 = arith.constant 0 : i32
    %c0_i32_2 = arith.constant 0 : i32
    return %arg0, %c0_i32, %c0_i32_0, %c0_i32_1 : i32, i32, i32, i32
  }
  func.func @transform_1(%arg0: i32) -> (i32, i32, i32) {
    %c0_i32 = arith.constant 0 : i32
    %c0_i32_0 = arith.constant 0 : i32
    %c0_i32_1 = arith.constant 0 : i32
    %c0_i32_2 = arith.constant 0 : i32
    return %c0_i32, %c0_i32_0, %c0_i32_1 : i32, i32, i32
  }
  func.func @transform_2(%arg0: i32) -> (i32, i32) {
    %c0_i32 = arith.constant 0 : i32
    %c0_i32_0 = arith.constant 0 : i32
    %c0_i32_1 = arith.constant 0 : i32
    return %c0_i32, %c0_i32_0 : i32, i32
  }
  func.func @transform_3(%arg0: i32) -> (i32, i32, i32) {
    %c0_i32 = arith.constant 0 : i32
    %c0_i32_0 = arith.constant 0 : i32
    %c0_i32_1 = arith.constant 0 : i32
    return %arg0, %c0_i32, %c0_i32_0 : i32, i32, i32
  }
}

module attributes {stable_mosaic.version = 11 : i64} {
  func.func @_mm_proj_res_kernel(%arg0: i32, %arg1: memref<32x128xbf16, #tpu.memory_space<vmem>>, %arg2: memref<128x128xbf16, #tpu.memory_space<vmem>>, %arg3: memref<1x128xf32, #tpu.memory_space<vmem>>, %arg4: memref<32x128xbf16, #tpu.memory_space<vmem>>, %arg5: memref<128x128xbf16, #tpu.memory_space<vmem>>, %arg6: memref<1x128xf32, #tpu.memory_space<vmem>>, %arg7: memref<32x128xbf16, #tpu.memory_space<vmem>>) attributes {dimension_semantics = [#tpu.dimension_semantics<parallel>], iteration_bounds = array<i64: 1>, scalar_prefetch = 0 : i64, scratch_operands = 0 : i64, tpu.core_type = #tpu.core_type<tc>, window_params = [{transform_indices = @transform_0, window_bounds = array<i64: 32, 128>}, {pipeline_mode = #tpu.pipeline_mode<synchronous>, transform_indices = @transform_1, window_bounds = array<i64: 128, 128>}, {pipeline_mode = #tpu.pipeline_mode<synchronous>, transform_indices = @transform_2, window_bounds = array<i64: 1, 128>}, {transform_indices = @transform_3, window_bounds = array<i64: 32, 128>}, {pipeline_mode = #tpu.pipeline_mode<synchronous>, transform_indices = @transform_4, window_bounds = array<i64: 128, 128>}, {pipeline_mode = #tpu.pipeline_mode<synchronous>, transform_indices = @transform_5, window_bounds = array<i64: 1, 128>}, {transform_indices = @transform_6, window_bounds = array<i64: 32, 128>}]} {
    %c0 = arith.constant 0 : index
    %c0_0 = arith.constant 0 : index
    %0 = vector.load %arg1[%c0, %c0_0] : memref<32x128xbf16, #tpu.memory_space<vmem>>, vector<32x128xbf16>
    %c0_1 = arith.constant 0 : index
    %c0_2 = arith.constant 0 : index
    %1 = vector.load %arg2[%c0_1, %c0_2] : memref<128x128xbf16, #tpu.memory_space<vmem>>, vector<128x128xbf16>
    %cst = arith.constant dense<0.000000e+00> : vector<32x128xf32>
    %2 = tpu.matmul %0, %1, %cst {dimension_numbers = #tpu.dot_dimension_numbers<[1], [0], [0], [1], [0, 0, 1, 1], [], []>} : vector<32x128xbf16>, vector<128x128xbf16>, vector<32x128xf32> -> vector<32x128xf32>
    %c0_3 = arith.constant 0 : index
    %c0_4 = arith.constant 0 : index
    %3 = vector.load %arg4[%c0_3, %c0_4] : memref<32x128xbf16, #tpu.memory_space<vmem>>, vector<32x128xbf16>
    %c0_5 = arith.constant 0 : index
    %c0_6 = arith.constant 0 : index
    %4 = vector.load %arg5[%c0_5, %c0_6] : memref<128x128xbf16, #tpu.memory_space<vmem>>, vector<128x128xbf16>
    %cst_7 = arith.constant dense<0.000000e+00> : vector<32x128xf32>
    %5 = tpu.matmul %3, %4, %cst_7 {dimension_numbers = #tpu.dot_dimension_numbers<[1], [0], [0], [1], [0, 0, 1, 1], [], []>} : vector<32x128xbf16>, vector<128x128xbf16>, vector<32x128xf32> -> vector<32x128xf32>
    %6 = arith.addf %2, %5 : vector<32x128xf32>
    %c0_8 = arith.constant 0 : index
    %c0_9 = arith.constant 0 : index
    %7 = vector.load %arg3[%c0_8, %c0_9] : memref<1x128xf32, #tpu.memory_space<vmem>>, vector<1x128xf32>
    %8 = vector.broadcast %7 : vector<1x128xf32> to vector<32x128xf32>
    %9 = arith.addf %6, %8 : vector<32x128xf32>
    %c0_10 = arith.constant 0 : index
    %c0_11 = arith.constant 0 : index
    %10 = vector.load %arg6[%c0_10, %c0_11] : memref<1x128xf32, #tpu.memory_space<vmem>>, vector<1x128xf32>
    %11 = vector.broadcast %10 : vector<1x128xf32> to vector<32x128xf32>
    %12 = arith.addf %9, %11 : vector<32x128xf32>
    %cst_12 = arith.constant 0.000000e+00 : f32
    %13 = vector.broadcast %cst_12 : f32 to vector<32x128xf32>
    %14 = arith.maximumf %12, %13 : vector<32x128xf32>
    %15 = arith.truncf %14 : vector<32x128xf32> to vector<32x128xbf16>
    %c0_13 = arith.constant 0 : index
    %c0_14 = arith.constant 0 : index
    %16 = vector.load %arg7[%c0_13, %c0_14] : memref<32x128xbf16, #tpu.memory_space<vmem>>, vector<32x128xbf16>
    tpu.vector_store %arg7[%c0_13, %c0_14], %15 {strides = array<i32>} : memref<32x128xbf16, #tpu.memory_space<vmem>>, vector<32x128xbf16>,
    return
  }
  func.func @transform_0(%arg0: i32) -> (i32, i32) {
    %c0_i32 = arith.constant 0 : i32
    %c0_i32_0 = arith.constant 0 : i32
    return %arg0, %c0_i32 : i32, i32
  }
  func.func @transform_1(%arg0: i32) -> (i32, i32) {
    %c0_i32 = arith.constant 0 : i32
    %c0_i32_0 = arith.constant 0 : i32
    %c0_i32_1 = arith.constant 0 : i32
    return %c0_i32, %c0_i32_0 : i32, i32
  }
  func.func @transform_2(%arg0: i32) -> (i32, i32) {
    %c0_i32 = arith.constant 0 : i32
    %c0_i32_0 = arith.constant 0 : i32
    %c0_i32_1 = arith.constant 0 : i32
    return %c0_i32, %c0_i32_0 : i32, i32
  }
  func.func @transform_3(%arg0: i32) -> (i32, i32) {
    %c0_i32 = arith.constant 0 : i32
    %c0_i32_0 = arith.constant 0 : i32
    return %arg0, %c0_i32 : i32, i32
  }
  func.func @transform_4(%arg0: i32) -> (i32, i32) {
    %c0_i32 = arith.constant 0 : i32
    %c0_i32_0 = arith.constant 0 : i32
    %c0_i32_1 = arith.constant 0 : i32
    return %c0_i32, %c0_i32_0 : i32, i32
  }
  func.func @transform_5(%arg0: i32) -> (i32, i32) {
    %c0_i32 = arith.constant 0 : i32
    %c0_i32_0 = arith.constant 0 : i32
    %c0_i32_1 = arith.constant 0 : i32
    return %c0_i32, %c0_i32_0 : i32, i32
  }
  func.func @transform_6(%arg0: i32) -> (i32, i32) {
    %c0_i32 = arith.constant 0 : i32
    %c0_i32_0 = arith.constant 0 : i32
    return %arg0, %c0_i32 : i32, i32
  }
}

module attributes {stable_mosaic.version = 11 : i64} {
  func.func @_pool_fc_kernel(%arg0: i32, %arg1: memref<2x16x128xbf16, #tpu.memory_space<vmem>>, %arg2: memref<128x128xbf16, #tpu.memory_space<vmem>>, %arg3: memref<1x128xf32, #tpu.memory_space<vmem>>, %arg4: memref<2x128xf32, #tpu.memory_space<vmem>>) attributes {dimension_semantics = [#tpu.dimension_semantics<arbitrary>], iteration_bounds = array<i64: 1>, scalar_prefetch = 0 : i64, scratch_operands = 0 : i64, tpu.core_type = #tpu.core_type<tc>, window_params = [{pipeline_mode = #tpu.pipeline_mode<synchronous>, transform_indices = @transform_0, window_bounds = array<i64: 2, 16, 128>}, {pipeline_mode = #tpu.pipeline_mode<synchronous>, transform_indices = @transform_1, window_bounds = array<i64: 128, 128>}, {pipeline_mode = #tpu.pipeline_mode<synchronous>, transform_indices = @transform_2, window_bounds = array<i64: 1, 128>}, {pipeline_mode = #tpu.pipeline_mode<synchronous>, transform_indices = @transform_3, window_bounds = array<i64: 2, 128>}]} {
    %c0 = arith.constant 0 : index
    %c0_0 = arith.constant 0 : index
    %c0_1 = arith.constant 0 : index
    %0 = vector.load %arg1[%c0, %c0_0, %c0_1] : memref<2x16x128xbf16, #tpu.memory_space<vmem>>, vector<2x16x128xbf16>
    %1 = arith.extf %0 : vector<2x16x128xbf16> to vector<2x16x128xf32>
    %cst = arith.constant dense<0.000000e+00> : vector<2x128xf32>
    %2 = vector.multi_reduction <add>, %1, %cst [1] : vector<2x16x128xf32> to vector<2x128xf32>
    %cst_2 = arith.constant 1.600000e+01 : f32
    %3 = vector.broadcast %cst_2 : f32 to vector<2x128xf32>
    %4 = arith.divf %2, %3 : vector<2x128xf32>
    %5 = arith.truncf %4 : vector<2x128xf32> to vector<2x128xbf16>
    %c0_3 = arith.constant 0 : index
    %c0_4 = arith.constant 0 : index
    %6 = vector.load %arg2[%c0_3, %c0_4] : memref<128x128xbf16, #tpu.memory_space<vmem>>, vector<128x128xbf16>
    %cst_5 = arith.constant dense<0.000000e+00> : vector<2x128xf32>
    %7 = tpu.matmul %5, %6, %cst_5 {dimension_numbers = #tpu.dot_dimension_numbers<[1], [0], [0], [1], [0, 0, 1, 1], [], []>} : vector<2x128xbf16>, vector<128x128xbf16>, vector<2x128xf32> -> vector<2x128xf32>
    %c0_6 = arith.constant 0 : index
    %c0_7 = arith.constant 0 : index
    %8 = vector.load %arg3[%c0_6, %c0_7] : memref<1x128xf32, #tpu.memory_space<vmem>>, vector<1x128xf32>
    %9 = vector.broadcast %8 : vector<1x128xf32> to vector<2x128xf32>
    %10 = arith.addf %7, %9 : vector<2x128xf32>
    %c0_8 = arith.constant 0 : index
    %c0_9 = arith.constant 0 : index
    %11 = vector.load %arg4[%c0_8, %c0_9] : memref<2x128xf32, #tpu.memory_space<vmem>>, vector<2x128xf32>
    tpu.vector_store %arg4[%c0_8, %c0_9], %10 {strides = array<i32>} : memref<2x128xf32, #tpu.memory_space<vmem>>, vector<2x128xf32>,
    return
  }
  func.func @transform_0(%arg0: i32) -> (i32, i32, i32) {
    %c0_i32 = arith.constant 0 : i32
    %c0_i32_0 = arith.constant 0 : i32
    %c0_i32_1 = arith.constant 0 : i32
    %c0_i32_2 = arith.constant 0 : i32
    return %c0_i32, %c0_i32_0, %c0_i32_1 : i32, i32, i32
  }
  func.func @transform_1(%arg0: i32) -> (i32, i32) {
    %c0_i32 = arith.constant 0 : i32
    %c0_i32_0 = arith.constant 0 : i32
    %c0_i32_1 = arith.constant 0 : i32
    return %c0_i32, %c0_i32_0 : i32, i32
  }
  func.func @transform_2(%arg0: i32) -> (i32, i32) {
    %c0_i32 = arith.constant 0 : i32
    %c0_i32_0 = arith.constant 0 : i32
    %c0_i32_1 = arith.constant 0 : i32
    return %c0_i32, %c0_i32_0 : i32, i32
  }
  func.func @transform_3(%arg0: i32) -> (i32, i32) {
    %c0_i32 = arith.constant 0 : i32
    %c0_i32_0 = arith.constant 0 : i32
    %c0_i32_1 = arith.constant 0 : i32
    return %c0_i32, %c0_i32_0 : i32, i32
  }
}

</mosaic_0001>

<llo_original>
// kernel: resnext_forward.11
$region0: #{resnext_forward.11}
  #allocation0 [shape = 'u32[]', space=smem, size = 0x4, offset = 0x4, fixed_abs, tag = 'smem constant byte address 0x4 - core index']
  #allocation1 [shape = 'u32[72,128]{1,0:T(1,128)}', space=vmem, size = 0x9000, scoped, tag = 'internal scratch']
  %s0 = inlined_call_operand.vmem [shape: bf16[128,128], index: 0, kind: input, shape index: {}]
  %s1 = inlined_call_operand.vmem [shape: bf16[128,128], index: 1, kind: input, shape index: {}]
  %s2 = inlined_call_operand.vmem [shape: f32[1,128], index: 2, kind: input, shape index: {}]
  %s3 = inlined_call_operand.vmem [shape: bf16[128,128], index: 3, kind: output, shape index: {}]
  %s4 = sld [smem:[#allocation0]]
  $region22: #{resnext_forward.11} parent=0
    _
  %s6 = ssub.s32 1, %s4
  %s7 = scalar_select 0, %s6, %s4
  // Predicated region
  $region2: #{resnext_forward.11} parent=0 // pred_check
    _
  $region3: #{resnext_forward.11} parent=0 // pred_check_branch
    %9 = sbr.rel (0) target = $region5
  $region4: #{resnext_forward.11} parent=0 // pred_region
    _
  $region5: #{resnext_forward.11} parent=0 // pred_fallthru
    _
  // Predicated region
  $region6: #{resnext_forward.11} parent=0 // pred_check
    _
  $region7: #{resnext_forward.11} parent=0 // pred_check_branch
    %11 = sbr.rel (0) target = $region9
  $region8: #{resnext_forward.11} parent=0 // pred_region
    _
  $region9: #{resnext_forward.11} parent=0 // pred_fallthru
    _
  // Predicated region
  $region10: #{resnext_forward.11} parent=0 // pred_check
    _
  $region11: #{resnext_forward.11} parent=0 // pred_check_branch
    %13 = sbr.rel (0) target = $region13
  $region12: #{resnext_forward.11} parent=0 // pred_region
    _
  $region13: #{resnext_forward.11} parent=0 // pred_fallthru
    _
  %v14 = vld [vmem:[%s0] sm:$0xf]
  %v15 = vld [vmem:[%s0 + $0x4] sm:$0xf]
  %v16 = vld [vmem:[%s0 + $0x8] sm:$0xf]
  %v17 = vld [vmem:[%s0 + $0xc] sm:$0xf]
  %v18 = vld [vmem:[%s0 + $0x10] sm:$0xf]
  %v19 = vld [vmem:[%s0 + $0x14] sm:$0xf]
  %v20 = vld [vmem:[%s0 + $0x18] sm:$0xf]
  %v21 = vld [vmem:[%s0 + $0x1c] sm:$0xf]
  %v22 = vld [vmem:[%s0 + $0x20] sm:$0xf]
  %v23 = vld [vmem:[%s0 + $0x24] sm:$0xf]
  %v24 = vld [vmem:[%s0 + $0x28] sm:$0xf]
  %v25 = vld [vmem:[%s0 + $0x2c] sm:$0xf]
  %v26 = vld [vmem:[%s0 + $0x30] sm:$0xf]
  %v27 = vld [vmem:[%s0 + $0x34] sm:$0xf]
  %v28 = vld [vmem:[%s0 + $0x38] sm:$0xf]
  %v29 = vld [vmem:[%s0 + $0x3c] sm:$0xf]
  %v30 = vld [vmem:[%s1] sm:$0xf]
  %v31 = vld [vmem:[%s1 + $0x4] sm:$0xf]
  %v32 = vld [vmem:[%s1 + $0x8] sm:$0xf]
  %v33 = vld [vmem:[%s1 + $0xc] sm:$0xf]
  %v34 = vld [vmem:[%s1 + $0x10] sm:$0xf]
  %v35 = vld [vmem:[%s1 + $0x14] sm:$0xf]
  %v36 = vld [vmem:[%s1 + $0x18] sm:$0xf]
  %v37 = vld [vmem:[%s1 + $0x1c] sm:$0xf]
  %v38 = vld [vmem:[%s1 + $0x20] sm:$0xf]
  %v39 = vld [vmem:[%s1 + $0x24] sm:$0xf]
  %v40 = vld [vmem:[%s1 + $0x28] sm:$0xf]
  %v41 = vld [vmem:[%s1 + $0x2c] sm:$0xf]
  %v42 = vld [vmem:[%s1 + $0x30] sm:$0xf]
  %v43 = vld [vmem:[%s1 + $0x34] sm:$0xf]
  %v44 = vld [vmem:[%s1 + $0x38] sm:$0xf]
  %v45 = vld [vmem:[%s1 + $0x3c] sm:$0xf]
  %v46 = vld [vmem:[%s2] sm:$0x1]
  %v48 = vperm.slane %v46, 0
  %v66 = vunpack.c.l.b16 %v14
  %v67 = vunpack.c.l.b16 %v15
  %v68 = vunpack.c.l.b16 %v16
  %v69 = vunpack.c.l.b16 %v17
  %v70 = vunpack.c.l.b16 %v18
  %v71 = vunpack.c.l.b16 %v19
  %v72 = vunpack.c.l.b16 %v20
  %v73 = vunpack.c.l.b16 %v21
  %v74 = vunpack.c.l.b16 %v22
  %v75 = vunpack.c.l.b16 %v23
  %v76 = vunpack.c.l.b16 %v24
  %v77 = vunpack.c.l.b16 %v25
  %v78 = vunpack.c.l.b16 %v26
  %v79 = vunpack.c.l.b16 %v27
  %v80 = vunpack.c.l.b16 %v28
  %v81 = vunpack.c.l.b16 %v29
  %v82 = vpack.c.b16 %v67, %v66
  %v83 = vpack.c.b16 %v69, %v68
  %v84 = vpack.c.b16 %v71, %v70
  %v85 = vpack.c.b16 %v73, %v72
  %v86 = vpack.c.b16 %v75, %v74
  %v87 = vpack.c.b16 %v77, %v76
  %v88 = vpack.c.b16 %v79, %v78
  %v89 = vpack.c.b16 %v81, %v80
  %v114 = vunpack.c.l.b16 %v30
  %v115 = vunpack.c.l.b16 %v31
  %v116 = vunpack.c.l.b16 %v32
  %v117 = vunpack.c.l.b16 %v33
  %v118 = vunpack.c.l.b16 %v34
  %v119 = vunpack.c.l.b16 %v35
  %v120 = vunpack.c.l.b16 %v36
  %v121 = vunpack.c.l.b16 %v37
  %v122 = vunpack.c.l.b16 %v38
  %v123 = vunpack.c.l.b16 %v39
  %v124 = vunpack.c.l.b16 %v40
  %v125 = vunpack.c.l.b16 %v41
  %v126 = vunpack.c.l.b16 %v42
  %v127 = vunpack.c.l.b16 %v43
  %v128 = vunpack.c.l.b16 %v44
  %v129 = vunpack.c.l.b16 %v45
  %v130 = vpack.c.b16 %v115, %v114
  %v131 = vpack.c.b16 %v117, %v116
  %v132 = vpack.c.b16 %v119, %v118
  %v133 = vpack.c.b16 %v121, %v120
  %v134 = vpack.c.b16 %v123, %v122
  %v135 = vpack.c.b16 %v125, %v124
  %v136 = vpack.c.b16 %v127, %v126
  %v137 = vpack.c.b16 %v129, %v128
  %146 = vmatpush.bf16.msra.mxu0 %v137
  %147 = vmatpush.bf16.msra.mxu0 %v136
  %148 = vmatpush.bf16.msra.mxu0 %v135
  %149 = vmatpush.bf16.msra.mxu0 %v134
  %150 = vmatpush.bf16.msra.mxu0 %v133
  %151 = vmatpush.bf16.msra.mxu0 %v132
  %152 = vmatpush.bf16.msra.mxu0 %v131
  %153 = vmatpush.bf16.msra.mxu0 %v130
  %154 = vmatmul.bf16.gmra.mxu0 %v82
  %v155 = vpop.f32.mrf.mxu0
  %v156 = vadd.f32 %v48, %v155
  %v157 = vpop.f32.mrf.mxu0
  %v158 = vadd.f32 %v48, %v157
  %159 = vmatmul.bf16.gmra.mxu0 %v83
  %v160 = vpop.f32.mrf.mxu0
  %v161 = vadd.f32 %v48, %v160
  %v162 = vpop.f32.mrf.mxu0
  %v163 = vadd.f32 %v48, %v162
  %164 = vmatmul.bf16.gmra.mxu0 %v84
  %v165 = vpop.f32.mrf.mxu0
  %v166 = vadd.f32 %v48, %v165
  %v167 = vpop.f32.mrf.mxu0
  %v168 = vadd.f32 %v48, %v167
  %169 = vmatmul.bf16.gmra.mxu0 %v85
  %v170 = vpop.f32.mrf.mxu0
  %v171 = vadd.f32 %v48, %v170
  %v172 = vpop.f32.mrf.mxu0
  %v173 = vadd.f32 %v48, %v172
  %174 = vmatmul.bf16.gmra.mxu0 %v86
  %v175 = vpop.f32.mrf.mxu0
  %v176 = vadd.f32 %v48, %v175
  %v177 = vpop.f32.mrf.mxu0
  %v178 = vadd.f32 %v48, %v177
  %179 = vmatmul.bf16.gmra.mxu0 %v87
  %v180 = vpop.f32.mrf.mxu0
  %v181 = vadd.f32 %v48, %v180
  %v182 = vpop.f32.mrf.mxu0
  %v183 = vadd.f32 %v48, %v182
  %184 = vmatmul.bf16.gmra.mxu0 %v88
  %v185 = vpop.f32.mrf.mxu0
  %v186 = vadd.f32 %v48, %v185
  %v187 = vpop.f32.mrf.mxu0
  %v188 = vadd.f32 %v48, %v187
  %189 = vmatmul.bf16.gmra.mxu0 %v89
  %v190 = vpop.f32.mrf.mxu0
  %v191 = vadd.f32 %v48, %v190
  %v192 = vpop.f32.mrf.mxu0
  %v193 = vadd.f32 %v48, %v192
  %194 = vdwg.mxu0
  %v195 = vmax.f32 %v156, 0.0
  %v196 = vmax.f32 %v158, 0.0
  %v197 = vmax.f32 %v161, 0.0
  %v198 = vmax.f32 %v163, 0.0
  %v199 = vmax.f32 %v166, 0.0
  %v200 = vmax.f32 %v168, 0.0
  %v201 = vmax.f32 %v171, 0.0
  %v202 = vmax.f32 %v173, 0.0
  %v203 = vmax.f32 %v176, 0.0
  %v204 = vmax.f32 %v178, 0.0
  %v205 = vmax.f32 %v181, 0.0
  %v206 = vmax.f32 %v183, 0.0
  %v207 = vmax.f32 %v186, 0.0
  %v208 = vmax.f32 %v188, 0.0
  %v209 = vmax.f32 %v191, 0.0
  %v210 = vmax.f32 %v193, 0.0
  %v211 = vpack.c.bf16 %v195, %v195
  %v212 = vpack.c.bf16 %v196, %v196
  %v213 = vpack.c.bf16 %v197, %v197
  %v214 = vpack.c.bf16 %v198, %v198
  %v215 = vpack.c.bf16 %v199, %v199
  %v216 = vpack.c.bf16 %v200, %v200
  %v217 = vpack.c.bf16 %v201, %v201
  %v218 = vpack.c.bf16 %v202, %v202
  %v219 = vpack.c.bf16 %v203, %v203
  %v220 = vpack.c.bf16 %v204, %v204
  %v221 = vpack.c.bf16 %v205, %v205
  %v222 = vpack.c.bf16 %v206, %v206
  %v223 = vpack.c.bf16 %v207, %v207
  %v224 = vpack.c.bf16 %v208, %v208
  %v225 = vpack.c.bf16 %v209, %v209
  %v226 = vpack.c.bf16 %v210, %v210
  %227 = vst [vmem:[%s3] sm:$0xf] %v211
  %228 = vst [vmem:[%s3 + $0x4] sm:$0xf] %v212
  %229 = vst [vmem:[%s3 + $0x8] sm:$0xf] %v213
  %230 = vst [vmem:[%s3 + $0xc] sm:$0xf] %v214
  %231 = vst [vmem:[%s3 + $0x10] sm:$0xf] %v215
  %232 = vst [vmem:[%s3 + $0x14] sm:$0xf] %v216
  %233 = vst [vmem:[%s3 + $0x18] sm:$0xf] %v217
  %234 = vst [vmem:[%s3 + $0x1c] sm:$0xf] %v218
  %235 = vst [vmem:[%s3 + $0x20] sm:$0xf] %v219
  %236 = vst [vmem:[%s3 + $0x24] sm:$0xf] %v220
  %237 = vst [vmem:[%s3 + $0x28] sm:$0xf] %v221
  %238 = vst [vmem:[%s3 + $0x2c] sm:$0xf] %v222
  %239 = vst [vmem:[%s3 + $0x30] sm:$0xf] %v223
  %240 = vst [vmem:[%s3 + $0x34] sm:$0xf] %v224
  %241 = vst [vmem:[%s3 + $0x38] sm:$0xf] %v225
  %242 = vst [vmem:[%s3 + $0x3c] sm:$0xf] %v226
  // Predicated region
  $region14: #{resnext_forward.11} parent=0 // pred_check
    _
  $region15: #{resnext_forward.11} parent=0 // pred_check_branch
    %244 = sbr.rel (0) target = $region17
  $region16: #{resnext_forward.11} parent=0 // pred_region
    _
  $region17: #{resnext_forward.11} parent=0 // pred_fallthru
    _
  // Predicated region
  $region18: #{resnext_forward.11} parent=0 // pred_check
    _
  $region19: #{resnext_forward.11} parent=0 // pred_check_branch
    %246 = sbr.rel (0) target = $region21
  $region20: #{resnext_forward.11} parent=0 // pred_region
    _
  $region21: #{resnext_forward.11} parent=0 // pred_fallthru
    _

// kernel: resnext_forward.10
$region0: #{resnext_forward.10}
  #allocation0 [shape = 'u32[]', space=smem, size = 0x4, offset = 0x4, fixed_abs, tag = 'smem constant byte address 0x4 - core index']
  #allocation1 [shape = 'u32[72,128]{1,0:T(1,128)}', space=vmem, size = 0x9000, scoped, tag = 'internal scratch']
  %s0 = inlined_call_operand.vmem [shape: bf16[2,36,9,128], index: 0, kind: input, shape index: {}]
  %s1 = inlined_call_operand.vmem [shape: bf16[2,8,8,128], index: 1, kind: output, shape index: {}]
  %s2 = sld [smem:[#allocation0]]
  $region37: #{resnext_forward.10} parent=0
    _
  %s4 = ssub.s32 1, %s2
  %s5 = scalar_select 0, %s4, %s2
  loop: start=0, step=1, limit=4
  $region2: #{resnext_forward.10} parent=0 // loop_pre_header
    _
  $region3: #{resnext_forward.10} parent=0 // loop_header
    %s7 = sphi 0, %s11
    %p8 = scmp.ge.s32.totalorder %s7, 4
    %s17 = sphi 0, %s19
    %s20 = sphi 0, %s17
    %s21 = sphi 0, %s20
    %s37 = sphi 0, %s21
    %s43 = sphi 0, %s45
    %s46 = sphi 0, %s43
    %s47 = sphi 0, %s46
    %s63 = sphi 0, %s47
  $region4: #{resnext_forward.10} parent=0 // loop_header_branch
    %10 = sbr.rel (%p8) target = $region8
  $region5: #{resnext_forward.10} parent=0 // loop_body
    %s12 = ssub.s32 %s7, 1
    %s13 = ssub.s32 %s7, 2
    %s14 = sadd.s32 %s7, 1
    %s15 = ssub.s32 %s7, %s14
    %p16 = scmp.eq.s32.totalorder %s15, 0
    %s18 = sadd.s32 %s17, 1
    %s19 = scalar_select %p16, %s17, %s18
    %p22 = pneg %p16
    %p23 = scmp.eq.s32.totalorder %s7, 1
    %p24 = por %p22, %p23
    %p25 = scmp.ne.s32.totalorder %s17, %s20
    %p26 = scmp.eq.s32.totalorder %s7, 0
    %p27 = por %p25, %p26
    %p28 = scmp.ne.s32.totalorder %s17, %s20
    %p29 = scmp.eq.s32.totalorder %s12, 1
    %p30 = por %p28, %p29
    %p31 = scmp.ne.s32.totalorder %s20, %s21
    %p32 = scmp.eq.s32.totalorder %s12, 0
    %p33 = por %p31, %p32
    %p34 = scmp.ne.s32.totalorder %s20, %s21
    %p35 = scmp.eq.s32.totalorder %s13, 1
    %p36 = por %p34, %p35
    %p38 = scmp.ne.s32.totalorder %s21, %s37
    %p39 = scmp.eq.s32.totalorder %s13, 0
    %p40 = por %p38, %p39
    %s41 = ssub.s32 %s7, %s14
    %p42 = scmp.eq.s32.totalorder %s41, 0
    %s44 = sadd.s32 %s43, 1
    %s45 = scalar_select %p42, %s43, %s44
    %p48 = pneg %p42
    %p49 = scmp.eq.s32.totalorder %s7, 1
    %p50 = por %p48, %p49
    %p51 = scmp.ne.s32.totalorder %s43, %s46
    %p52 = scmp.eq.s32.totalorder %s7, 0
    %p53 = por %p51, %p52
    %p54 = scmp.ne.s32.totalorder %s43, %s46
    %p55 = scmp.eq.s32.totalorder %s12, 1
    %p56 = por %p54, %p55
    %p57 = scmp.ne.s32.totalorder %s46, %s47
    %p58 = scmp.eq.s32.totalorder %s12, 0
    %p59 = por %p57, %p58
    %p60 = scmp.ne.s32.totalorder %s46, %s47
    %p61 = scmp.eq.s32.totalorder %s13, 1
    %p62 = por %p60, %p61
    %p64 = scmp.ne.s32.totalorder %s47, %s63
    %p65 = scmp.eq.s32.totalorder %s13, 0
    %p66 = por %p64, %p65
    %p67 = scmp.le.s32.totalorder 1, %s7
    %p68 = scmp.lt.s32.totalorder %s7, 3
    %p69 = pnand %p67, %p68
    %p70 = pneg %p69
    // Predicated region
    $region9: #{resnext_forward.10} parent=5 // pred_check
      _
    $region10: #{resnext_forward.10} parent=5 // pred_check_branch
      %72 = sbr.rel (%p69) target = $region12
    $region11: #{resnext_forward.10} parent=5 // pred_region
      %s73 = ssub.s32 %s7, 1
    $region12: #{resnext_forward.10} parent=5 // pred_fallthru
      _
    %p74 = scmp.lt.s32.totalorder %s7, 2
    // Predicated region
    $region13: #{resnext_forward.10} parent=5 // pred_check
      %p75 = pneg %p74
    $region14: #{resnext_forward.10} parent=5 // pred_check_branch
      %77 = sbr.rel (%p75) target = $region16
    $region15: #{resnext_forward.10} parent=5 // pred_region
      // Predicated region
      $region17: #{resnext_forward.10} parent=15 // pred_check
        %p78 = pneg %p27
      $region18: #{resnext_forward.10} parent=15 // pred_check_branch
        %80 = sbr.rel (%p78) target = $region20
      $region19: #{resnext_forward.10} parent=15 // pred_region
        %p81 = scmp.lt.s32.totalorder %s7, 1
        %s82 = scalar_select %p81, %s7, 1
        %s83 = smul.addr %s82, 72
        %s84 = smul.addr %s83, 4
        %s85 = scalar_lea.vmem %s0, %s84
      $region20: #{resnext_forward.10} parent=15 // pred_fallthru
        _
    $region16: #{resnext_forward.10} parent=5 // pred_fallthru
      _
    %p86 = scmp.le.s32.totalorder 1, %s7
    %p87 = scmp.lt.s32.totalorder %s7, 3
    %p88 = pnand %p86, %p87
    %p89 = pneg %p88
    // Predicated region
    $region21: #{resnext_forward.10} parent=5 // pred_check
      _
    $region22: #{resnext_forward.10} parent=5 // pred_check_branch
      %91 = sbr.rel (%p88) target = $region24
    $region23: #{resnext_forward.10} parent=5 // pred_region
      %s92 = ssub.s32 %s7, 1
      %p93 = scmp.lt.s32.totalorder %s12, 1
      %s94 = scalar_select %p93, %s12, 1
      %s95 = smul.addr %s94, 72
      %s96 = smul.addr %s95, 4
      %s97 = scalar_lea.vmem %s0, %s96
      %p98 = pneg %p33
      %p99 = pneg %p30
      %p100 = pneg %p59
      %p101 = pneg %p56
      %p102 = scmp.lt.s32.totalorder %s12, 1
      %s103 = scalar_select %p102, %s12, 1
      %s104 = smul.addr %s103, 8
      %s105 = smul.addr %s104, 4
      %s106 = scalar_lea.vmem %s1, %s105
      %p107 = scmp.lt.s32.totalorder %s12, 1
      %s108 = scalar_select %p107, %s12, 1
      %s109 = smul.addr %s108, 72
      %s110 = smul.addr %s109, 4
      %s111 = scalar_lea.vmem %s0, %s110
      %p112 = scmp.lt.s32.totalorder %s12, 1
      %s113 = scalar_select %p112, %s12, 1
      %s114 = smul.addr %s113, 8
      %s115 = smul.addr %s114, 4
      %s116 = scalar_lea.vmem %s1, %s115
      %v117 = vld [vmem:[%s111] sm:$0xf]
      %v118 = vld [vmem:[%s111 + $0x8] sm:$0xf]
      %v119 = vld [vmem:[%s111 + $0x10] sm:$0xf]
      %v120 = vld [vmem:[%s111 + $0x18] sm:$0xf]
      %v121 = vld [vmem:[%s111 + $0x20] sm:$0xf]
      %v122 = vld [vmem:[%s111 + $0x28] sm:$0xf]
      %v123 = vld [vmem:[%s111 + $0x30] sm:$0xf]
      %v124 = vld [vmem:[%s111 + $0x38] sm:$0xf]
      %v125 = vunpack.c.l.bf16 %v117
      %v126 = vunpack.c.l.bf16 %v118
      %v127 = vunpack.c.l.bf16 %v119
      %v128 = vunpack.c.l.bf16 %v120
      %v129 = vunpack.c.l.bf16 %v121
      %v130 = vunpack.c.l.bf16 %v122
      %v131 = vunpack.c.l.bf16 %v123
      %v132 = vunpack.c.l.bf16 %v124
      %v133 = vmax.f32 %v125, -3.0040553e+38
      %v134 = vmax.f32 %v126, -3.0040553e+38
      %v135 = vmax.f32 %v127, -3.0040553e+38
      %v136 = vmax.f32 %v128, -3.0040553e+38
      %v137 = vmax.f32 %v129, -3.0040553e+38
      %v138 = vmax.f32 %v130, -3.0040553e+38
      %v139 = vmax.f32 %v131, -3.0040553e+38
      %v140 = vmax.f32 %v132, -3.0040553e+38
      %v141 = vpack.c.bf16 %v133, %v133
      %v142 = vpack.c.bf16 %v134, %v134
      %v143 = vpack.c.bf16 %v135, %v135
      %v144 = vpack.c.bf16 %v136, %v136
      %v145 = vpack.c.bf16 %v137, %v137
      %v146 = vpack.c.bf16 %v138, %v138
      %v147 = vpack.c.bf16 %v139, %v139
      %v148 = vpack.c.bf16 %v140, %v140
      %s149 = scalar_lea.vmem %s111, 72
      %v150 = vld [vmem:[%s149] sm:$0xf]
      %v151 = vld [vmem:[%s149 + $0x8] sm:$0xf]
      %v152 = vld [vmem:[%s149 + $0x10] sm:$0xf]
      %v153 = vld [vmem:[%s149 + $0x18] sm:$0xf]
      %v154 = vld [vmem:[%s149 + $0x20] sm:$0xf]
      %v155 = vld [vmem:[%s149 + $0x28] sm:$0xf]
      %v156 = vld [vmem:[%s149 + $0x30] sm:$0xf]
      %v157 = vld [vmem:[%s149 + $0x38] sm:$0xf]
      %v158 = vunpack.c.l.bf16 %v141
      %v159 = vunpack.c.l.bf16 %v142
      %v160 = vunpack.c.l.bf16 %v143
      %v161 = vunpack.c.l.bf16 %v144
      %v162 = vunpack.c.l.bf16 %v145
      %v163 = vunpack.c.l.bf16 %v146
      %v164 = vunpack.c.l.bf16 %v147
      %v165 = vunpack.c.l.bf16 %v148
      %v166 = vunpack.c.l.bf16 %v150
      %v167 = vunpack.c.l.bf16 %v151
      %v168 = vunpack.c.l.bf16 %v152
      %v169 = vunpack.c.l.bf16 %v153
      %v170 = vunpack.c.l.bf16 %v154
      %v171 = vunpack.c.l.bf16 %v155
      %v172 = vunpack.c.l.bf16 %v156
      %v173 = vunpack.c.l.bf16 %v157
      %v174 = vmax.f32 %v158, %v166
      %v175 = vmax.f32 %v159, %v167
      %v176 = vmax.f32 %v160, %v168
      %v177 = vmax.f32 %v161, %v169
      %v178 = vmax.f32 %v162, %v170
      %v179 = vmax.f32 %v163, %v171
      %v180 = vmax.f32 %v164, %v172
      %v181 = vmax.f32 %v165, %v173
      %v182 = vpack.c.bf16 %v174, %v174
      %v183 = vpack.c.bf16 %v175, %v175
      %v184 = vpack.c.bf16 %v176, %v176
      %v185 = vpack.c.bf16 %v177, %v177
      %v186 = vpack.c.bf16 %v178, %v178
      %v187 = vpack.c.bf16 %v179, %v179
      %v188 = vpack.c.bf16 %v180, %v180
      %v189 = vpack.c.bf16 %v181, %v181
      %v190 = vld [vmem:[%s111 + $0x4] sm:$0x1]
      %v191 = vld [vmem:[%s111 + $0xc] sm:$0x1]
      %v192 = vld [vmem:[%s111 + $0x14] sm:$0x1]
      %v193 = vld [vmem:[%s111 + $0x1c] sm:$0x1]
      %v194 = vld [vmem:[%s111 + $0x24] sm:$0x1]
      %v195 = vld [vmem:[%s111 + $0x2c] sm:$0x1]
      %v196 = vld [vmem:[%s111 + $0x34] sm:$0x1]
      %v197 = vld [vmem:[%s111 + $0x3c] sm:$0x1]
      %v198 = vunpack.c.l.bf16 %v182
      %v199 = vunpack.c.l.bf16 %v183
      %v200 = vunpack.c.l.bf16 %v184
      %v201 = vunpack.c.l.bf16 %v185
      %v202 = vunpack.c.l.bf16 %v186
      %v203 = vunpack.c.l.bf16 %v187
      %v204 = vunpack.c.l.bf16 %v188
      %v205 = vunpack.c.l.bf16 %v189
      %v206 = vunpack.c.l.bf16 %v190
      %v207 = vunpack.c.l.bf16 %v191
      %v208 = vunpack.c.l.bf16 %v192
      %v209 = vunpack.c.l.bf16 %v193
      %v210 = vunpack.c.l.bf16 %v194
      %v211 = vunpack.c.l.bf16 %v195
      %v212 = vunpack.c.l.bf16 %v196
      %v213 = vunpack.c.l.bf16 %v197
      %vm230 = vcmask 1046528
      %v231 = vrot.slane %v125, 1
      %v232 = vrot.slane %v206, 1
      %v233 = vsel %vm230, %v231, %v232
      %v234 = vrot.slane %v126, 1
      %v235 = vrot.slane %v207, 1
      %v236 = vsel %vm230, %v234, %v235
      %v237 = vrot.slane %v127, 1
      %v238 = vrot.slane %v208, 1
      %v239 = vsel %vm230, %v237, %v238
      %v240 = vrot.slane %v128, 1
      %v241 = vrot.slane %v209, 1
      %v242 = vsel %vm230, %v240, %v241
      %v243 = vrot.slane %v129, 1
      %v244 = vrot.slane %v210, 1
      %v245 = vsel %vm230, %v243, %v244
      %v246 = vrot.slane %v130, 1
      %v247 = vrot.slane %v211, 1
      %v248 = vsel %vm230, %v246, %v247
      %v249 = vrot.slane %v131, 1
      %v250 = vrot.slane %v212, 1
      %v251 = vsel %vm230, %v249, %v250
      %v252 = vrot.slane %v132, 1
      %v253 = vrot.slane %v213, 1
      %v254 = vsel %vm230, %v252, %v253
      %v263 = vmax.f32 %v198, %v233
      %v264 = vmax.f32 %v199, %v236
      %v265 = vmax.f32 %v200, %v239
      %v266 = vmax.f32 %v201, %v242
      %v267 = vmax.f32 %v202, %v245
      %v268 = vmax.f32 %v203, %v248
      %v269 = vmax.f32 %v204, %v251
      %v270 = vmax.f32 %v205, %v254
      %v271 = vpack.c.bf16 %v263, %v263
      %v272 = vpack.c.bf16 %v264, %v264
      %v273 = vpack.c.bf16 %v265, %v265
      %v274 = vpack.c.bf16 %v266, %v266
      %v275 = vpack.c.bf16 %v267, %v267
      %v276 = vpack.c.bf16 %v268, %v268
      %v277 = vpack.c.bf16 %v269, %v269
      %v278 = vpack.c.bf16 %v270, %v270
      %s279 = scalar_lea.vmem %s111, 144
      %v280 = vld [vmem:[%s279] sm:$0xf]
      %v281 = vld [vmem:[%s279 + $0x8] sm:$0xf]
      %v282 = vld [vmem:[%s279 + $0x10] sm:$0xf]
      %v283 = vld [vmem:[%s279 + $0x18] sm:$0xf]
      %v284 = vld [vmem:[%s279 + $0x20] sm:$0xf]
      %v285 = vld [vmem:[%s279 + $0x28] sm:$0xf]
      %v286 = vld [vmem:[%s279 + $0x30] sm:$0xf]
      %v287 = vld [vmem:[%s279 + $0x38] sm:$0xf]
      %v288 = vunpack.c.l.bf16 %v271
      %v289 = vunpack.c.l.bf16 %v272
      %v290 = vunpack.c.l.bf16 %v273
      %v291 = vunpack.c.l.bf16 %v274
      %v292 = vunpack.c.l.bf16 %v275
      %v293 = vunpack.c.l.bf16 %v276
      %v294 = vunpack.c.l.bf16 %v277
      %v295 = vunpack.c.l.bf16 %v278
      %v296 = vunpack.c.l.bf16 %v280
      %v297 = vunpack.c.l.bf16 %v281
      %v298 = vunpack.c.l.bf16 %v282
      %v299 = vunpack.c.l.bf16 %v283
      %v300 = vunpack.c.l.bf16 %v284
      %v301 = vunpack.c.l.bf16 %v285
      %v302 = vunpack.c.l.bf16 %v286
      %v303 = vunpack.c.l.bf16 %v287
      %v304 = vmax.f32 %v288, %v296
      %v305 = vmax.f32 %v289, %v297
      %v306 = vmax.f32 %v290, %v298
      %v307 = vmax.f32 %v291, %v299
      %v308 = vmax.f32 %v292, %v300
      %v309 = vmax.f32 %v293, %v301
      %v310 = vmax.f32 %v294, %v302
      %v311 = vmax.f32 %v295, %v303
      %v312 = vpack.c.bf16 %v304, %v304
      %v313 = vpack.c.bf16 %v305, %v305
      %v314 = vpack.c.bf16 %v306, %v306
      %v315 = vpack.c.bf16 %v307, %v307
      %v316 = vpack.c.bf16 %v308, %v308
      %v317 = vpack.c.bf16 %v309, %v309
      %v318 = vpack.c.bf16 %v310, %v310
      %v319 = vpack.c.bf16 %v311, %v311
      %s320 = scalar_lea.vmem %s111, 216
      %v321 = vld [vmem:[%s320] sm:$0xf]
      %v322 = vld [vmem:[%s320 + $0x8] sm:$0xf]
      %v323 = vld [vmem:[%s320 + $0x10] sm:$0xf]
      %v324 = vld [vmem:[%s320 + $0x18] sm:$0xf]
      %v325 = vld [vmem:[%s320 + $0x20] sm:$0xf]
      %v326 = vld [vmem:[%s320 + $0x28] sm:$0xf]
      %v327 = vld [vmem:[%s320 + $0x30] sm:$0xf]
      %v328 = vld [vmem:[%s320 + $0x38] sm:$0xf]
      %v329 = vunpack.c.l.bf16 %v312
      %v330 = vunpack.c.l.bf16 %v313
      %v331 = vunpack.c.l.bf16 %v314
      %v332 = vunpack.c.l.bf16 %v315
      %v333 = vunpack.c.l.bf16 %v316
      %v334 = vunpack.c.l.bf16 %v317
      %v335 = vunpack.c.l.bf16 %v318
      %v336 = vunpack.c.l.bf16 %v319
      %v337 = vunpack.c.l.bf16 %v321
      %v338 = vunpack.c.l.bf16 %v322
      %v339 = vunpack.c.l.bf16 %v323
      %v340 = vunpack.c.l.bf16 %v324
      %v341 = vunpack.c.l.bf16 %v325
      %v342 = vunpack.c.l.bf16 %v326
      %v343 = vunpack.c.l.bf16 %v327
      %v344 = vunpack.c.l.bf16 %v328
      %v345 = vmax.f32 %v329, %v337
      %v346 = vmax.f32 %v330, %v338
      %v347 = vmax.f32 %v331, %v339
      %v348 = vmax.f32 %v332, %v340
      %v349 = vmax.f32 %v333, %v341
      %v350 = vmax.f32 %v334, %v342
      %v351 = vmax.f32 %v335, %v343
      %v352 = vmax.f32 %v336, %v344
      %v353 = vpack.c.bf16 %v345, %v345
      %v354 = vpack.c.bf16 %v346, %v346
      %v355 = vpack.c.bf16 %v347, %v347
      %v356 = vpack.c.bf16 %v348, %v348
      %v357 = vpack.c.bf16 %v349, %v349
      %v358 = vpack.c.bf16 %v350, %v350
      %v359 = vpack.c.bf16 %v351, %v351
      %v360 = vpack.c.bf16 %v352, %v352
      %v361 = vld [vmem:[%s279 + $0x4] sm:$0x1]
      %v362 = vld [vmem:[%s279 + $0xc] sm:$0x1]
      %v363 = vld [vmem:[%s279 + $0x14] sm:$0x1]
      %v364 = vld [vmem:[%s279 + $0x1c] sm:$0x1]
      %v365 = vld [vmem:[%s279 + $0x24] sm:$0x1]
      %v366 = vld [vmem:[%s279 + $0x2c] sm:$0x1]
      %v367 = vld [vmem:[%s279 + $0x34] sm:$0x1]
      %v368 = vld [vmem:[%s279 + $0x3c] sm:$0x1]
      %v369 = vunpack.c.l.bf16 %v353
      %v370 = vunpack.c.l.bf16 %v354
      %v371 = vunpack.c.l.bf16 %v355
      %v372 = vunpack.c.l.bf16 %v356
      %v373 = vunpack.c.l.bf16 %v357
      %v374 = vunpack.c.l.bf16 %v358
      %v375 = vunpack.c.l.bf16 %v359
      %v376 = vunpack.c.l.bf16 %v360
      %v377 = vunpack.c.l.bf16 %v361
      %v378 = vunpack.c.l.bf16 %v362
      %v379 = vunpack.c.l.bf16 %v363
      %v380 = vunpack.c.l.bf16 %v364
      %v381 = vunpack.c.l.bf16 %v365
      %v382 = vunpack.c.l.bf16 %v366
      %v383 = vunpack.c.l.bf16 %v367
      %v384 = vunpack.c.l.bf16 %v368
      %v401 = vrot.slane %v296, 1
      %v402 = vrot.slane %v377, 1
      %v403 = vsel %vm230, %v401, %v402
      %v404 = vrot.slane %v297, 1
      %v405 = vrot.slane %v378, 1
      %v406 = vsel %vm230, %v404, %v405
      %v407 = vrot.slane %v298, 1
      %v408 = vrot.slane %v379, 1
      %v409 = vsel %vm230, %v407, %v408
      %v410 = vrot.slane %v299, 1
      %v411 = vrot.slane %v380, 1
      %v412 = vsel %vm230, %v410, %v411
      %v413 = vrot.slane %v300, 1
      %v414 = vrot.slane %v381, 1
      %v415 = vsel %vm230, %v413, %v414
      %v416 = vrot.slane %v301, 1
      %v417 = vrot.slane %v382, 1
      %v418 = vsel %vm230, %v416, %v417
      %v419 = vrot.slane %v302, 1
      %v420 = vrot.slane %v383, 1
      %v421 = vsel %vm230, %v419, %v420
      %v422 = vrot.slane %v303, 1
      %v423 = vrot.slane %v384, 1
      %v424 = vsel %vm230, %v422, %v423
      %v433 = vmax.f32 %v369, %v403
      %v434 = vmax.f32 %v370, %v406
      %v435 = vmax.f32 %v371, %v409
      %v436 = vmax.f32 %v372, %v412
      %v437 = vmax.f32 %v373, %v415
      %v438 = vmax.f32 %v374, %v418
      %v439 = vmax.f32 %v375, %v421
      %v440 = vmax.f32 %v376, %v424
      %v441 = vpack.c.bf16 %v433, %v433
      %v442 = vpack.c.bf16 %v434, %v434
      %v443 = vpack.c.bf16 %v435, %v435
      %v444 = vpack.c.bf16 %v436, %v436
      %v445 = vpack.c.bf16 %v437, %v437
      %v446 = vpack.c.bf16 %v438, %v438
      %v447 = vpack.c.bf16 %v439, %v439
      %v448 = vpack.c.bf16 %v440, %v440
      %s449 = scalar_lea.vmem %s111, 8
      %v450 = vld [vmem:[%s449] sm:$0xf]
      %v451 = vld [vmem:[%s449 + $0x8] sm:$0xf]
      %v452 = vld [vmem:[%s449 + $0x10] sm:$0xf]
      %v453 = vld [vmem:[%s449 + $0x18] sm:$0xf]
      %v454 = vld [vmem:[%s449 + $0x20] sm:$0xf]
      %v455 = vld [vmem:[%s449 + $0x28] sm:$0xf]
      %v456 = vld [vmem:[%s449 + $0x30] sm:$0xf]
      %v457 = vld [vmem:[%s449 + $0x38] sm:$0xf]
      %v458 = vunpack.c.l.bf16 %v441
      %v459 = vunpack.c.l.bf16 %v442
      %v460 = vunpack.c.l.bf16 %v443
      %v461 = vunpack.c.l.bf16 %v444
      %v462 = vunpack.c.l.bf16 %v445
      %v463 = vunpack.c.l.bf16 %v446
      %v464 = vunpack.c.l.bf16 %v447
      %v465 = vunpack.c.l.bf16 %v448
      %v466 = vunpack.c.l.bf16 %v450
      %v467 = vunpack.c.l.bf16 %v451
      %v468 = vunpack.c.l.bf16 %v452
      %v469 = vunpack.c.l.bf16 %v453
      %v470 = vunpack.c.l.bf16 %v454
      %v471 = vunpack.c.l.bf16 %v455
      %v472 = vunpack.c.l.bf16 %v456
      %v473 = vunpack.c.l.bf16 %v457
      %v474 = vmax.f32 %v458, %v466
      %v475 = vmax.f32 %v459, %v467
      %v476 = vmax.f32 %v460, %v468
      %v477 = vmax.f32 %v461, %v469
      %v478 = vmax.f32 %v462, %v470
      %v479 = vmax.f32 %v463, %v471
      %v480 = vmax.f32 %v464, %v472
      %v481 = vmax.f32 %v465, %v473
      %v482 = vpack.c.bf16 %v474, %v474
      %v483 = vpack.c.bf16 %v475, %v475
      %v484 = vpack.c.bf16 %v476, %v476
      %v485 = vpack.c.bf16 %v477, %v477
      %v486 = vpack.c.bf16 %v478, %v478
      %v487 = vpack.c.bf16 %v479, %v479
      %v488 = vpack.c.bf16 %v480, %v480
      %v489 = vpack.c.bf16 %v481, %v481
      %s490 = scalar_lea.vmem %s111, 80
      %v491 = vld [vmem:[%s490] sm:$0xf]
      %v492 = vld [vmem:[%s490 + $0x8] sm:$0xf]
      %v493 = vld [vmem:[%s490 + $0x10] sm:$0xf]
      %v494 = vld [vmem:[%s490 + $0x18] sm:$0xf]
      %v495 = vld [vmem:[%s490 + $0x20] sm:$0xf]
      %v496 = vld [vmem:[%s490 + $0x28] sm:$0xf]
      %v497 = vld [vmem:[%s490 + $0x30] sm:$0xf]
      %v498 = vld [vmem:[%s490 + $0x38] sm:$0xf]
      %v499 = vunpack.c.l.bf16 %v482
      %v500 = vunpack.c.l.bf16 %v483
      %v501 = vunpack.c.l.bf16 %v484
      %v502 = vunpack.c.l.bf16 %v485
      %v503 = vunpack.c.l.bf16 %v486
      %v504 = vunpack.c.l.bf16 %v487
      %v505 = vunpack.c.l.bf16 %v488
      %v506 = vunpack.c.l.bf16 %v489
      %v507 = vunpack.c.l.bf16 %v491
      %v508 = vunpack.c.l.bf16 %v492
      %v509 = vunpack.c.l.bf16 %v493
      %v510 = vunpack.c.l.bf16 %v494
      %v511 = vunpack.c.l.bf16 %v495
      %v512 = vunpack.c.l.bf16 %v496
      %v513 = vunpack.c.l.bf16 %v497
      %v514 = vunpack.c.l.bf16 %v498
      %v515 = vmax.f32 %v499, %v507
      %v516 = vmax.f32 %v500, %v508
      %v517 = vmax.f32 %v501, %v509
      %v518 = vmax.f32 %v502, %v510
      %v519 = vmax.f32 %v503, %v511
      %v520 = vmax.f32 %v504, %v512
      %v521 = vmax.f32 %v505, %v513
      %v522 = vmax.f32 %v506, %v514
      %v523 = vpack.c.bf16 %v515, %v515
      %v524 = vpack.c.bf16 %v516, %v516
      %v525 = vpack.c.bf16 %v517, %v517
      %v526 = vpack.c.bf16 %v518, %v518
      %v527 = vpack.c.bf16 %v519, %v519
      %v528 = vpack.c.bf16 %v520, %v520
      %v529 = vpack.c.bf16 %v521, %v521
      %v530 = vpack.c.bf16 %v522, %v522
      %v531 = vld [vmem:[%s449 + $0x4] sm:$0x1]
      %v532 = vld [vmem:[%s449 + $0xc] sm:$0x1]
      %v533 = vld [vmem:[%s449 + $0x14] sm:$0x1]
      %v534 = vld [vmem:[%s449 + $0x1c] sm:$0x1]
      %v535 = vld [vmem:[%s449 + $0x24] sm:$0x1]
      %v536 = vld [vmem:[%s449 + $0x2c] sm:$0x1]
      %v537 = vld [vmem:[%s449 + $0x34] sm:$0x1]
      %v538 = vld [vmem:[%s449 + $0x3c] sm:$0x1]
      %v539 = vunpack.c.l.bf16 %v523
      %v540 = vunpack.c.l.bf16 %v524
      %v541 = vunpack.c.l.bf16 %v525
      %v542 = vunpack.c.l.bf16 %v526
      %v543 = vunpack.c.l.bf16 %v527
      %v544 = vunpack.c.l.bf16 %v528
      %v545 = vunpack.c.l.bf16 %v529
      %v546 = vunpack.c.l.bf16 %v530
      %v547 = vunpack.c.l.bf16 %v531
      %v548 = vunpack.c.l.bf16 %v532
      %v549 = vunpack.c.l.bf16 %v533
      %v550 = vunpack.c.l.bf16 %v534
      %v551 = vunpack.c.l.bf16 %v535
      %v552 = vunpack.c.l.bf16 %v536
      %v553 = vunpack.c.l.bf16 %v537
      %v554 = vunpack.c.l.bf16 %v538
      %v571 = vrot.slane %v466, 1
      %v572 = vrot.slane %v547, 1
      %v573 = vsel %vm230, %v571, %v572
      %v574 = vrot.slane %v467, 1
      %v575 = vrot.slane %v548, 1
      %v576 = vsel %vm230, %v574, %v575
      %v577 = vrot.slane %v468, 1
      %v578 = vrot.slane %v549, 1
      %v579 = vsel %vm230, %v577, %v578
      %v580 = vrot.slane %v469, 1
      %v581 = vrot.slane %v550, 1
      %v582 = vsel %vm230, %v580, %v581
      %v583 = vrot.slane %v470, 1
      %v584 = vrot.slane %v551, 1
      %v585 = vsel %vm230, %v583, %v584
      %v586 = vrot.slane %v471, 1
      %v587 = vrot.slane %v552, 1
      %v588 = vsel %vm230, %v586, %v587
      %v589 = vrot.slane %v472, 1
      %v590 = vrot.slane %v553, 1
      %v591 = vsel %vm230, %v589, %v590
      %v592 = vrot.slane %v473, 1
      %v593 = vrot.slane %v554, 1
      %v594 = vsel %vm230, %v592, %v593
      %v603 = vmax.f32 %v539, %v573
      %v604 = vmax.f32 %v540, %v576
      %v605 = vmax.f32 %v541, %v579
      %v606 = vmax.f32 %v542, %v582
      %v607 = vmax.f32 %v543, %v585
      %v608 = vmax.f32 %v544, %v588
      %v609 = vmax.f32 %v545, %v591
      %v610 = vmax.f32 %v546, %v594
      %v611 = vpack.c.bf16 %v603, %v603
      %v612 = vpack.c.bf16 %v604, %v604
      %v613 = vpack.c.bf16 %v605, %v605
      %v614 = vpack.c.bf16 %v606, %v606
      %v615 = vpack.c.bf16 %v607, %v607
      %v616 = vpack.c.bf16 %v608, %v608
      %v617 = vpack.c.bf16 %v609, %v609
      %v618 = vpack.c.bf16 %v610, %v610
      %619 = vst [vmem:[%s116] sm:$0xf] %v611
      %620 = vst [vmem:[%s116 + $0x4] sm:$0xf] %v612
      %621 = vst [vmem:[%s116 + $0x8] sm:$0xf] %v613
      %622 = vst [vmem:[%s116 + $0xc] sm:$0xf] %v614
      %623 = vst [vmem:[%s116 + $0x10] sm:$0xf] %v615
      %624 = vst [vmem:[%s116 + $0x14] sm:$0xf] %v616
      %625 = vst [vmem:[%s116 + $0x18] sm:$0xf] %v617
      %626 = vst [vmem:[%s116 + $0x1c] sm:$0xf] %v618
      %p627 = scmp.lt.s32.totalorder %s12, 1
      %s628 = scalar_select %p627, %s12, 1
      %s629 = smul.addr %s628, 8
      %s630 = smul.addr %s629, 4
      %s631 = scalar_lea.vmem %s1, %s630
      // Predicated region
      $region25: #{resnext_forward.10} parent=23 // pred_check
        %p632 = pneg %p56
      $region26: #{resnext_forward.10} parent=23 // pred_check_branch
        %634 = sbr.rel (%p632) target = $region28
      $region27: #{resnext_forward.10} parent=23 // pred_region
        _
      $region28: #{resnext_forward.10} parent=23 // pred_fallthru
        _
    $region24: #{resnext_forward.10} parent=5 // pred_fallthru
      _
    %p635 = scmp.le.s32.totalorder 2, %s7
    // Predicated region
    $region29: #{resnext_forward.10} parent=5 // pred_check
      %p636 = pneg %p635
    $region30: #{resnext_forward.10} parent=5 // pred_check_branch
      %638 = sbr.rel (%p636) target = $region32
    $region31: #{resnext_forward.10} parent=5 // pred_region
      %s639 = ssub.s32 %s7, 2
      // Predicated region
      $region33: #{resnext_forward.10} parent=31 // pred_check
        %p640 = pneg %p62
      $region34: #{resnext_forward.10} parent=31 // pred_check_branch
        %642 = sbr.rel (%p640) target = $region36
      $region35: #{resnext_forward.10} parent=31 // pred_region
        %p643 = scmp.lt.s32.totalorder %s13, 1
        %s644 = scalar_select %p643, %s13, 1
        %s645 = smul.addr %s644, 8
        %s646 = smul.addr %s645, 4
        %s647 = scalar_lea.vmem %s1, %s646
      $region36: #{resnext_forward.10} parent=31 // pred_fallthru
        _
    $region32: #{resnext_forward.10} parent=5 // pred_fallthru
      _
  $region6: #{resnext_forward.10} parent=0 // loop_footer
    %s11 = sadd.s32 1, %s7
  $region7: #{resnext_forward.10} parent=0 // loop_footer_branch
    %6 = sbr.rel target = $region3
  $region8: #{resnext_forward.10} parent=0 // loop_exit
    _

// kernel: resnext_forward.9
$region0: #{resnext_forward.9}
  #allocation0 [shape = 'u32[]', space=smem, size = 0x4, offset = 0x4, fixed_abs, tag = 'smem constant byte address 0x4 - core index']
  #allocation1 [shape = 'u32[72,128]{1,0:T(1,128)}', space=vmem, size = 0x9000, scoped, tag = 'internal scratch']
  %s0 = inlined_call_operand.vmem [shape: bf16[512,256], index: 0, kind: input, shape index: {}]
  %s1 = inlined_call_operand.vmem [shape: bf16[256,128], index: 1, kind: input, shape index: {}]
  %s2 = inlined_call_operand.vmem [shape: f32[1,128], index: 2, kind: input, shape index: {}]
  %s3 = inlined_call_operand.vmem [shape: bf16[512,128], index: 3, kind: output, shape index: {}]
  %s4 = sld [smem:[#allocation0]]
  $region22: #{resnext_forward.9} parent=0
    _
  %s6 = ssub.s32 1, %s4
  %s7 = scalar_select 0, %s6, %s4
  // Predicated region
  $region2: #{resnext_forward.9} parent=0 // pred_check
    _
  $region3: #{resnext_forward.9} parent=0 // pred_check_branch
    %9 = sbr.rel (0) target = $region5
  $region4: #{resnext_forward.9} parent=0 // pred_region
    _
  $region5: #{resnext_forward.9} parent=0 // pred_fallthru
    _
  // Predicated region
  $region6: #{resnext_forward.9} parent=0 // pred_check
    _
  $region7: #{resnext_forward.9} parent=0 // pred_check_branch
    %11 = sbr.rel (0) target = $region9
  $region8: #{resnext_forward.9} parent=0 // pred_region
    _
  $region9: #{resnext_forward.9} parent=0 // pred_fallthru
    _
  // Predicated region
  $region10: #{resnext_forward.9} parent=0 // pred_check
    _
  $region11: #{resnext_forward.9} parent=0 // pred_check_branch
    %13 = sbr.rel (0) target = $region13
  $region12: #{resnext_forward.9} parent=0 // pred_region
    _
  $region13: #{resnext_forward.9} parent=0 // pred_fallthru
    _
  %v14 = vld [vmem:[%s0] sm:$0xff]
  %v15 = vld [vmem:[%s0 + $0x8] sm:$0xff]
  %v16 = vld [vmem:[%s0 + $0x10] sm:$0xff]
  %v17 = vld [vmem:[%s0 + $0x18] sm:$0xff]
  %v18 = vld [vmem:[%s0 + $0x20] sm:$0xff]
  %v19 = vld [vmem:[%s0 + $0x28] sm:$0xff]
  %v20 = vld [vmem:[%s0 + $0x30] sm:$0xff]
  %v21 = vld [vmem:[%s0 + $0x38] sm:$0xff]
  %v22 = vld [vmem:[%s0 + $0x40] sm:$0xff]
  %v23 = vld [vmem:[%s0 + $0x48] sm:$0xff]
  %v24 = vld [vmem:[%s0 + $0x50] sm:$0xff]
  %v25 = vld [vmem:[%s0 + $0x58] sm:$0xff]
  %v26 = vld [vmem:[%s0 + $0x60] sm:$0xff]
  %v27 = vld [vmem:[%s0 + $0x68] sm:$0xff]
  %v28 = vld [vmem:[%s0 + $0x70] sm:$0xff]
  %v29 = vld [vmem:[%s0 + $0x78] sm:$0xff]
  %v30 = vld [vmem:[%s0 + $0x80] sm:$0xff]
  %v31 = vld [vmem:[%s0 + $0x88] sm:$0xff]
  %v32 = vld [vmem:[%s0 + $0x90] sm:$0xff]
  %v33 = vld [vmem:[%s0 + $0x98] sm:$0xff]
  %v34 = vld [vmem:[%s0 + $0xa0] sm:$0xff]
  %v35 = vld [vmem:[%s0 + $0xa8] sm:$0xff]
  %v36 = vld [vmem:[%s0 + $0xb0] sm:$0xff]
  %v37 = vld [vmem:[%s0 + $0xb8] sm:$0xff]
  %v38 = vld [vmem:[%s0 + $0xc0] sm:$0xff]
  %v39 = vld [vmem:[%s0 + $0xc8] sm:$0xff]
  %v40 = vld [vmem:[%s0 + $0xd0] sm:$0xff]
  %v41 = vld [vmem:[%s0 + $0xd8] sm:$0xff]
  %v42 = vld [vmem:[%s0 + $0xe0] sm:$0xff]
  %v43 = vld [vmem:[%s0 + $0xe8] sm:$0xff]
  %v44 = vld [vmem:[%s0 + $0xf0] sm:$0xff]
  %v45 = vld [vmem:[%s0 + $0xf8] sm:$0xff]
  %v46 = vld [vmem:[%s0 + $0x100] sm:$0xff]
  %v47 = vld [vmem:[%s0 + $0x108] sm:$0xff]
  %v48 = vld [vmem:[%s0 + $0x110] sm:$0xff]
  %v49 = vld [vmem:[%s0 + $0x118] sm:$0xff]
  %v50 = vld [vmem:[%s0 + $0x120] sm:$0xff]
  %v51 = vld [vmem:[%s0 + $0x128] sm:$0xff]
  %v52 = vld [vmem:[%s0 + $0x130] sm:$0xff]
  %v53 = vld [vmem:[%s0 + $0x138] sm:$0xff]
  %v54 = vld [vmem:[%s0 + $0x140] sm:$0xff]
  %v55 = vld [vmem:[%s0 + $0x148] sm:$0xff]
  %v56 = vld [vmem:[%s0 + $0x150] sm:$0xff]
  %v57 = vld [vmem:[%s0 + $0x158] sm:$0xff]
  %v58 = vld [vmem:[%s0 + $0x160] sm:$0xff]
  %v59 = vld [vmem:[%s0 + $0x168] sm:$0xff]
  %v60 = vld [vmem:[%s0 + $0x170] sm:$0xff]
  %v61 = vld [vmem:[%s0 + $0x178] sm:$0xff]
  %v62 = vld [vmem:[%s0 + $0x180] sm:$0xff]
  %v63 = vld [vmem:[%s0 + $0x188] sm:$0xff]
  %v64 = vld [vmem:[%s0 + $0x190] sm:$0xff]
  %v65 = vld [vmem:[%s0 + $0x198] sm:$0xff]
  %v66 = vld [vmem:[%s0 + $0x1a0] sm:$0xff]
  %v67 = vld [vmem:[%s0 + $0x1a8] sm:$0xff]
  %v68 = vld [vmem:[%s0 + $0x1b0] sm:$0xff]
  %v69 = vld [vmem:[%s0 + $0x1b8] sm:$0xff]
  %v70 = vld [vmem:[%s0 + $0x1c0] sm:$0xff]
  %v71 = vld [vmem:[%s0 + $0x1c8] sm:$0xff]
  %v72 = vld [vmem:[%s0 + $0x1d0] sm:$0xff]
  %v73 = vld [vmem:[%s0 + $0x1d8] sm:$0xff]
  %v74 = vld [vmem:[%s0 + $0x1e0] sm:$0xff]
  %v75 = vld [vmem:[%s0 + $0x1e8] sm:$0xff]
  %v76 = vld [vmem:[%s0 + $0x1f0] sm:$0xff]
  %v77 = vld [vmem:[%s0 + $0x1f8] sm:$0xff]
  %v78 = vld [vmem:[%s1] sm:$0xf]
  %v79 = vld [vmem:[%s1 + $0x4] sm:$0xf]
  %v80 = vld [vmem:[%s1 + $0x8] sm:$0xf]
  %v81 = vld [vmem:[%s1 + $0xc] sm:$0xf]
  %v82 = vld [vmem:[%s1 + $0x10] sm:$0xf]
  %v83 = vld [vmem:[%s1 + $0x14] sm:$0xf]
  %v84 = vld [vmem:[%s1 + $0x18] sm:$0xf]
  %v85 = vld [vmem:[%s1 + $0x1c] sm:$0xf]
  %v86 = vld [vmem:[%s1 + $0x20] sm:$0xf]
  %v87 = vld [vmem:[%s1 + $0x24] sm:$0xf]
  %v88 = vld [vmem:[%s1 + $0x28] sm:$0xf]
  %v89 = vld [vmem:[%s1 + $0x2c] sm:$0xf]
  %v90 = vld [vmem:[%s1 + $0x30] sm:$0xf]
  %v91 = vld [vmem:[%s1 + $0x34] sm:$0xf]
  %v92 = vld [vmem:[%s1 + $0x38] sm:$0xf]
  %v93 = vld [vmem:[%s1 + $0x3c] sm:$0xf]
  %v94 = vld [vmem:[%s1 + $0x40] sm:$0xf]
  %v95 = vld [vmem:[%s1 + $0x44] sm:$0xf]
  %v96 = vld [vmem:[%s1 + $0x48] sm:$0xf]
  %v97 = vld [vmem:[%s1 + $0x4c] sm:$0xf]
  %v98 = vld [vmem:[%s1 + $0x50] sm:$0xf]
  %v99 = vld [vmem:[%s1 + $0x54] sm:$0xf]
  %v100 = vld [vmem:[%s1 + $0x58] sm:$0xf]
  %v101 = vld [vmem:[%s1 + $0x5c] sm:$0xf]
  %v102 = vld [vmem:[%s1 + $0x60] sm:$0xf]
  %v103 = vld [vmem:[%s1 + $0x64] sm:$0xf]
  %v104 = vld [vmem:[%s1 + $0x68] sm:$0xf]
  %v105 = vld [vmem:[%s1 + $0x6c] sm:$0xf]
  %v106 = vld [vmem:[%s1 + $0x70] sm:$0xf]
  %v107 = vld [vmem:[%s1 + $0x74] sm:$0xf]
  %v108 = vld [vmem:[%s1 + $0x78] sm:$0xf]
  %v109 = vld [vmem:[%s1 + $0x7c] sm:$0xf]
  %v110 = vld [vmem:[%s2] sm:$0x1]
  %v112 = vperm.slane %v110, 0
  %v178 = vunpack.c.l.b16 %v14
  %v179 = vunpack.c.h.b16 %v14
  %v180 = vunpack.c.l.b16 %v15
  %v181 = vunpack.c.h.b16 %v15
  %v182 = vunpack.c.l.b16 %v16
  %v183 = vunpack.c.h.b16 %v16
  %v184 = vunpack.c.l.b16 %v17
  %v185 = vunpack.c.h.b16 %v17
  %v186 = vunpack.c.l.b16 %v18
  %v187 = vunpack.c.h.b16 %v18
  %v188 = vunpack.c.l.b16 %v19
  %v189 = vunpack.c.h.b16 %v19
  %v190 = vunpack.c.l.b16 %v20
  %v191 = vunpack.c.h.b16 %v20
  %v192 = vunpack.c.l.b16 %v21
  %v193 = vunpack.c.h.b16 %v21
  %v194 = vunpack.c.l.b16 %v22
  %v195 = vunpack.c.h.b16 %v22
  %v196 = vunpack.c.l.b16 %v23
  %v197 = vunpack.c.h.b16 %v23
  %v198 = vunpack.c.l.b16 %v24
  %v199 = vunpack.c.h.b16 %v24
  %v200 = vunpack.c.l.b16 %v25
  %v201 = vunpack.c.h.b16 %v25
  %v202 = vunpack.c.l.b16 %v26
  %v203 = vunpack.c.h.b16 %v26
  %v204 = vunpack.c.l.b16 %v27
  %v205 = vunpack.c.h.b16 %v27
  %v206 = vunpack.c.l.b16 %v28
  %v207 = vunpack.c.h.b16 %v28
  %v208 = vunpack.c.l.b16 %v29
  %v209 = vunpack.c.h.b16 %v29
  %v210 = vunpack.c.l.b16 %v30
  %v211 = vunpack.c.h.b16 %v30
  %v212 = vunpack.c.l.b16 %v31
  %v213 = vunpack.c.h.b16 %v31
  %v214 = vunpack.c.l.b16 %v32
  %v215 = vunpack.c.h.b16 %v32
  %v216 = vunpack.c.l.b16 %v33
  %v217 = vunpack.c.h.b16 %v33
  %v218 = vunpack.c.l.b16 %v34
  %v219 = vunpack.c.h.b16 %v34
  %v220 = vunpack.c.l.b16 %v35
  %v221 = vunpack.c.h.b16 %v35
  %v222 = vunpack.c.l.b16 %v36
  %v223 = vunpack.c.h.b16 %v36
  %v224 = vunpack.c.l.b16 %v37
  %v225 = vunpack.c.h.b16 %v37
  %v226 = vunpack.c.l.b16 %v38
  %v227 = vunpack.c.h.b16 %v38
  %v228 = vunpack.c.l.b16 %v39
  %v229 = vunpack.c.h.b16 %v39
  %v230 = vunpack.c.l.b16 %v40
  %v231 = vunpack.c.h.b16 %v40
  %v232 = vunpack.c.l.b16 %v41
  %v233 = vunpack.c.h.b16 %v41
  %v234 = vunpack.c.l.b16 %v42
  %v235 = vunpack.c.h.b16 %v42
  %v236 = vunpack.c.l.b16 %v43
  %v237 = vunpack.c.h.b16 %v43
  %v238 = vunpack.c.l.b16 %v44
  %v239 = vunpack.c.h.b16 %v44
  %v240 = vunpack.c.l.b16 %v45
  %v241 = vunpack.c.h.b16 %v45
  %v242 = vunpack.c.l.b16 %v46
  %v243 = vunpack.c.h.b16 %v46
  %v244 = vunpack.c.l.b16 %v47
  %v245 = vunpack.c.h.b16 %v47
  %v246 = vunpack.c.l.b16 %v48
  %v247 = vunpack.c.h.b16 %v48
  %v248 = vunpack.c.l.b16 %v49
  %v249 = vunpack.c.h.b16 %v49
  %v250 = vunpack.c.l.b16 %v50
  %v251 = vunpack.c.h.b16 %v50
  %v252 = vunpack.c.l.b16 %v51
  %v253 = vunpack.c.h.b16 %v51
  %v254 = vunpack.c.l.b16 %v52
  %v255 = vunpack.c.h.b16 %v52
  %v256 = vunpack.c.l.b16 %v53
  %v257 = vunpack.c.h.b16 %v53
  %v258 = vunpack.c.l.b16 %v54
  %v259 = vunpack.c.h.b16 %v54
  %v260 = vunpack.c.l.b16 %v55
  %v261 = vunpack.c.h.b16 %v55
  %v262 = vunpack.c.l.b16 %v56
  %v263 = vunpack.c.h.b16 %v56
  %v264 = vunpack.c.l.b16 %v57
  %v265 = vunpack.c.h.b16 %v57
  %v266 = vunpack.c.l.b16 %v58
  %v267 = vunpack.c.h.b16 %v58
  %v268 = vunpack.c.l.b16 %v59
  %v269 = vunpack.c.h.b16 %v59
  %v270 = vunpack.c.l.b16 %v60
  %v271 = vunpack.c.h.b16 %v60
  %v272 = vunpack.c.l.b16 %v61
  %v273 = vunpack.c.h.b16 %v61
  %v274 = vunpack.c.l.b16 %v62
  %v275 = vunpack.c.h.b16 %v62
  %v276 = vunpack.c.l.b16 %v63
  %v277 = vunpack.c.h.b16 %v63
  %v278 = vunpack.c.l.b16 %v64
  %v279 = vunpack.c.h.b16 %v64
  %v280 = vunpack.c.l.b16 %v65
  %v281 = vunpack.c.h.b16 %v65
  %v282 = vunpack.c.l.b16 %v66
  %v283 = vunpack.c.h.b16 %v66
  %v284 = vunpack.c.l.b16 %v67
  %v285 = vunpack.c.h.b16 %v67
  %v286 = vunpack.c.l.b16 %v68
  %v287 = vunpack.c.h.b16 %v68
  %v288 = vunpack.c.l.b16 %v69
  %v289 = vunpack.c.h.b16 %v69
  %v290 = vunpack.c.l.b16 %v70
  %v291 = vunpack.c.h.b16 %v70
  %v292 = vunpack.c.l.b16 %v71
  %v293 = vunpack.c.h.b16 %v71
  %v294 = vunpack.c.l.b16 %v72
  %v295 = vunpack.c.h.b16 %v72
  %v296 = vunpack.c.l.b16 %v73
  %v297 = vunpack.c.h.b16 %v73
  %v298 = vunpack.c.l.b16 %v74
  %v299 = vunpack.c.h.b16 %v74
  %v300 = vunpack.c.l.b16 %v75
  %v301 = vunpack.c.h.b16 %v75
  %v302 = vunpack.c.l.b16 %v76
  %v303 = vunpack.c.h.b16 %v76
  %v304 = vunpack.c.l.b16 %v77
  %v305 = vunpack.c.h.b16 %v77
  %v306 = vpack.c.b16 %v180, %v178
  %v307 = vpack.c.b16 %v181, %v179
  %v308 = vpack.c.b16 %v184, %v182
  %v309 = vpack.c.b16 %v185, %v183
  %v310 = vpack.c.b16 %v188, %v186
  %v311 = vpack.c.b16 %v189, %v187
  %v312 = vpack.c.b16 %v192, %v190
  %v313 = vpack.c.b16 %v193, %v191
  %v314 = vpack.c.b16 %v196, %v194
  %v315 = vpack.c.b16 %v197, %v195
  %v316 = vpack.c.b16 %v200, %v198
  %v317 = vpack.c.b16 %v201, %v199
  %v318 = vpack.c.b16 %v204, %v202
  %v319 = vpack.c.b16 %v205, %v203
  %v320 = vpack.c.b16 %v208, %v206
  %v321 = vpack.c.b16 %v209, %v207
  %v322 = vpack.c.b16 %v212, %v210
  %v323 = vpack.c.b16 %v213, %v211
  %v324 = vpack.c.b16 %v216, %v214
  %v325 = vpack.c.b16 %v217, %v215
  %v326 = vpack.c.b16 %v220, %v218
  %v327 = vpack.c.b16 %v221, %v219
  %v328 = vpack.c.b16 %v224, %v222
  %v329 = vpack.c.b16 %v225, %v223
  %v330 = vpack.c.b16 %v228, %v226
  %v331 = vpack.c.b16 %v229, %v227
  %v332 = vpack.c.b16 %v232, %v230
  %v333 = vpack.c.b16 %v233, %v231
  %v334 = vpack.c.b16 %v236, %v234
  %v335 = vpack.c.b16 %v237, %v235
  %v336 = vpack.c.b16 %v240, %v238
  %v337 = vpack.c.b16 %v241, %v239
  %v338 = vpack.c.b16 %v244, %v242
  %v339 = vpack.c.b16 %v245, %v243
  %v340 = vpack.c.b16 %v248, %v246
  %v341 = vpack.c.b16 %v249, %v247
  %v342 = vpack.c.b16 %v252, %v250
  %v343 = vpack.c.b16 %v253, %v251
  %v344 = vpack.c.b16 %v256, %v254
  %v345 = vpack.c.b16 %v257, %v255
  %v346 = vpack.c.b16 %v260, %v258
  %v347 = vpack.c.b16 %v261, %v259
  %v348 = vpack.c.b16 %v264, %v262
  %v349 = vpack.c.b16 %v265, %v263
  %v350 = vpack.c.b16 %v268, %v266
  %v351 = vpack.c.b16 %v269, %v267
  %v352 = vpack.c.b16 %v272, %v270
  %v353 = vpack.c.b16 %v273, %v271
  %v354 = vpack.c.b16 %v276, %v274
  %v355 = vpack.c.b16 %v277, %v275
  %v356 = vpack.c.b16 %v280, %v278
  %v357 = vpack.c.b16 %v281, %v279
  %v358 = vpack.c.b16 %v284, %v282
  %v359 = vpack.c.b16 %v285, %v283
  %v360 = vpack.c.b16 %v288, %v286
  %v361 = vpack.c.b16 %v289, %v287
  %v362 = vpack.c.b16 %v292, %v290
  %v363 = vpack.c.b16 %v293, %v291
  %v364 = vpack.c.b16 %v296, %v294
  %v365 = vpack.c.b16 %v297, %v295
  %v366 = vpack.c.b16 %v300, %v298
  %v367 = vpack.c.b16 %v301, %v299
  %v368 = vpack.c.b16 %v304, %v302
  %v369 = vpack.c.b16 %v305, %v303
  %v466 = vunpack.c.l.b16 %v78
  %v467 = vunpack.c.l.b16 %v79
  %v468 = vunpack.c.l.b16 %v80
  %v469 = vunpack.c.l.b16 %v81
  %v470 = vunpack.c.l.b16 %v82
  %v471 = vunpack.c.l.b16 %v83
  %v472 = vunpack.c.l.b16 %v84
  %v473 = vunpack.c.l.b16 %v85
  %v474 = vunpack.c.l.b16 %v86
  %v475 = vunpack.c.l.b16 %v87
  %v476 = vunpack.c.l.b16 %v88
  %v477 = vunpack.c.l.b16 %v89
  %v478 = vunpack.c.l.b16 %v90
  %v479 = vunpack.c.l.b16 %v91
  %v480 = vunpack.c.l.b16 %v92
  %v481 = vunpack.c.l.b16 %v93
  %v482 = vunpack.c.l.b16 %v94
  %v483 = vunpack.c.l.b16 %v95
  %v484 = vunpack.c.l.b16 %v96
  %v485 = vunpack.c.l.b16 %v97
  %v486 = vunpack.c.l.b16 %v98
  %v487 = vunpack.c.l.b16 %v99
  %v488 = vunpack.c.l.b16 %v100
  %v489 = vunpack.c.l.b16 %v101
  %v490 = vunpack.c.l.b16 %v102
  %v491 = vunpack.c.l.b16 %v103
  %v492 = vunpack.c.l.b16 %v104
  %v493 = vunpack.c.l.b16 %v105
  %v494 = vunpack.c.l.b16 %v106
  %v495 = vunpack.c.l.b16 %v107
  %v496 = vunpack.c.l.b16 %v108
  %v497 = vunpack.c.l.b16 %v109
  %v498 = vpack.c.b16 %v467, %v466
  %v499 = vpack.c.b16 %v469, %v468
  %v500 = vpack.c.b16 %v471, %v470
  %v501 = vpack.c.b16 %v473, %v472
  %v502 = vpack.c.b16 %v475, %v474
  %v503 = vpack.c.b16 %v477, %v476
  %v504 = vpack.c.b16 %v479, %v478
  %v505 = vpack.c.b16 %v481, %v480
  %v506 = vpack.c.b16 %v483, %v482
  %v507 = vpack.c.b16 %v485, %v484
  %v508 = vpack.c.b16 %v487, %v486
  %v509 = vpack.c.b16 %v489, %v488
  %v510 = vpack.c.b16 %v491, %v490
  %v511 = vpack.c.b16 %v493, %v492
  %v512 = vpack.c.b16 %v495, %v494
  %v513 = vpack.c.b16 %v497, %v496
  %530 = vmatpush.bf16.msra.mxu0 %v505
  %531 = vmatpush.bf16.msra.mxu0 %v504
  %532 = vmatpush.bf16.msra.mxu0 %v503
  %533 = vmatpush.bf16.msra.mxu0 %v502
  %534 = vmatpush.bf16.msra.mxu0 %v501
  %535 = vmatpush.bf16.msra.mxu0 %v500
  %536 = vmatpush.bf16.msra.mxu0 %v499
  %537 = vmatpush.bf16.msra.mxu0 %v498
  %538 = vmatmul.bf16.gmra.mxu0 %v306
  %v539 = vpop.f32.mrf.mxu0
  %v540 = vadd.f32 %v112, %v539
  %v541 = vpop.f32.mrf.mxu0
  %v542 = vadd.f32 %v112, %v541
  %543 = vmatmul.bf16.gmra.mxu0 %v308
  %v544 = vpop.f32.mrf.mxu0
  %v545 = vadd.f32 %v112, %v544
  %v546 = vpop.f32.mrf.mxu0
  %v547 = vadd.f32 %v112, %v546
  %548 = vmatmul.bf16.gmra.mxu0 %v310
  %v549 = vpop.f32.mrf.mxu0
  %v550 = vadd.f32 %v112, %v549
  %v551 = vpop.f32.mrf.mxu0
  %v552 = vadd.f32 %v112, %v551
  %553 = vmatmul.bf16.gmra.mxu0 %v312
  %v554 = vpop.f32.mrf.mxu0
  %v555 = vadd.f32 %v112, %v554
  %v556 = vpop.f32.mrf.mxu0
  %v557 = vadd.f32 %v112, %v556
  %558 = vmatmul.bf16.gmra.mxu0 %v314
  %v559 = vpop.f32.mrf.mxu0
  %v560 = vadd.f32 %v112, %v559
  %v561 = vpop.f32.mrf.mxu0
  %v562 = vadd.f32 %v112, %v561
  %563 = vmatmul.bf16.gmra.mxu0 %v316
  %v564 = vpop.f32.mrf.mxu0
  %v565 = vadd.f32 %v112, %v564
  %v566 = vpop.f32.mrf.mxu0
  %v567 = vadd.f32 %v112, %v566
  %568 = vmatmul.bf16.gmra.mxu0 %v318
  %v569 = vpop.f32.mrf.mxu0
  %v570 = vadd.f32 %v112, %v569
  %v571 = vpop.f32.mrf.mxu0
  %v572 = vadd.f32 %v112, %v571
  %573 = vmatmul.bf16.gmra.mxu0 %v320
  %v574 = vpop.f32.mrf.mxu0
  %v575 = vadd.f32 %v112, %v574
  %v576 = vpop.f32.mrf.mxu0
  %v577 = vadd.f32 %v112, %v576
  %578 = vmatmul.bf16.gmra.mxu0 %v322
  %v579 = vpop.f32.mrf.mxu0
  %v580 = vadd.f32 %v112, %v579
  %v581 = vpop.f32.mrf.mxu0
  %v582 = vadd.f32 %v112, %v581
  %583 = vmatmul.bf16.gmra.mxu0 %v324
  %v584 = vpop.f32.mrf.mxu0
  %v585 = vadd.f32 %v112, %v584
  %v586 = vpop.f32.mrf.mxu0
  %v587 = vadd.f32 %v112, %v586
  %588 = vmatmul.bf16.gmra.mxu0 %v326
  %v589 = vpop.f32.mrf.mxu0
  %v590 = vadd.f32 %v112, %v589
  %v591 = vpop.f32.mrf.mxu0
  %v592 = vadd.f32 %v112, %v591
  %593 = vmatmul.bf16.gmra.mxu0 %v328
  %v594 = vpop.f32.mrf.mxu0
  %v595 = vadd.f32 %v112, %v594
  %v596 = vpop.f32.mrf.mxu0
  %v597 = vadd.f32 %v112, %v596
  %598 = vmatmul.bf16.gmra.mxu0 %v330
  %v599 = vpop.f32.mrf.mxu0
  %v600 = vadd.f32 %v112, %v599
  %v601 = vpop.f32.mrf.mxu0
  %v602 = vadd.f32 %v112, %v601
  %603 = vmatmul.bf16.gmra.mxu0 %v332
  %v604 = vpop.f32.mrf.mxu0
  %v605 = vadd.f32 %v112, %v604
  %v606 = vpop.f32.mrf.mxu0
  %v607 = vadd.f32 %v112, %v606
  %608 = vmatmul.bf16.gmra.mxu0 %v334
  %v609 = vpop.f32.mrf.mxu0
  %v610 = vadd.f32 %v112, %v609
  %v611 = vpop.f32.mrf.mxu0
  %v612 = vadd.f32 %v112, %v611
  %613 = vmatmul.bf16.gmra.mxu0 %v336
  %v614 = vpop.f32.mrf.mxu0
  %v615 = vadd.f32 %v112, %v614
  %v616 = vpop.f32.mrf.mxu0
  %v617 = vadd.f32 %v112, %v616
  %618 = vmatmul.bf16.gmra.mxu0 %v338
  %v619 = vpop.f32.mrf.mxu0
  %v620 = vadd.f32 %v112, %v619
  %v621 = vpop.f32.mrf.mxu0
  %v622 = vadd.f32 %v112, %v621
  %623 = vmatmul.bf16.gmra.mxu0 %v340
  %v624 = vpop.f32.mrf.mxu0
  %v625 = vadd.f32 %v112, %v624
  %v626 = vpop.f32.mrf.mxu0
  %v627 = vadd.f32 %v112, %v626
  %628 = vmatmul.bf16.gmra.mxu0 %v342
  %v629 = vpop.f32.mrf.mxu0
  %v630 = vadd.f32 %v112, %v629
  %v631 = vpop.f32.mrf.mxu0
  %v632 = vadd.f32 %v112, %v631
  %633 = vmatmul.bf16.gmra.mxu0 %v344
  %v634 = vpop.f32.mrf.mxu0
  %v635 = vadd.f32 %v112, %v634
  %v636 = vpop.f32.mrf.mxu0
  %v637 = vadd.f32 %v112, %v636
  %638 = vmatmul.bf16.gmra.mxu0 %v346
  %v639 = vpop.f32.mrf.mxu0
  %v640 = vadd.f32 %v112, %v639
  %v641 = vpop.f32.mrf.mxu0
  %v642 = vadd.f32 %v112, %v641
  %643 = vmatmul.bf16.gmra.mxu0 %v348
  %v644 = vpop.f32.mrf.mxu0
  %v645 = vadd.f32 %v112, %v644
  %v646 = vpop.f32.mrf.mxu0
  %v647 = vadd.f32 %v112, %v646
  %648 = vmatmul.bf16.gmra.mxu0 %v350
  %v649 = vpop.f32.mrf.mxu0
  %v650 = vadd.f32 %v112, %v649
  %v651 = vpop.f32.mrf.mxu0
  %v652 = vadd.f32 %v112, %v651
  %653 = vmatmul.bf16.gmra.mxu0 %v352
  %v654 = vpop.f32.mrf.mxu0
  %v655 = vadd.f32 %v112, %v654
  %v656 = vpop.f32.mrf.mxu0
  %v657 = vadd.f32 %v112, %v656
  %658 = vmatmul.bf16.gmra.mxu0 %v354
  %v659 = vpop.f32.mrf.mxu0
  %v660 = vadd.f32 %v112, %v659
  %v661 = vpop.f32.mrf.mxu0
  %v662 = vadd.f32 %v112, %v661
  %663 = vmatmul.bf16.gmra.mxu0 %v356
  %v664 = vpop.f32.mrf.mxu0
  %v665 = vadd.f32 %v112, %v664
  %v666 = vpop.f32.mrf.mxu0
  %v667 = vadd.f32 %v112, %v666
  %668 = vmatmul.bf16.gmra.mxu0 %v358
  %v669 = vpop.f32.mrf.mxu0
  %v670 = vadd.f32 %v112, %v669
  %v671 = vpop.f32.mrf.mxu0
  %v672 = vadd.f32 %v112, %v671
  %673 = vmatmul.bf16.gmra.mxu0 %v360
  %v674 = vpop.f32.mrf.mxu0
  %v675 = vadd.f32 %v112, %v674
  %v676 = vpop.f32.mrf.mxu0
  %v677 = vadd.f32 %v112, %v676
  %678 = vmatmul.bf16.gmra.mxu0 %v362
  %v679 = vpop.f32.mrf.mxu0
  %v680 = vadd.f32 %v112, %v679
  %v681 = vpop.f32.mrf.mxu0
  %v682 = vadd.f32 %v112, %v681
  %683 = vmatmul.bf16.gmra.mxu0 %v364
  %v684 = vpop.f32.mrf.mxu0
  %v685 = vadd.f32 %v112, %v684
  %v686 = vpop.f32.mrf.mxu0
  %v687 = vadd.f32 %v112, %v686
  %688 = vmatmul.bf16.gmra.mxu0 %v366
  %v689 = vpop.f32.mrf.mxu0
  %v690 = vadd.f32 %v112, %v689
  %v691 = vpop.f32.mrf.mxu0
  %v692 = vadd.f32 %v112, %v691
  %693 = vmatmul.bf16.gmra.mxu0 %v368
  %v694 = vpop.f32.mrf.mxu0
  %v695 = vadd.f32 %v112, %v694
  %v696 = vpop.f32.mrf.mxu0
  %v697 = vadd.f32 %v112, %v696
  %698 = vdwg.mxu0
  %699 = vmatpush.bf16.msra.mxu0 %v513
  %700 = vmatpush.bf16.msra.mxu0 %v512
  %701 = vmatpush.bf16.msra.mxu0 %v511
  %702 = vmatpush.bf16.msra.mxu0 %v510
  %703 = vmatpush.bf16.msra.mxu0 %v509
  %704 = vmatpush.bf16.msra.mxu0 %v508
  %705 = vmatpush.bf16.msra.mxu0 %v507
  %706 = vmatpush.bf16.msra.mxu0 %v506
  %707 = vmatmul.bf16.gmra.mxu0 %v307
  %v708 = vpop.f32.mrf.mxu0
  %v709 = vadd.f32 %v540, %v708
  %v710 = vpop.f32.mrf.mxu0
  %v711 = vadd.f32 %v542, %v710
  %712 = vmatmul.bf16.gmra.mxu0 %v309
  %v713 = vpop.f32.mrf.mxu0
  %v714 = vadd.f32 %v545, %v713
  %v715 = vpop.f32.mrf.mxu0
  %v716 = vadd.f32 %v547, %v715
  %717 = vmatmul.bf16.gmra.mxu0 %v311
  %v718 = vpop.f32.mrf.mxu0
  %v719 = vadd.f32 %v550, %v718
  %v720 = vpop.f32.mrf.mxu0
  %v721 = vadd.f32 %v552, %v720
  %722 = vmatmul.bf16.gmra.mxu0 %v313
  %v723 = vpop.f32.mrf.mxu0
  %v724 = vadd.f32 %v555, %v723
  %v725 = vpop.f32.mrf.mxu0
  %v726 = vadd.f32 %v557, %v725
  %727 = vmatmul.bf16.gmra.mxu0 %v315
  %v728 = vpop.f32.mrf.mxu0
  %v729 = vadd.f32 %v560, %v728
  %v730 = vpop.f32.mrf.mxu0
  %v731 = vadd.f32 %v562, %v730
  %732 = vmatmul.bf16.gmra.mxu0 %v317
  %v733 = vpop.f32.mrf.mxu0
  %v734 = vadd.f32 %v565, %v733
  %v735 = vpop.f32.mrf.mxu0
  %v736 = vadd.f32 %v567, %v735
  %737 = vmatmul.bf16.gmra.mxu0 %v319
  %v738 = vpop.f32.mrf.mxu0
  %v739 = vadd.f32 %v570, %v738
  %v740 = vpop.f32.mrf.mxu0
  %v741 = vadd.f32 %v572, %v740
  %742 = vmatmul.bf16.gmra.mxu0 %v321
  %v743 = vpop.f32.mrf.mxu0
  %v744 = vadd.f32 %v575, %v743
  %v745 = vpop.f32.mrf.mxu0
  %v746 = vadd.f32 %v577, %v745
  %747 = vmatmul.bf16.gmra.mxu0 %v323
  %v748 = vpop.f32.mrf.mxu0
  %v749 = vadd.f32 %v580, %v748
  %v750 = vpop.f32.mrf.mxu0
  %v751 = vadd.f32 %v582, %v750
  %752 = vmatmul.bf16.gmra.mxu0 %v325
  %v753 = vpop.f32.mrf.mxu0
  %v754 = vadd.f32 %v585, %v753
  %v755 = vpop.f32.mrf.mxu0
  %v756 = vadd.f32 %v587, %v755
  %757 = vmatmul.bf16.gmra.mxu0 %v327
  %v758 = vpop.f32.mrf.mxu0
  %v759 = vadd.f32 %v590, %v758
  %v760 = vpop.f32.mrf.mxu0
  %v761 = vadd.f32 %v592, %v760
  %762 = vmatmul.bf16.gmra.mxu0 %v329
  %v763 = vpop.f32.mrf.mxu0
  %v764 = vadd.f32 %v595, %v763
  %v765 = vpop.f32.mrf.mxu0
  %v766 = vadd.f32 %v597, %v765
  %767 = vmatmul.bf16.gmra.mxu0 %v331
  %v768 = vpop.f32.mrf.mxu0
  %v769 = vadd.f32 %v600, %v768
  %v770 = vpop.f32.mrf.mxu0
  %v771 = vadd.f32 %v602, %v770
  %772 = vmatmul.bf16.gmra.mxu0 %v333
  %v773 = vpop.f32.mrf.mxu0
  %v774 = vadd.f32 %v605, %v773
  %v775 = vpop.f32.mrf.mxu0
  %v776 = vadd.f32 %v607, %v775
  %777 = vmatmul.bf16.gmra.mxu0 %v335
  %v778 = vpop.f32.mrf.mxu0
  %v779 = vadd.f32 %v610, %v778
  %v780 = vpop.f32.mrf.mxu0
  %v781 = vadd.f32 %v612, %v780
  %782 = vmatmul.bf16.gmra.mxu0 %v337
  %v783 = vpop.f32.mrf.mxu0
  %v784 = vadd.f32 %v615, %v783
  %v785 = vpop.f32.mrf.mxu0
  %v786 = vadd.f32 %v617, %v785
  %787 = vmatmul.bf16.gmra.mxu0 %v339
  %v788 = vpop.f32.mrf.mxu0
  %v789 = vadd.f32 %v620, %v788
  %v790 = vpop.f32.mrf.mxu0
  %v791 = vadd.f32 %v622, %v790
  %792 = vmatmul.bf16.gmra.mxu0 %v341
  %v793 = vpop.f32.mrf.mxu0
  %v794 = vadd.f32 %v625, %v793
  %v795 = vpop.f32.mrf.mxu0
  %v796 = vadd.f32 %v627, %v795
  %797 = vmatmul.bf16.gmra.mxu0 %v343
  %v798 = vpop.f32.mrf.mxu0
  %v799 = vadd.f32 %v630, %v798
  %v800 = vpop.f32.mrf.mxu0
  %v801 = vadd.f32 %v632, %v800
  %802 = vmatmul.bf16.gmra.mxu0 %v345
  %v803 = vpop.f32.mrf.mxu0
  %v804 = vadd.f32 %v635, %v803
  %v805 = vpop.f32.mrf.mxu0
  %v806 = vadd.f32 %v637, %v805
  %807 = vmatmul.bf16.gmra.mxu0 %v347
  %v808 = vpop.f32.mrf.mxu0
  %v809 = vadd.f32 %v640, %v808
  %v810 = vpop.f32.mrf.mxu0
  %v811 = vadd.f32 %v642, %v810
  %812 = vmatmul.bf16.gmra.mxu0 %v349
  %v813 = vpop.f32.mrf.mxu0
  %v814 = vadd.f32 %v645, %v813
  %v815 = vpop.f32.mrf.mxu0
  %v816 = vadd.f32 %v647, %v815
  %817 = vmatmul.bf16.gmra.mxu0 %v351
  %v818 = vpop.f32.mrf.mxu0
  %v819 = vadd.f32 %v650, %v818
  %v820 = vpop.f32.mrf.mxu0
  %v821 = vadd.f32 %v652, %v820
  %822 = vmatmul.bf16.gmra.mxu0 %v353
  %v823 = vpop.f32.mrf.mxu0
  %v824 = vadd.f32 %v655, %v823
  %v825 = vpop.f32.mrf.mxu0
  %v826 = vadd.f32 %v657, %v825
  %827 = vmatmul.bf16.gmra.mxu0 %v355
  %v828 = vpop.f32.mrf.mxu0
  %v829 = vadd.f32 %v660, %v828
  %v830 = vpop.f32.mrf.mxu0
  %v831 = vadd.f32 %v662, %v830
  %832 = vmatmul.bf16.gmra.mxu0 %v357
  %v833 = vpop.f32.mrf.mxu0
  %v834 = vadd.f32 %v665, %v833
  %v835 = vpop.f32.mrf.mxu0
  %v836 = vadd.f32 %v667, %v835
  %837 = vmatmul.bf16.gmra.mxu0 %v359
  %v838 = vpop.f32.mrf.mxu0
  %v839 = vadd.f32 %v670, %v838
  %v840 = vpop.f32.mrf.mxu0
  %v841 = vadd.f32 %v672, %v840
  %842 = vmatmul.bf16.gmra.mxu0 %v361
  %v843 = vpop.f32.mrf.mxu0
  %v844 = vadd.f32 %v675, %v843
  %v845 = vpop.f32.mrf.mxu0
  %v846 = vadd.f32 %v677, %v845
  %847 = vmatmul.bf16.gmra.mxu0 %v363
  %v848 = vpop.f32.mrf.mxu0
  %v849 = vadd.f32 %v680, %v848
  %v850 = vpop.f32.mrf.mxu0
  %v851 = vadd.f32 %v682, %v850
  %852 = vmatmul.bf16.gmra.mxu0 %v365
  %v853 = vpop.f32.mrf.mxu0
  %v854 = vadd.f32 %v685, %v853
  %v855 = vpop.f32.mrf.mxu0
  %v856 = vadd.f32 %v687, %v855
  %857 = vmatmul.bf16.gmra.mxu0 %v367
  %v858 = vpop.f32.mrf.mxu0
  %v859 = vadd.f32 %v690, %v858
  %v860 = vpop.f32.mrf.mxu0
  %v861 = vadd.f32 %v692, %v860
  %862 = vmatmul.bf16.gmra.mxu0 %v369
  %v863 = vpop.f32.mrf.mxu0
  %v864 = vadd.f32 %v695, %v863
  %v865 = vpop.f32.mrf.mxu0
  %v866 = vadd.f32 %v697, %v865
  %867 = vdwg.mxu0
  %v868 = vmax.f32 %v709, 0.0
  %v869 = vmax.f32 %v711, 0.0
  %v870 = vmax.f32 %v714, 0.0
  %v871 = vmax.f32 %v716, 0.0
  %v872 = vmax.f32 %v719, 0.0
  %v873 = vmax.f32 %v721, 0.0
  %v874 = vmax.f32 %v724, 0.0
  %v875 = vmax.f32 %v726, 0.0
  %v876 = vmax.f32 %v729, 0.0
  %v877 = vmax.f32 %v731, 0.0
  %v878 = vmax.f32 %v734, 0.0
  %v879 = vmax.f32 %v736, 0.0
  %v880 = vmax.f32 %v739, 0.0
  %v881 = vmax.f32 %v741, 0.0
  %v882 = vmax.f32 %v744, 0.0
  %v883 = vmax.f32 %v746, 0.0
  %v884 = vmax.f32 %v749, 0.0
  %v885 = vmax.f32 %v751, 0.0
  %v886 = vmax.f32 %v754, 0.0
  %v887 = vmax.f32 %v756, 0.0
  %v888 = vmax.f32 %v759, 0.0
  %v889 = vmax.f32 %v761, 0.0
  %v890 = vmax.f32 %v764, 0.0
  %v891 = vmax.f32 %v766, 0.0
  %v892 = vmax.f32 %v769, 0.0
  %v893 = vmax.f32 %v771, 0.0
  %v894 = vmax.f32 %v774, 0.0
  %v895 = vmax.f32 %v776, 0.0
  %v896 = vmax.f32 %v779, 0.0
  %v897 = vmax.f32 %v781, 0.0
  %v898 = vmax.f32 %v784, 0.0
  %v899 = vmax.f32 %v786, 0.0
  %v900 = vmax.f32 %v789, 0.0
  %v901 = vmax.f32 %v791, 0.0
  %v902 = vmax.f32 %v794, 0.0
  %v903 = vmax.f32 %v796, 0.0
  %v904 = vmax.f32 %v799, 0.0
  %v905 = vmax.f32 %v801, 0.0
  %v906 = vmax.f32 %v804, 0.0
  %v907 = vmax.f32 %v806, 0.0
  %v908 = vmax.f32 %v809, 0.0
  %v909 = vmax.f32 %v811, 0.0
  %v910 = vmax.f32 %v814, 0.0
  %v911 = vmax.f32 %v816, 0.0
  %v912 = vmax.f32 %v819, 0.0
  %v913 = vmax.f32 %v821, 0.0
  %v914 = vmax.f32 %v824, 0.0
  %v915 = vmax.f32 %v826, 0.0
  %v916 = vmax.f32 %v829, 0.0
  %v917 = vmax.f32 %v831, 0.0
  %v918 = vmax.f32 %v834, 0.0
  %v919 = vmax.f32 %v836, 0.0
  %v920 = vmax.f32 %v839, 0.0
  %v921 = vmax.f32 %v841, 0.0
  %v922 = vmax.f32 %v844, 0.0
  %v923 = vmax.f32 %v846, 0.0
  %v924 = vmax.f32 %v849, 0.0
  %v925 = vmax.f32 %v851, 0.0
  %v926 = vmax.f32 %v854, 0.0
  %v927 = vmax.f32 %v856, 0.0
  %v928 = vmax.f32 %v859, 0.0
  %v929 = vmax.f32 %v861, 0.0
  %v930 = vmax.f32 %v864, 0.0
  %v931 = vmax.f32 %v866, 0.0
  %v932 = vpack.c.bf16 %v868, %v868
  %v933 = vpack.c.bf16 %v869, %v869
  %v934 = vpack.c.bf16 %v870, %v870
  %v935 = vpack.c.bf16 %v871, %v871
  %v936 = vpack.c.bf16 %v872, %v872
  %v937 = vpack.c.bf16 %v873, %v873
  %v938 = vpack.c.bf16 %v874, %v874
  %v939 = vpack.c.bf16 %v875, %v875
  %v940 = vpack.c.bf16 %v876, %v876
  %v941 = vpack.c.bf16 %v877, %v877
  %v942 = vpack.c.bf16 %v878, %v878
  %v943 = vpack.c.bf16 %v879, %v879
  %v944 = vpack.c.bf16 %v880, %v880
  %v945 = vpack.c.bf16 %v881, %v881
  %v946 = vpack.c.bf16 %v882, %v882
  %v947 = vpack.c.bf16 %v883, %v883
  %v948 = vpack.c.bf16 %v884, %v884
  %v949 = vpack.c.bf16 %v885, %v885
  %v950 = vpack.c.bf16 %v886, %v886
  %v951 = vpack.c.bf16 %v887, %v887
  %v952 = vpack.c.bf16 %v888, %v888
  %v953 = vpack.c.bf16 %v889, %v889
  %v954 = vpack.c.bf16 %v890, %v890
  %v955 = vpack.c.bf16 %v891, %v891
  %v956 = vpack.c.bf16 %v892, %v892
  %v957 = vpack.c.bf16 %v893, %v893
  %v958 = vpack.c.bf16 %v894, %v894
  %v959 = vpack.c.bf16 %v895, %v895
  %v960 = vpack.c.bf16 %v896, %v896
  %v961 = vpack.c.bf16 %v897, %v897
  %v962 = vpack.c.bf16 %v898, %v898
  %v963 = vpack.c.bf16 %v899, %v899
  %v964 = vpack.c.bf16 %v900, %v900
  %v965 = vpack.c.bf16 %v901, %v901
  %v966 = vpack.c.bf16 %v902, %v902
  %v967 = vpack.c.bf16 %v903, %v903
  %v968 = vpack.c.bf16 %v904, %v904
  %v969 = vpack.c.bf16 %v905, %v905
  %v970 = vpack.c.bf16 %v906, %v906
  %v971 = vpack.c.bf16 %v907, %v907
  %v972 = vpack.c.bf16 %v908, %v908
  %v973 = vpack.c.bf16 %v909, %v909
  %v974 = vpack.c.bf16 %v910, %v910
  %v975 = vpack.c.bf16 %v911, %v911
  %v976 = vpack.c.bf16 %v912, %v912
  %v977 = vpack.c.bf16 %v913, %v913
  %v978 = vpack.c.bf16 %v914, %v914
  %v979 = vpack.c.bf16 %v915, %v915
  %v980 = vpack.c.bf16 %v916, %v916
  %v981 = vpack.c.bf16 %v917, %v917
  %v982 = vpack.c.bf16 %v918, %v918
  %v983 = vpack.c.bf16 %v919, %v919
  %v984 = vpack.c.bf16 %v920, %v920
  %v985 = vpack.c.bf16 %v921, %v921
  %v986 = vpack.c.bf16 %v922, %v922
  %v987 = vpack.c.bf16 %v923, %v923
  %v988 = vpack.c.bf16 %v924, %v924
  %v989 = vpack.c.bf16 %v925, %v925
  %v990 = vpack.c.bf16 %v926, %v926
  %v991 = vpack.c.bf16 %v927, %v927
  %v992 = vpack.c.bf16 %v928, %v928
  %v993 = vpack.c.bf16 %v929, %v929
  %v994 = vpack.c.bf16 %v930, %v930
  %v995 = vpack.c.bf16 %v931, %v931
  %996 = vst [vmem:[%s3] sm:$0xf] %v932
  %997 = vst [vmem:[%s3 + $0x4] sm:$0xf] %v933
  %998 = vst [vmem:[%s3 + $0x8] sm:$0xf] %v934
  %999 = vst [vmem:[%s3 + $0xc] sm:$0xf] %v935
  %1000 = vst [vmem:[%s3 + $0x10] sm:$0xf] %v936
  %1001 = vst [vmem:[%s3 + $0x14] sm:$0xf] %v937
  %1002 = vst [vmem:[%s3 + $0x18] sm:$0xf] %v938
  %1003 = vst [vmem:[%s3 + $0x1c] sm:$0xf] %v939
  %1004 = vst [vmem:[%s3 + $0x20] sm:$0xf] %v940
  %1005 = vst [vmem:[%s3 + $0x24] sm:$0xf] %v941
  %1006 = vst [vmem:[%s3 + $0x28] sm:$0xf] %v942
  %1007 = vst [vmem:[%s3 + $0x2c] sm:$0xf] %v943
  %1008 = vst [vmem:[%s3 + $0x30] sm:$0xf] %v944
  %1009 = vst [vmem:[%s3 + $0x34] sm:$0xf] %v945
  %1010 = vst [vmem:[%s3 + $0x38] sm:$0xf] %v946
  %1011 = vst [vmem:[%s3 + $0x3c] sm:$0xf] %v947
  %1012 = vst [vmem:[%s3 + $0x40] sm:$0xf] %v948
  %1013 = vst [vmem:[%s3 + $0x44] sm:$0xf] %v949
  %1014 = vst [vmem:[%s3 + $0x48] sm:$0xf] %v950
  %1015 = vst [vmem:[%s3 + $0x4c] sm:$0xf] %v951
  %1016 = vst [vmem:[%s3 + $0x50] sm:$0xf] %v952
  %1017 = vst [vmem:[%s3 + $0x54] sm:$0xf] %v953
  %1018 = vst [vmem:[%s3 + $0x58] sm:$0xf] %v954
  %1019 = vst [vmem:[%s3 + $0x5c] sm:$0xf] %v955
  %1020 = vst [vmem:[%s3 + $0x60] sm:$0xf] %v956
  %1021 = vst [vmem:[%s3 + $0x64] sm:$0xf] %v957
  %1022 = vst [vmem:[%s3 + $0x68] sm:$0xf] %v958
  %1023 = vst [vmem:[%s3 + $0x6c] sm:$0xf] %v959
  %1024 = vst [vmem:[%s3 + $0x70] sm:$0xf] %v960
  %1025 = vst [vmem:[%s3 + $0x74] sm:$0xf] %v961
  %1026 = vst [vmem:[%s3 + $0x78] sm:$0xf] %v962
  %1027 = vst [vmem:[%s3 + $0x7c] sm:$0xf] %v963
  %1028 = vst [vmem:[%s3 + $0x80] sm:$0xf] %v964
  %1029 = vst [vmem:[%s3 + $0x84] sm:$0xf] %v965
  %1030 = vst [vmem:[%s3 + $0x88] sm:$0xf] %v966
  %1031 = vst [vmem:[%s3 + $0x8c] sm:$0xf] %v967
  %1032 = vst [vmem:[%s3 + $0x90] sm:$0xf] %v968
  %1033 = vst [vmem:[%s3 + $0x94] sm:$0xf] %v969
  %1034 = vst [vmem:[%s3 + $0x98] sm:$0xf] %v970
  %1035 = vst [vmem:[%s3 + $0x9c] sm:$0xf] %v971
  %1036 = vst [vmem:[%s3 + $0xa0] sm:$0xf] %v972
  %1037 = vst [vmem:[%s3 + $0xa4] sm:$0xf] %v973
  %1038 = vst [vmem:[%s3 + $0xa8] sm:$0xf] %v974
  %1039 = vst [vmem:[%s3 + $0xac] sm:$0xf] %v975
  %1040 = vst [vmem:[%s3 + $0xb0] sm:$0xf] %v976
  %1041 = vst [vmem:[%s3 + $0xb4] sm:$0xf] %v977
  %1042 = vst [vmem:[%s3 + $0xb8] sm:$0xf] %v978
  %1043 = vst [vmem:[%s3 + $0xbc] sm:$0xf] %v979
  %1044 = vst [vmem:[%s3 + $0xc0] sm:$0xf] %v980
  %1045 = vst [vmem:[%s3 + $0xc4] sm:$0xf] %v981
  %1046 = vst [vmem:[%s3 + $0xc8] sm:$0xf] %v982
  %1047 = vst [vmem:[%s3 + $0xcc] sm:$0xf] %v983
  %1048 = vst [vmem:[%s3 + $0xd0] sm:$0xf] %v984
  %1049 = vst [vmem:[%s3 + $0xd4] sm:$0xf] %v985
  %1050 = vst [vmem:[%s3 + $0xd8] sm:$0xf] %v986
  %1051 = vst [vmem:[%s3 + $0xdc] sm:$0xf] %v987
  %1052 = vst [vmem:[%s3 + $0xe0] sm:$0xf] %v988
  %1053 = vst [vmem:[%s3 + $0xe4] sm:$0xf] %v989
  %1054 = vst [vmem:[%s3 + $0xe8] sm:$0xf] %v990
  %1055 = vst [vmem:[%s3 + $0xec] sm:$0xf] %v991
  %1056 = vst [vmem:[%s3 + $0xf0] sm:$0xf] %v992
  %1057 = vst [vmem:[%s3 + $0xf4] sm:$0xf] %v993
  %1058 = vst [vmem:[%s3 + $0xf8] sm:$0xf] %v994
  %1059 = vst [vmem:[%s3 + $0xfc] sm:$0xf] %v995
  // Predicated region
  $region14: #{resnext_forward.9} parent=0 // pred_check
    _
  $region15: #{resnext_forward.9} parent=0 // pred_check_branch
    %1061 = sbr.rel (0) target = $region17
  $region16: #{resnext_forward.9} parent=0 // pred_region
    _
  $region17: #{resnext_forward.9} parent=0 // pred_fallthru
    _
  // Predicated region
  $region18: #{resnext_forward.9} parent=0 // pred_check
    _
  $region19: #{resnext_forward.9} parent=0 // pred_check_branch
    %1063 = sbr.rel (0) target = $region21
  $region20: #{resnext_forward.9} parent=0 // pred_region
    _
  $region21: #{resnext_forward.9} parent=0 // pred_fallthru
    _

// kernel: resnext_forward.13
$region0: #{resnext_forward.13}
  #allocation0 [shape = 'u32[]', space=smem, size = 0x4, offset = 0x4, fixed_abs, tag = 'smem constant byte address 0x4 - core index']
  #allocation1 [shape = 'u32[72,128]{1,0:T(1,128)}', space=vmem, size = 0x9000, scoped, tag = 'internal scratch']
  %s0 = inlined_call_operand.vmem [shape: bf16[128,128], index: 0, kind: input, shape index: {}]
  %s1 = inlined_call_operand.vmem [shape: bf16[128,128], index: 1, kind: input, shape index: {}]
  %s2 = inlined_call_operand.vmem [shape: f32[1,128], index: 2, kind: input, shape index: {}]
  %s3 = inlined_call_operand.vmem [shape: bf16[128,128], index: 3, kind: input, shape index: {}]
  %s4 = inlined_call_operand.vmem [shape: bf16[128,128], index: 4, kind: input, shape index: {}]
  %s5 = inlined_call_operand.vmem [shape: f32[1,128], index: 5, kind: input, shape index: {}]
  %s6 = inlined_call_operand.vmem [shape: bf16[128,128], index: 6, kind: output, shape index: {}]
  %s7 = sld [smem:[#allocation0]]
  $region34: #{resnext_forward.13} parent=0
    _
  %s9 = ssub.s32 1, %s7
  %s10 = scalar_select 0, %s9, %s7
  // Predicated region
  $region2: #{resnext_forward.13} parent=0 // pred_check
    _
  $region3: #{resnext_forward.13} parent=0 // pred_check_branch
    %12 = sbr.rel (0) target = $region5
  $region4: #{resnext_forward.13} parent=0 // pred_region
    _
  $region5: #{resnext_forward.13} parent=0 // pred_fallthru
    _
  // Predicated region
  $region6: #{resnext_forward.13} parent=0 // pred_check
    _
  $region7: #{resnext_forward.13} parent=0 // pred_check_branch
    %14 = sbr.rel (0) target = $region9
  $region8: #{resnext_forward.13} parent=0 // pred_region
    _
  $region9: #{resnext_forward.13} parent=0 // pred_fallthru
    _
  // Predicated region
  $region10: #{resnext_forward.13} parent=0 // pred_check
    _
  $region11: #{resnext_forward.13} parent=0 // pred_check_branch
    %16 = sbr.rel (0) target = $region13
  $region12: #{resnext_forward.13} parent=0 // pred_region
    _
  $region13: #{resnext_forward.13} parent=0 // pred_fallthru
    _
  // Predicated region
  $region14: #{resnext_forward.13} parent=0 // pred_check
    _
  $region15: #{resnext_forward.13} parent=0 // pred_check_branch
    %18 = sbr.rel (0) target = $region17
  $region16: #{resnext_forward.13} parent=0 // pred_region
    _
  $region17: #{resnext_forward.13} parent=0 // pred_fallthru
    _
  // Predicated region
  $region18: #{resnext_forward.13} parent=0 // pred_check
    _
  $region19: #{resnext_forward.13} parent=0 // pred_check_branch
    %20 = sbr.rel (0) target = $region21
  $region20: #{resnext_forward.13} parent=0 // pred_region
    _
  $region21: #{resnext_forward.13} parent=0 // pred_fallthru
    _
  // Predicated region
  $region22: #{resnext_forward.13} parent=0 // pred_check
    _
  $region23: #{resnext_forward.13} parent=0 // pred_check_branch
    %22 = sbr.rel (0) target = $region25
  $region24: #{resnext_forward.13} parent=0 // pred_region
    _
  $region25: #{resnext_forward.13} parent=0 // pred_fallthru
    _
  %v23 = vld [vmem:[%s0] sm:$0xf]
  %v24 = vld [vmem:[%s0 + $0x4] sm:$0xf]
  %v25 = vld [vmem:[%s0 + $0x8] sm:$0xf]
  %v26 = vld [vmem:[%s0 + $0xc] sm:$0xf]
  %v27 = vld [vmem:[%s0 + $0x10] sm:$0xf]
  %v28 = vld [vmem:[%s0 + $0x14] sm:$0xf]
  %v29 = vld [vmem:[%s0 + $0x18] sm:$0xf]
  %v30 = vld [vmem:[%s0 + $0x1c] sm:$0xf]
  %v31 = vld [vmem:[%s0 + $0x20] sm:$0xf]
  %v32 = vld [vmem:[%s0 + $0x24] sm:$0xf]
  %v33 = vld [vmem:[%s0 + $0x28] sm:$0xf]
  %v34 = vld [vmem:[%s0 + $0x2c] sm:$0xf]
  %v35 = vld [vmem:[%s0 + $0x30] sm:$0xf]
  %v36 = vld [vmem:[%s0 + $0x34] sm:$0xf]
  %v37 = vld [vmem:[%s0 + $0x38] sm:$0xf]
  %v38 = vld [vmem:[%s0 + $0x3c] sm:$0xf]
  %v39 = vld [vmem:[%s1] sm:$0xf]
  %v40 = vld [vmem:[%s1 + $0x4] sm:$0xf]
  %v41 = vld [vmem:[%s1 + $0x8] sm:$0xf]
  %v42 = vld [vmem:[%s1 + $0xc] sm:$0xf]
  %v43 = vld [vmem:[%s1 + $0x10] sm:$0xf]
  %v44 = vld [vmem:[%s1 + $0x14] sm:$0xf]
  %v45 = vld [vmem:[%s1 + $0x18] sm:$0xf]
  %v46 = vld [vmem:[%s1 + $0x1c] sm:$0xf]
  %v47 = vld [vmem:[%s1 + $0x20] sm:$0xf]
  %v48 = vld [vmem:[%s1 + $0x24] sm:$0xf]
  %v49 = vld [vmem:[%s1 + $0x28] sm:$0xf]
  %v50 = vld [vmem:[%s1 + $0x2c] sm:$0xf]
  %v51 = vld [vmem:[%s1 + $0x30] sm:$0xf]
  %v52 = vld [vmem:[%s1 + $0x34] sm:$0xf]
  %v53 = vld [vmem:[%s1 + $0x38] sm:$0xf]
  %v54 = vld [vmem:[%s1 + $0x3c] sm:$0xf]
  %v55 = vld [vmem:[%s3] sm:$0xf]
  %v56 = vld [vmem:[%s3 + $0x4] sm:$0xf]
  %v57 = vld [vmem:[%s3 + $0x8] sm:$0xf]
  %v58 = vld [vmem:[%s3 + $0xc] sm:$0xf]
  %v59 = vld [vmem:[%s3 + $0x10] sm:$0xf]
  %v60 = vld [vmem:[%s3 + $0x14] sm:$0xf]
  %v61 = vld [vmem:[%s3 + $0x18] sm:$0xf]
  %v62 = vld [vmem:[%s3 + $0x1c] sm:$0xf]
  %v63 = vld [vmem:[%s3 + $0x20] sm:$0xf]
  %v64 = vld [vmem:[%s3 + $0x24] sm:$0xf]
  %v65 = vld [vmem:[%s3 + $0x28] sm:$0xf]
  %v66 = vld [vmem:[%s3 + $0x2c] sm:$0xf]
  %v67 = vld [vmem:[%s3 + $0x30] sm:$0xf]
  %v68 = vld [vmem:[%s3 + $0x34] sm:$0xf]
  %v69 = vld [vmem:[%s3 + $0x38] sm:$0xf]
  %v70 = vld [vmem:[%s3 + $0x3c] sm:$0xf]
  %v71 = vld [vmem:[%s4] sm:$0xf]
  %v72 = vld [vmem:[%s4 + $0x4] sm:$0xf]
  %v73 = vld [vmem:[%s4 + $0x8] sm:$0xf]
  %v74 = vld [vmem:[%s4 + $0xc] sm:$0xf]
  %v75 = vld [vmem:[%s4 + $0x10] sm:$0xf]
  %v76 = vld [vmem:[%s4 + $0x14] sm:$0xf]
  %v77 = vld [vmem:[%s4 + $0x18] sm:$0xf]
  %v78 = vld [vmem:[%s4 + $0x1c] sm:$0xf]
  %v79 = vld [vmem:[%s4 + $0x20] sm:$0xf]
  %v80 = vld [vmem:[%s4 + $0x24] sm:$0xf]
  %v81 = vld [vmem:[%s4 + $0x28] sm:$0xf]
  %v82 = vld [vmem:[%s4 + $0x2c] sm:$0xf]
  %v83 = vld [vmem:[%s4 + $0x30] sm:$0xf]
  %v84 = vld [vmem:[%s4 + $0x34] sm:$0xf]
  %v85 = vld [vmem:[%s4 + $0x38] sm:$0xf]
  %v86 = vld [vmem:[%s4 + $0x3c] sm:$0xf]
  %v103 = vunpack.c.l.b16 %v55
  %v104 = vunpack.c.l.b16 %v56
  %v105 = vunpack.c.l.b16 %v57
  %v106 = vunpack.c.l.b16 %v58
  %v107 = vunpack.c.l.b16 %v59
  %v108 = vunpack.c.l.b16 %v60
  %v109 = vunpack.c.l.b16 %v61
  %v110 = vunpack.c.l.b16 %v62
  %v111 = vunpack.c.l.b16 %v63
  %v112 = vunpack.c.l.b16 %v64
  %v113 = vunpack.c.l.b16 %v65
  %v114 = vunpack.c.l.b16 %v66
  %v115 = vunpack.c.l.b16 %v67
  %v116 = vunpack.c.l.b16 %v68
  %v117 = vunpack.c.l.b16 %v69
  %v118 = vunpack.c.l.b16 %v70
  %v119 = vpack.c.b16 %v104, %v103
  %v120 = vpack.c.b16 %v106, %v105
  %v121 = vpack.c.b16 %v108, %v107
  %v122 = vpack.c.b16 %v110, %v109
  %v123 = vpack.c.b16 %v112, %v111
  %v124 = vpack.c.b16 %v114, %v113
  %v125 = vpack.c.b16 %v116, %v115
  %v126 = vpack.c.b16 %v118, %v117
  %v151 = vunpack.c.l.b16 %v71
  %v152 = vunpack.c.l.b16 %v72
  %v153 = vunpack.c.l.b16 %v73
  %v154 = vunpack.c.l.b16 %v74
  %v155 = vunpack.c.l.b16 %v75
  %v156 = vunpack.c.l.b16 %v76
  %v157 = vunpack.c.l.b16 %v77
  %v158 = vunpack.c.l.b16 %v78
  %v159 = vunpack.c.l.b16 %v79
  %v160 = vunpack.c.l.b16 %v80
  %v161 = vunpack.c.l.b16 %v81
  %v162 = vunpack.c.l.b16 %v82
  %v163 = vunpack.c.l.b16 %v83
  %v164 = vunpack.c.l.b16 %v84
  %v165 = vunpack.c.l.b16 %v85
  %v166 = vunpack.c.l.b16 %v86
  %v167 = vpack.c.b16 %v152, %v151
  %v168 = vpack.c.b16 %v154, %v153
  %v169 = vpack.c.b16 %v156, %v155
  %v170 = vpack.c.b16 %v158, %v157
  %v171 = vpack.c.b16 %v160, %v159
  %v172 = vpack.c.b16 %v162, %v161
  %v173 = vpack.c.b16 %v164, %v163
  %v174 = vpack.c.b16 %v166, %v165
  %183 = vmatpush.bf16.msra.mxu0 %v174
  %184 = vmatpush.bf16.msra.mxu0 %v173
  %185 = vmatpush.bf16.msra.mxu0 %v172
  %186 = vmatpush.bf16.msra.mxu0 %v171
  %187 = vmatpush.bf16.msra.mxu0 %v170
  %188 = vmatpush.bf16.msra.mxu0 %v169
  %189 = vmatpush.bf16.msra.mxu0 %v168
  %190 = vmatpush.bf16.msra.mxu0 %v167
  %191 = vmatmul.bf16.gmra.mxu0 %v119
  %v192 = vpop.f32.mrf.mxu0
  %v193 = vadd.f32 0.0, %v192
  %v194 = vpop.f32.mrf.mxu0
  %v195 = vadd.f32 0.0, %v194
  %196 = vmatmul.bf16.gmra.mxu0 %v120
  %v197 = vpop.f32.mrf.mxu0
  %v198 = vadd.f32 0.0, %v197
  %v199 = vpop.f32.mrf.mxu0
  %v200 = vadd.f32 0.0, %v199
  %201 = vmatmul.bf16.gmra.mxu0 %v121
  %v202 = vpop.f32.mrf.mxu0
  %v203 = vadd.f32 0.0, %v202
  %v204 = vpop.f32.mrf.mxu0
  %v205 = vadd.f32 0.0, %v204
  %206 = vmatmul.bf16.gmra.mxu0 %v122
  %v207 = vpop.f32.mrf.mxu0
  %v208 = vadd.f32 0.0, %v207
  %v209 = vpop.f32.mrf.mxu0
  %v210 = vadd.f32 0.0, %v209
  %211 = vmatmul.bf16.gmra.mxu0 %v123
  %v212 = vpop.f32.mrf.mxu0
  %v213 = vadd.f32 0.0, %v212
  %v214 = vpop.f32.mrf.mxu0
  %v215 = vadd.f32 0.0, %v214
  %216 = vmatmul.bf16.gmra.mxu0 %v124
  %v217 = vpop.f32.mrf.mxu0
  %v218 = vadd.f32 0.0, %v217
  %v219 = vpop.f32.mrf.mxu0
  %v220 = vadd.f32 0.0, %v219
  %221 = vmatmul.bf16.gmra.mxu0 %v125
  %v222 = vpop.f32.mrf.mxu0
  %v223 = vadd.f32 0.0, %v222
  %v224 = vpop.f32.mrf.mxu0
  %v225 = vadd.f32 0.0, %v224
  %226 = vmatmul.bf16.gmra.mxu0 %v126
  %v227 = vpop.f32.mrf.mxu0
  %v228 = vadd.f32 0.0, %v227
  %v229 = vpop.f32.mrf.mxu0
  %v230 = vadd.f32 0.0, %v229
  %231 = vdwg.mxu0
  %v248 = vunpack.c.l.b16 %v23
  %v249 = vunpack.c.l.b16 %v24
  %v250 = vunpack.c.l.b16 %v25
  %v251 = vunpack.c.l.b16 %v26
  %v252 = vunpack.c.l.b16 %v27
  %v253 = vunpack.c.l.b16 %v28
  %v254 = vunpack.c.l.b16 %v29
  %v255 = vunpack.c.l.b16 %v30
  %v256 = vunpack.c.l.b16 %v31
  %v257 = vunpack.c.l.b16 %v32
  %v258 = vunpack.c.l.b16 %v33
  %v259 = vunpack.c.l.b16 %v34
  %v260 = vunpack.c.l.b16 %v35
  %v261 = vunpack.c.l.b16 %v36
  %v262 = vunpack.c.l.b16 %v37
  %v263 = vunpack.c.l.b16 %v38
  %v264 = vpack.c.b16 %v249, %v248
  %v265 = vpack.c.b16 %v251, %v250
  %v266 = vpack.c.b16 %v253, %v252
  %v267 = vpack.c.b16 %v255, %v254
  %v268 = vpack.c.b16 %v257, %v256
  %v269 = vpack.c.b16 %v259, %v258
  %v270 = vpack.c.b16 %v261, %v260
  %v271 = vpack.c.b16 %v263, %v262
  %v296 = vunpack.c.l.b16 %v39
  %v297 = vunpack.c.l.b16 %v40
  %v298 = vunpack.c.l.b16 %v41
  %v299 = vunpack.c.l.b16 %v42
  %v300 = vunpack.c.l.b16 %v43
  %v301 = vunpack.c.l.b16 %v44
  %v302 = vunpack.c.l.b16 %v45
  %v303 = vunpack.c.l.b16 %v46
  %v304 = vunpack.c.l.b16 %v47
  %v305 = vunpack.c.l.b16 %v48
  %v306 = vunpack.c.l.b16 %v49
  %v307 = vunpack.c.l.b16 %v50
  %v308 = vunpack.c.l.b16 %v51
  %v309 = vunpack.c.l.b16 %v52
  %v310 = vunpack.c.l.b16 %v53
  %v311 = vunpack.c.l.b16 %v54
  %v312 = vpack.c.b16 %v297, %v296
  %v313 = vpack.c.b16 %v299, %v298
  %v314 = vpack.c.b16 %v301, %v300
  %v315 = vpack.c.b16 %v303, %v302
  %v316 = vpack.c.b16 %v305, %v304
  %v317 = vpack.c.b16 %v307, %v306
  %v318 = vpack.c.b16 %v309, %v308
  %v319 = vpack.c.b16 %v311, %v310
  %328 = vmatpush.bf16.msra.mxu0 %v319
  %329 = vmatpush.bf16.msra.mxu0 %v318
  %330 = vmatpush.bf16.msra.mxu0 %v317
  %331 = vmatpush.bf16.msra.mxu0 %v316
  %332 = vmatpush.bf16.msra.mxu0 %v315
  %333 = vmatpush.bf16.msra.mxu0 %v314
  %334 = vmatpush.bf16.msra.mxu0 %v313
  %335 = vmatpush.bf16.msra.mxu0 %v312
  %336 = vmatmul.bf16.gmra.mxu0 %v264
  %v337 = vpop.f32.mrf.mxu0
  %v338 = vadd.f32 %v193, %v337
  %v339 = vpop.f32.mrf.mxu0
  %v340 = vadd.f32 %v195, %v339
  %341 = vmatmul.bf16.gmra.mxu0 %v265
  %v342 = vpop.f32.mrf.mxu0
  %v343 = vadd.f32 %v198, %v342
  %v344 = vpop.f32.mrf.mxu0
  %v345 = vadd.f32 %v200, %v344
  %346 = vmatmul.bf16.gmra.mxu0 %v266
  %v347 = vpop.f32.mrf.mxu0
  %v348 = vadd.f32 %v203, %v347
  %v349 = vpop.f32.mrf.mxu0
  %v350 = vadd.f32 %v205, %v349
  %351 = vmatmul.bf16.gmra.mxu0 %v267
  %v352 = vpop.f32.mrf.mxu0
  %v353 = vadd.f32 %v208, %v352
  %v354 = vpop.f32.mrf.mxu0
  %v355 = vadd.f32 %v210, %v354
  %356 = vmatmul.bf16.gmra.mxu0 %v268
  %v357 = vpop.f32.mrf.mxu0
  %v358 = vadd.f32 %v213, %v357
  %v359 = vpop.f32.mrf.mxu0
  %v360 = vadd.f32 %v215, %v359
  %361 = vmatmul.bf16.gmra.mxu0 %v269
  %v362 = vpop.f32.mrf.mxu0
  %v363 = vadd.f32 %v218, %v362
  %v364 = vpop.f32.mrf.mxu0
  %v365 = vadd.f32 %v220, %v364
  %366 = vmatmul.bf16.gmra.mxu0 %v270
  %v367 = vpop.f32.mrf.mxu0
  %v368 = vadd.f32 %v223, %v367
  %v369 = vpop.f32.mrf.mxu0
  %v370 = vadd.f32 %v225, %v369
  %371 = vmatmul.bf16.gmra.mxu0 %v271
  %v372 = vpop.f32.mrf.mxu0
  %v373 = vadd.f32 %v228, %v372
  %v374 = vpop.f32.mrf.mxu0
  %v375 = vadd.f32 %v230, %v374
  %376 = vdwg.mxu0
  %v377 = vld [vmem:[%s2] sm:$0x1]
  %v379 = vperm.slane %v377, 0
  %v381 = vadd.f32 %v338, %v379
  %v382 = vadd.f32 %v340, %v379
  %v383 = vadd.f32 %v343, %v379
  %v384 = vadd.f32 %v345, %v379
  %v385 = vadd.f32 %v348, %v379
  %v386 = vadd.f32 %v350, %v379
  %v387 = vadd.f32 %v353, %v379
  %v388 = vadd.f32 %v355, %v379
  %v389 = vadd.f32 %v358, %v379
  %v390 = vadd.f32 %v360, %v379
  %v391 = vadd.f32 %v363, %v379
  %v392 = vadd.f32 %v365, %v379
  %v393 = vadd.f32 %v368, %v379
  %v394 = vadd.f32 %v370, %v379
  %v395 = vadd.f32 %v373, %v379
  %v396 = vadd.f32 %v375, %v379
  %v397 = vld [vmem:[%s5] sm:$0x1]
  %v399 = vperm.slane %v397, 0
  %v401 = vadd.f32 %v381, %v399
  %v402 = vadd.f32 %v382, %v399
  %v403 = vadd.f32 %v383, %v399
  %v404 = vadd.f32 %v384, %v399
  %v405 = vadd.f32 %v385, %v399
  %v406 = vadd.f32 %v386, %v399
  %v407 = vadd.f32 %v387, %v399
  %v408 = vadd.f32 %v388, %v399
  %v409 = vadd.f32 %v389, %v399
  %v410 = vadd.f32 %v390, %v399
  %v411 = vadd.f32 %v391, %v399
  %v412 = vadd.f32 %v392, %v399
  %v413 = vadd.f32 %v393, %v399
  %v414 = vadd.f32 %v394, %v399
  %v415 = vadd.f32 %v395, %v399
  %v416 = vadd.f32 %v396, %v399
  %v417 = vmax.f32 %v401, 0.0
  %v418 = vmax.f32 %v402, 0.0
  %v419 = vmax.f32 %v403, 0.0
  %v420 = vmax.f32 %v404, 0.0
  %v421 = vmax.f32 %v405, 0.0
  %v422 = vmax.f32 %v406, 0.0
  %v423 = vmax.f32 %v407, 0.0
  %v424 = vmax.f32 %v408, 0.0
  %v425 = vmax.f32 %v409, 0.0
  %v426 = vmax.f32 %v410, 0.0
  %v427 = vmax.f32 %v411, 0.0
  %v428 = vmax.f32 %v412, 0.0
  %v429 = vmax.f32 %v413, 0.0
  %v430 = vmax.f32 %v414, 0.0
  %v431 = vmax.f32 %v415, 0.0
  %v432 = vmax.f32 %v416, 0.0
  %v433 = vpack.c.bf16 %v417, %v417
  %v434 = vpack.c.bf16 %v418, %v418
  %v435 = vpack.c.bf16 %v419, %v419
  %v436 = vpack.c.bf16 %v420, %v420
  %v437 = vpack.c.bf16 %v421, %v421
  %v438 = vpack.c.bf16 %v422, %v422
  %v439 = vpack.c.bf16 %v423, %v423
  %v440 = vpack.c.bf16 %v424, %v424
  %v441 = vpack.c.bf16 %v425, %v425
  %v442 = vpack.c.bf16 %v426, %v426
  %v443 = vpack.c.bf16 %v427, %v427
  %v444 = vpack.c.bf16 %v428, %v428
  %v445 = vpack.c.bf16 %v429, %v429
  %v446 = vpack.c.bf16 %v430, %v430
  %v447 = vpack.c.bf16 %v431, %v431
  %v448 = vpack.c.bf16 %v432, %v432
  %449 = vst [vmem:[%s6] sm:$0xf] %v433
  %450 = vst [vmem:[%s6 + $0x4] sm:$0xf] %v434
  %451 = vst [vmem:[%s6 + $0x8] sm:$0xf] %v435
  %452 = vst [vmem:[%s6 + $0xc] sm:$0xf] %v436
  %453 = vst [vmem:[%s6 + $0x10] sm:$0xf] %v437
  %454 = vst [vmem:[%s6 + $0x14] sm:$0xf] %v438
  %455 = vst [vmem:[%s6 + $0x18] sm:$0xf] %v439
  %456 = vst [vmem:[%s6 + $0x1c] sm:$0xf] %v440
  %457 = vst [vmem:[%s6 + $0x20] sm:$0xf] %v441
  %458 = vst [vmem:[%s6 + $0x24] sm:$0xf] %v442
  %459 = vst [vmem:[%s6 + $0x28] sm:$0xf] %v443
  %460 = vst [vmem:[%s6 + $0x2c] sm:$0xf] %v444
  %461 = vst [vmem:[%s6 + $0x30] sm:$0xf] %v445
  %462 = vst [vmem:[%s6 + $0x34] sm:$0xf] %v446
  %463 = vst [vmem:[%s6 + $0x38] sm:$0xf] %v447
  %464 = vst [vmem:[%s6 + $0x3c] sm:$0xf] %v448
  // Predicated region
  $region26: #{resnext_forward.13} parent=0 // pred_check
    _
  $region27: #{resnext_forward.13} parent=0 // pred_check_branch
    %466 = sbr.rel (0) target = $region29
  $region28: #{resnext_forward.13} parent=0 // pred_region
    _
  $region29: #{resnext_forward.13} parent=0 // pred_fallthru
    _
  // Predicated region
  $region30: #{resnext_forward.13} parent=0 // pred_check
    _
  $region31: #{resnext_forward.13} parent=0 // pred_check_branch
    %468 = sbr.rel (0) target = $region33
  $region32: #{resnext_forward.13} parent=0 // pred_region
    _
  $region33: #{resnext_forward.13} parent=0 // pred_fallthru
    _

// kernel: resnext_forward.12
$region0: #{resnext_forward.12}
  #allocation0 [shape = 'u32[]', space=smem, size = 0x4, offset = 0x4, fixed_abs, tag = 'smem constant byte address 0x4 - core index']
  #allocation1 [shape = 'u32[72,128]{1,0:T(1,128)}', space=vmem, size = 0x9000, scoped, tag = 'internal scratch']
  %s0 = inlined_call_operand.vmem [shape: bf16[2,10,10,128], index: 0, kind: input, shape index: {}]
  %s1 = inlined_call_operand.vmem [shape: bf16[9,128,128], index: 1, kind: input, shape index: {}]
  %s2 = inlined_call_operand.vmem [shape: f32[1,128], index: 2, kind: input, shape index: {}]
  %s3 = inlined_call_operand.vmem [shape: bf16[2,64,128], index: 3, kind: output, shape index: {}]
  %s4 = sld [smem:[#allocation0]]
  $region45: #{resnext_forward.12} parent=0
    _
  %s6 = ssub.s32 1, %s4
  %s7 = scalar_select 0, %s6, %s4
  loop: start=0, step=1, limit=4
  $region2: #{resnext_forward.12} parent=0 // loop_pre_header
    _
  $region3: #{resnext_forward.12} parent=0 // loop_header
    %s9 = sphi 0, %s13
    %p10 = scmp.ge.s32.totalorder %s9, 4
    %s19 = sphi 0, %s21
    %s22 = sphi 0, %s19
    %s23 = sphi 0, %s22
    %s39 = sphi 0, %s23
    %s43 = sphi 0, %s43
    %s45 = sphi 0, %s43
    %s46 = sphi 0, %s45
    %s60 = sphi 0, %s46
    %s64 = sphi 0, %s64
    %s66 = sphi 0, %s64
    %s67 = sphi 0, %s66
    %s81 = sphi 0, %s67
    %s87 = sphi 0, %s89
    %s90 = sphi 0, %s87
    %s91 = sphi 0, %s90
    %s107 = sphi 0, %s91
  $region4: #{resnext_forward.12} parent=0 // loop_header_branch
    %12 = sbr.rel (%p10) target = $region8
  $region5: #{resnext_forward.12} parent=0 // loop_body
    %s14 = ssub.s32 %s9, 1
    %s15 = ssub.s32 %s9, 2
    %s16 = sadd.s32 %s9, 1
    %s17 = ssub.s32 %s9, %s16
    %p18 = scmp.eq.s32.totalorder %s17, 0
    %s20 = sadd.s32 %s19, 1
    %s21 = scalar_select %p18, %s19, %s20
    %p24 = pneg %p18
    %p25 = scmp.eq.s32.totalorder %s9, 1
    %p26 = por %p24, %p25
    %p27 = scmp.ne.s32.totalorder %s19, %s22
    %p28 = scmp.eq.s32.totalorder %s9, 0
    %p29 = por %p27, %p28
    %p30 = scmp.ne.s32.totalorder %s19, %s22
    %p31 = scmp.eq.s32.totalorder %s14, 1
    %p32 = por %p30, %p31
    %p33 = scmp.ne.s32.totalorder %s22, %s23
    %p34 = scmp.eq.s32.totalorder %s14, 0
    %p35 = por %p33, %p34
    %p36 = scmp.ne.s32.totalorder %s22, %s23
    %p37 = scmp.eq.s32.totalorder %s15, 1
    %p38 = por %p36, %p37
    %p40 = scmp.ne.s32.totalorder %s23, %s39
    %p41 = scmp.eq.s32.totalorder %s15, 0
    %p42 = por %p40, %p41
    %s44 = sadd.s32 %s43, 1
    %p47 = scmp.eq.s32.totalorder %s9, 1
    %p48 = scmp.ne.s32.totalorder %s43, %s45
    %p49 = scmp.eq.s32.totalorder %s9, 0
    %p50 = por %p48, %p49
    %p51 = scmp.ne.s32.totalorder %s43, %s45
    %p52 = scmp.eq.s32.totalorder %s14, 1
    %p53 = por %p51, %p52
    %p54 = scmp.ne.s32.totalorder %s45, %s46
    %p55 = scmp.eq.s32.totalorder %s14, 0
    %p56 = por %p54, %p55
    %p57 = scmp.ne.s32.totalorder %s45, %s46
    %p58 = scmp.eq.s32.totalorder %s15, 1
    %p59 = por %p57, %p58
    %p61 = scmp.ne.s32.totalorder %s46, %s60
    %p62 = scmp.eq.s32.totalorder %s15, 0
    %p63 = por %p61, %p62
    %s65 = sadd.s32 %s64, 1
    %p68 = scmp.eq.s32.totalorder %s9, 1
    %p69 = scmp.ne.s32.totalorder %s64, %s66
    %p70 = scmp.eq.s32.totalorder %s9, 0
    %p71 = por %p69, %p70
    %p72 = scmp.ne.s32.totalorder %s64, %s66
    %p73 = scmp.eq.s32.totalorder %s14, 1
    %p74 = por %p72, %p73
    %p75 = scmp.ne.s32.totalorder %s66, %s67
    %p76 = scmp.eq.s32.totalorder %s14, 0
    %p77 = por %p75, %p76
    %p78 = scmp.ne.s32.totalorder %s66, %s67
    %p79 = scmp.eq.s32.totalorder %s15, 1
    %p80 = por %p78, %p79
    %p82 = scmp.ne.s32.totalorder %s67, %s81
    %p83 = scmp.eq.s32.totalorder %s15, 0
    %p84 = por %p82, %p83
    %s85 = ssub.s32 %s9, %s16
    %p86 = scmp.eq.s32.totalorder %s85, 0
    %s88 = sadd.s32 %s87, 1
    %s89 = scalar_select %p86, %s87, %s88
    %p92 = pneg %p86
    %p93 = scmp.eq.s32.totalorder %s9, 1
    %p94 = por %p92, %p93
    %p95 = scmp.ne.s32.totalorder %s87, %s90
    %p96 = scmp.eq.s32.totalorder %s9, 0
    %p97 = por %p95, %p96
    %p98 = scmp.ne.s32.totalorder %s87, %s90
    %p99 = scmp.eq.s32.totalorder %s14, 1
    %p100 = por %p98, %p99
    %p101 = scmp.ne.s32.totalorder %s90, %s91
    %p102 = scmp.eq.s32.totalorder %s14, 0
    %p103 = por %p101, %p102
    %p104 = scmp.ne.s32.totalorder %s90, %s91
    %p105 = scmp.eq.s32.totalorder %s15, 1
    %p106 = por %p104, %p105
    %p108 = scmp.ne.s32.totalorder %s91, %s107
    %p109 = scmp.eq.s32.totalorder %s15, 0
    %p110 = por %p108, %p109
    %p111 = scmp.le.s32.totalorder 1, %s9
    %p112 = scmp.lt.s32.totalorder %s9, 3
    %p113 = pnand %p111, %p112
    %p114 = pneg %p113
    // Predicated region
    $region9: #{resnext_forward.12} parent=5 // pred_check
      _
    $region10: #{resnext_forward.12} parent=5 // pred_check_branch
      %116 = sbr.rel (%p113) target = $region12
    $region11: #{resnext_forward.12} parent=5 // pred_region
      %s117 = ssub.s32 %s9, 1
      // Predicated region
      $region13: #{resnext_forward.12} parent=11 // pred_check
        %p118 = pneg %p56
      $region14: #{resnext_forward.12} parent=11 // pred_check_branch
        %120 = sbr.rel (%p118) target = $region16
      $region15: #{resnext_forward.12} parent=11 // pred_region
        _
      $region16: #{resnext_forward.12} parent=11 // pred_fallthru
        _
      // Predicated region
      $region17: #{resnext_forward.12} parent=11 // pred_check
        %p121 = pneg %p77
      $region18: #{resnext_forward.12} parent=11 // pred_check_branch
        %123 = sbr.rel (%p121) target = $region20
      $region19: #{resnext_forward.12} parent=11 // pred_region
        _
      $region20: #{resnext_forward.12} parent=11 // pred_fallthru
        _
    $region12: #{resnext_forward.12} parent=5 // pred_fallthru
      _
    %p124 = scmp.lt.s32.totalorder %s9, 2
    // Predicated region
    $region21: #{resnext_forward.12} parent=5 // pred_check
      %p125 = pneg %p124
    $region22: #{resnext_forward.12} parent=5 // pred_check_branch
      %127 = sbr.rel (%p125) target = $region24
    $region23: #{resnext_forward.12} parent=5 // pred_region
      // Predicated region
      $region25: #{resnext_forward.12} parent=23 // pred_check
        %p128 = pneg %p29
      $region26: #{resnext_forward.12} parent=23 // pred_check_branch
        %130 = sbr.rel (%p128) target = $region28
      $region27: #{resnext_forward.12} parent=23 // pred_region
        %p131 = scmp.lt.s32.totalorder %s9, 1
        %s132 = scalar_select %p131, %s9, 1
        %s133 = smul.addr %s132, 20
        %s134 = smul.addr %s133, 4
        %s135 = scalar_lea.vmem %s0, %s134
      $region28: #{resnext_forward.12} parent=23 // pred_fallthru
        _
    $region24: #{resnext_forward.12} parent=5 // pred_fallthru
      _
    %p136 = scmp.le.s32.totalorder 1, %s9
    %p137 = scmp.lt.s32.totalorder %s9, 3
    %p138 = pnand %p136, %p137
    %p139 = pneg %p138
    // Predicated region
    $region29: #{resnext_forward.12} parent=5 // pred_check
      _
    $region30: #{resnext_forward.12} parent=5 // pred_check_branch
      %141 = sbr.rel (%p138) target = $region32
    $region31: #{resnext_forward.12} parent=5 // pred_region
      %s142 = ssub.s32 %s9, 1
      %p143 = scmp.lt.s32.totalorder %s14, 1
      %s144 = scalar_select %p143, %s14, 1
      %s145 = smul.addr %s144, 20
      %s146 = smul.addr %s145, 4
      %s147 = scalar_lea.vmem %s0, %s146
      %p148 = pneg %p35
      %p149 = pneg %p32
      %p150 = pneg %p56
      %p151 = pneg %p53
      %p152 = pneg %p77
      %p153 = pneg %p74
      %p154 = pneg %p103
      %p155 = pneg %p100
      %p156 = scmp.lt.s32.totalorder %s14, 1
      %s157 = scalar_select %p156, %s14, 1
      %s158 = smul.addr %s157, 8
      %s159 = smul.addr %s158, 4
      %s160 = scalar_lea.vmem %s3, %s159
      %p161 = scmp.lt.s32.totalorder %s14, 1
      %s162 = scalar_select %p161, %s14, 1
      %s163 = smul.addr %s162, 20
      %s164 = smul.addr %s163, 4
      %s165 = scalar_lea.vmem %s0, %s164
      %p166 = scmp.lt.s32.totalorder %s14, 1
      %s167 = scalar_select %p166, %s14, 1
      %s168 = smul.addr %s167, 8
      %s169 = smul.addr %s168, 4
      %s170 = scalar_lea.vmem %s3, %s169
      %v171 = vld [vmem:[%s165] sm:$0xf]
      %v172 = vld [vmem:[%s165 + $0x8] sm:$0xf]
      %v173 = vld [vmem:[%s165 + $0x10] sm:$0xf]
      %v174 = vld [vmem:[%s165 + $0x18] sm:$0xf]
      %v175 = vld [vmem:[%s165 + $0x20] sm:$0xf]
      %v176 = vld [vmem:[%s165 + $0x28] sm:$0xf]
      %v177 = vld [vmem:[%s165 + $0x30] sm:$0xf]
      %v178 = vld [vmem:[%s165 + $0x38] sm:$0xf]
      %v179 = vld [vmem:[%s1] sm:$0xf]
      %v180 = vld [vmem:[%s1 + $0x4] sm:$0xf]
      %v181 = vld [vmem:[%s1 + $0x8] sm:$0xf]
      %v182 = vld [vmem:[%s1 + $0xc] sm:$0xf]
      %v183 = vld [vmem:[%s1 + $0x10] sm:$0xf]
      %v184 = vld [vmem:[%s1 + $0x14] sm:$0xf]
      %v185 = vld [vmem:[%s1 + $0x18] sm:$0xf]
      %v186 = vld [vmem:[%s1 + $0x1c] sm:$0xf]
      %v187 = vld [vmem:[%s1 + $0x20] sm:$0xf]
      %v188 = vld [vmem:[%s1 + $0x24] sm:$0xf]
      %v189 = vld [vmem:[%s1 + $0x28] sm:$0xf]
      %v190 = vld [vmem:[%s1 + $0x2c] sm:$0xf]
      %v191 = vld [vmem:[%s1 + $0x30] sm:$0xf]
      %v192 = vld [vmem:[%s1 + $0x34] sm:$0xf]
      %v193 = vld [vmem:[%s1 + $0x38] sm:$0xf]
      %v194 = vld [vmem:[%s1 + $0x3c] sm:$0xf]
      %v195 = vld [vmem:[%s165 + $0x4] sm:$0x1]
      %v196 = vld [vmem:[%s165 + $0xc] sm:$0x1]
      %v197 = vld [vmem:[%s165 + $0x14] sm:$0x1]
      %v198 = vld [vmem:[%s165 + $0x1c] sm:$0x1]
      %v199 = vld [vmem:[%s165 + $0x24] sm:$0x1]
      %v200 = vld [vmem:[%s165 + $0x2c] sm:$0x1]
      %v201 = vld [vmem:[%s165 + $0x34] sm:$0x1]
      %v202 = vld [vmem:[%s165 + $0x3c] sm:$0x1]
      %vm203 = vsmask.f32 3328
      %vm204 = vsmask.f32 7440
      %vm205 = vmor %vm203, %vm204
      %v207 = vshrl.u32 %v171, 16
      %v209 = vrot.slane %v207, 4
      %v210 = vshll.u32 %v171, 16
      %v212 = vrot.slane %v210, 5
      %v213 = vor.u32 %v209, %v212
      %v214 = vrot.slane %v213, 4
      %v216 = vshll.u32 %v195, 16
      %v218 = vrot.slane %v216, 5
      %v219 = vsel %vm205, %v214, %v218
      %v221 = vshrl.u32 %v172, 16
      %v223 = vrot.slane %v221, 4
      %v224 = vshll.u32 %v172, 16
      %v226 = vrot.slane %v224, 5
      %v227 = vor.u32 %v223, %v226
      %v228 = vrot.slane %v227, 4
      %v230 = vshll.u32 %v196, 16
      %v232 = vrot.slane %v230, 5
      %v233 = vsel %vm205, %v228, %v232
      %v235 = vshrl.u32 %v173, 16
      %v237 = vrot.slane %v235, 4
      %v238 = vshll.u32 %v173, 16
      %v240 = vrot.slane %v238, 5
      %v241 = vor.u32 %v237, %v240
      %v242 = vrot.slane %v241, 4
      %v244 = vshll.u32 %v197, 16
      %v246 = vrot.slane %v244, 5
      %v247 = vsel %vm205, %v242, %v246
      %v249 = vshrl.u32 %v174, 16
      %v251 = vrot.slane %v249, 4
      %v252 = vshll.u32 %v174, 16
      %v254 = vrot.slane %v252, 5
      %v255 = vor.u32 %v251, %v254
      %v256 = vrot.slane %v255, 4
      %v258 = vshll.u32 %v198, 16
      %v260 = vrot.slane %v258, 5
      %v261 = vsel %vm205, %v256, %v260
      %v263 = vshrl.u32 %v175, 16
      %v265 = vrot.slane %v263, 4
      %v266 = vshll.u32 %v175, 16
      %v268 = vrot.slane %v266, 5
      %v269 = vor.u32 %v265, %v268
      %v270 = vrot.slane %v269, 4
      %v272 = vshll.u32 %v199, 16
      %v274 = vrot.slane %v272, 5
      %v275 = vsel %vm205, %v270, %v274
      %v277 = vshrl.u32 %v176, 16
      %v279 = vrot.slane %v277, 4
      %v280 = vshll.u32 %v176, 16
      %v282 = vrot.slane %v280, 5
      %v283 = vor.u32 %v279, %v282
      %v284 = vrot.slane %v283, 4
      %v286 = vshll.u32 %v200, 16
      %v288 = vrot.slane %v286, 5
      %v289 = vsel %vm205, %v284, %v288
      %v291 = vshrl.u32 %v177, 16
      %v293 = vrot.slane %v291, 4
      %v294 = vshll.u32 %v177, 16
      %v296 = vrot.slane %v294, 5
      %v297 = vor.u32 %v293, %v296
      %v298 = vrot.slane %v297, 4
      %v300 = vshll.u32 %v201, 16
      %v302 = vrot.slane %v300, 5
      %v303 = vsel %vm205, %v298, %v302
      %v305 = vshrl.u32 %v178, 16
      %v307 = vrot.slane %v305, 4
      %v308 = vshll.u32 %v178, 16
      %v310 = vrot.slane %v308, 5
      %v311 = vor.u32 %v307, %v310
      %v312 = vrot.slane %v311, 4
      %v314 = vshll.u32 %v202, 16
      %v316 = vrot.slane %v314, 5
      %v317 = vsel %vm205, %v312, %v316
      %s318 = scalar_lea.vmem %s1, 64
      %v319 = vld [vmem:[%s318] sm:$0xf]
      %v320 = vld [vmem:[%s318 + $0x4] sm:$0xf]
      %v321 = vld [vmem:[%s318 + $0x8] sm:$0xf]
      %v322 = vld [vmem:[%s318 + $0xc] sm:$0xf]
      %v323 = vld [vmem:[%s318 + $0x10] sm:$0xf]
      %v324 = vld [vmem:[%s318 + $0x14] sm:$0xf]
      %v325 = vld [vmem:[%s318 + $0x18] sm:$0xf]
      %v326 = vld [vmem:[%s318 + $0x1c] sm:$0xf]
      %v327 = vld [vmem:[%s318 + $0x20] sm:$0xf]
      %v328 = vld [vmem:[%s318 + $0x24] sm:$0xf]
      %v329 = vld [vmem:[%s318 + $0x28] sm:$0xf]
      %v330 = vld [vmem:[%s318 + $0x2c] sm:$0xf]
      %v331 = vld [vmem:[%s318 + $0x30] sm:$0xf]
      %v332 = vld [vmem:[%s318 + $0x34] sm:$0xf]
      %v333 = vld [vmem:[%s318 + $0x38] sm:$0xf]
      %v334 = vld [vmem:[%s318 + $0x3c] sm:$0xf]
      %v335 = vunpack.c.l.b16 %v219
      %v336 = vunpack.c.l.b16 %v233
      %v337 = vunpack.c.l.b16 %v247
      %v338 = vunpack.c.l.b16 %v261
      %v339 = vunpack.c.l.b16 %v275
      %v340 = vunpack.c.l.b16 %v289
      %v341 = vunpack.c.l.b16 %v303
      %v342 = vunpack.c.l.b16 %v317
      %v343 = vpack.c.b16 %v336, %v335
      %v344 = vpack.c.b16 %v338, %v337
      %v345 = vpack.c.b16 %v340, %v339
      %v346 = vpack.c.b16 %v342, %v341
      %v367 = vunpack.c.l.b16 %v319
      %v368 = vunpack.c.l.b16 %v320
      %v369 = vunpack.c.l.b16 %v321
      %v370 = vunpack.c.l.b16 %v322
      %v371 = vunpack.c.l.b16 %v323
      %v372 = vunpack.c.l.b16 %v324
      %v373 = vunpack.c.l.b16 %v325
      %v374 = vunpack.c.l.b16 %v326
      %v375 = vunpack.c.l.b16 %v327
      %v376 = vunpack.c.l.b16 %v328
      %v377 = vunpack.c.l.b16 %v329
      %v378 = vunpack.c.l.b16 %v330
      %v379 = vunpack.c.l.b16 %v331
      %v380 = vunpack.c.l.b16 %v332
      %v381 = vunpack.c.l.b16 %v333
      %v382 = vunpack.c.l.b16 %v334
      %v383 = vpack.c.b16 %v368, %v367
      %v384 = vpack.c.b16 %v370, %v369
      %v385 = vpack.c.b16 %v372, %v371
      %v386 = vpack.c.b16 %v374, %v373
      %v387 = vpack.c.b16 %v376, %v375
      %v388 = vpack.c.b16 %v378, %v377
      %v389 = vpack.c.b16 %v380, %v379
      %v390 = vpack.c.b16 %v382, %v381
      %399 = vmatpush.bf16.msra.mxu0 %v390
      %400 = vmatpush.bf16.msra.mxu0 %v389
      %401 = vmatpush.bf16.msra.mxu0 %v388
      %402 = vmatpush.bf16.msra.mxu0 %v387
      %403 = vmatpush.bf16.msra.mxu0 %v386
      %404 = vmatpush.bf16.msra.mxu0 %v385
      %405 = vmatpush.bf16.msra.mxu0 %v384
      %406 = vmatpush.bf16.msra.mxu0 %v383
      %407 = vmatmul.bf16.gmra.mxu0 %v343
      %v408 = vpop.f32.mrf.mxu0
      %v409 = vadd.f32 0.0, %v408
      %v410 = vpop.f32.mrf.mxu0
      %v411 = vadd.f32 0.0, %v410
      %412 = vmatmul.bf16.gmra.mxu0 %v344
      %v413 = vpop.f32.mrf.mxu0
      %v414 = vadd.f32 0.0, %v413
      %v415 = vpop.f32.mrf.mxu0
      %v416 = vadd.f32 0.0, %v415
      %417 = vmatmul.bf16.gmra.mxu0 %v345
      %v418 = vpop.f32.mrf.mxu0
      %v419 = vadd.f32 0.0, %v418
      %v420 = vpop.f32.mrf.mxu0
      %v421 = vadd.f32 0.0, %v420
      %422 = vmatmul.bf16.gmra.mxu0 %v346
      %v423 = vpop.f32.mrf.mxu0
      %v424 = vadd.f32 0.0, %v423
      %v425 = vpop.f32.mrf.mxu0
      %v426 = vadd.f32 0.0, %v425
      %427 = vdwg.mxu0
      %v436 = vunpack.c.l.b16 %v171
      %v437 = vunpack.c.l.b16 %v172
      %v438 = vunpack.c.l.b16 %v173
      %v439 = vunpack.c.l.b16 %v174
      %v440 = vunpack.c.l.b16 %v175
      %v441 = vunpack.c.l.b16 %v176
      %v442 = vunpack.c.l.b16 %v177
      %v443 = vunpack.c.l.b16 %v178
      %v444 = vpack.c.b16 %v437, %v436
      %v445 = vpack.c.b16 %v439, %v438
      %v446 = vpack.c.b16 %v441, %v440
      %v447 = vpack.c.b16 %v443, %v442
      %v468 = vunpack.c.l.b16 %v179
      %v469 = vunpack.c.l.b16 %v180
      %v470 = vunpack.c.l.b16 %v181
      %v471 = vunpack.c.l.b16 %v182
      %v472 = vunpack.c.l.b16 %v183
      %v473 = vunpack.c.l.b16 %v184
      %v474 = vunpack.c.l.b16 %v185
      %v475 = vunpack.c.l.b16 %v186
      %v476 = vunpack.c.l.b16 %v187
      %v477 = vunpack.c.l.b16 %v188
      %v478 = vunpack.c.l.b16 %v189
      %v479 = vunpack.c.l.b16 %v190
      %v480 = vunpack.c.l.b16 %v191
      %v481 = vunpack.c.l.b16 %v192
      %v482 = vunpack.c.l.b16 %v193
      %v483 = vunpack.c.l.b16 %v194
      %v484 = vpack.c.b16 %v469, %v468
      %v485 = vpack.c.b16 %v471, %v470
      %v486 = vpack.c.b16 %v473, %v472
      %v487 = vpack.c.b16 %v475, %v474
      %v488 = vpack.c.b16 %v477, %v476
      %v489 = vpack.c.b16 %v479, %v478
      %v490 = vpack.c.b16 %v481, %v480
      %v491 = vpack.c.b16 %v483, %v482
      %500 = vmatpush.bf16.msra.mxu0 %v491
      %501 = vmatpush.bf16.msra.mxu0 %v490
      %502 = vmatpush.bf16.msra.mxu0 %v489
      %503 = vmatpush.bf16.msra.mxu0 %v488
      %504 = vmatpush.bf16.msra.mxu0 %v487
      %505 = vmatpush.bf16.msra.mxu0 %v486
      %506 = vmatpush.bf16.msra.mxu0 %v485
      %507 = vmatpush.bf16.msra.mxu0 %v484
      %508 = vmatmul.bf16.gmra.mxu0 %v444
      %v509 = vpop.f32.mrf.mxu0
      %v510 = vadd.f32 %v409, %v509
      %v511 = vpop.f32.mrf.mxu0
      %v512 = vadd.f32 %v411, %v511
      %513 = vmatmul.bf16.gmra.mxu0 %v445
      %v514 = vpop.f32.mrf.mxu0
      %v515 = vadd.f32 %v414, %v514
      %v516 = vpop.f32.mrf.mxu0
      %v517 = vadd.f32 %v416, %v516
      %518 = vmatmul.bf16.gmra.mxu0 %v446
      %v519 = vpop.f32.mrf.mxu0
      %v520 = vadd.f32 %v419, %v519
      %v521 = vpop.f32.mrf.mxu0
      %v522 = vadd.f32 %v421, %v521
      %523 = vmatmul.bf16.gmra.mxu0 %v447
      %v524 = vpop.f32.mrf.mxu0
      %v525 = vadd.f32 %v424, %v524
      %v526 = vpop.f32.mrf.mxu0
      %v527 = vadd.f32 %v426, %v526
      %528 = vdwg.mxu0
      %v529 = vld [vmem:[%s165] sm:$0xe]
      %v530 = vld [vmem:[%s165 + $0x8] sm:$0xe]
      %v531 = vld [vmem:[%s165 + $0x10] sm:$0xe]
      %v532 = vld [vmem:[%s165 + $0x18] sm:$0xe]
      %v533 = vld [vmem:[%s165 + $0x20] sm:$0xe]
      %v534 = vld [vmem:[%s165 + $0x28] sm:$0xe]
      %v535 = vld [vmem:[%s165 + $0x30] sm:$0xe]
      %v536 = vld [vmem:[%s165 + $0x38] sm:$0xe]
      %vm553 = vcmask 1042432
      %vm554 = vcmask 1046532
      %vm555 = vmor %vm553, %vm554
      %v556 = vrot.slane %v529, 5
      %v557 = vrot.slane %v556, 4
      %v558 = vrot.slane %v195, 5
      %v559 = vsel %vm555, %v557, %v558
      %v560 = vrot.slane %v530, 5
      %v561 = vrot.slane %v560, 4
      %v562 = vrot.slane %v196, 5
      %v563 = vsel %vm555, %v561, %v562
      %v564 = vrot.slane %v531, 5
      %v565 = vrot.slane %v564, 4
      %v566 = vrot.slane %v197, 5
      %v567 = vsel %vm555, %v565, %v566
      %v568 = vrot.slane %v532, 5
      %v569 = vrot.slane %v568, 4
      %v570 = vrot.slane %v198, 5
      %v571 = vsel %vm555, %v569, %v570
      %v572 = vrot.slane %v533, 5
      %v573 = vrot.slane %v572, 4
      %v574 = vrot.slane %v199, 5
      %v575 = vsel %vm555, %v573, %v574
      %v576 = vrot.slane %v534, 5
      %v577 = vrot.slane %v576, 4
      %v578 = vrot.slane %v200, 5
      %v579 = vsel %vm555, %v577, %v578
      %v580 = vrot.slane %v535, 5
      %v581 = vrot.slane %v580, 4
      %v582 = vrot.slane %v201, 5
      %v583 = vsel %vm555, %v581, %v582
      %v584 = vrot.slane %v536, 5
      %v585 = vrot.slane %v584, 4
      %v586 = vrot.slane %v202, 5
      %v587 = vsel %vm555, %v585, %v586
      %s588 = scalar_lea.vmem %s1, 128
      %v589 = vld [vmem:[%s588] sm:$0xf]
      %v590 = vld [vmem:[%s588 + $0x4] sm:$0xf]
      %v591 = vld [vmem:[%s588 + $0x8] sm:$0xf]
      %v592 = vld [vmem:[%s588 + $0xc] sm:$0xf]
      %v593 = vld [vmem:[%s588 + $0x10] sm:$0xf]
      %v594 = vld [vmem:[%s588 + $0x14] sm:$0xf]
      %v595 = vld [vmem:[%s588 + $0x18] sm:$0xf]
      %v596 = vld [vmem:[%s588 + $0x1c] sm:$0xf]
      %v597 = vld [vmem:[%s588 + $0x20] sm:$0xf]
      %v598 = vld [vmem:[%s588 + $0x24] sm:$0xf]
      %v599 = vld [vmem:[%s588 + $0x28] sm:$0xf]
      %v600 = vld [vmem:[%s588 + $0x2c] sm:$0xf]
      %v601 = vld [vmem:[%s588 + $0x30] sm:$0xf]
      %v602 = vld [vmem:[%s588 + $0x34] sm:$0xf]
      %v603 = vld [vmem:[%s588 + $0x38] sm:$0xf]
      %v604 = vld [vmem:[%s588 + $0x3c] sm:$0xf]
      %v605 = vunpack.c.l.b16 %v559
      %v606 = vunpack.c.l.b16 %v563
      %v607 = vunpack.c.l.b16 %v567
      %v608 = vunpack.c.l.b16 %v571
      %v609 = vunpack.c.l.b16 %v575
      %v610 = vunpack.c.l.b16 %v579
      %v611 = vunpack.c.l.b16 %v583
      %v612 = vunpack.c.l.b16 %v587
      %v613 = vpack.c.b16 %v606, %v605
      %v614 = vpack.c.b16 %v608, %v607
      %v615 = vpack.c.b16 %v610, %v609
      %v616 = vpack.c.b16 %v612, %v611
      %v637 = vunpack.c.l.b16 %v589
      %v638 = vunpack.c.l.b16 %v590
      %v639 = vunpack.c.l.b16 %v591
      %v640 = vunpack.c.l.b16 %v592
      %v641 = vunpack.c.l.b16 %v593
      %v642 = vunpack.c.l.b16 %v594
      %v643 = vunpack.c.l.b16 %v595
      %v644 = vunpack.c.l.b16 %v596
      %v645 = vunpack.c.l.b16 %v597
      %v646 = vunpack.c.l.b16 %v598
      %v647 = vunpack.c.l.b16 %v599
      %v648 = vunpack.c.l.b16 %v600
      %v649 = vunpack.c.l.b16 %v601
      %v650 = vunpack.c.l.b16 %v602
      %v651 = vunpack.c.l.b16 %v603
      %v652 = vunpack.c.l.b16 %v604
      %v653 = vpack.c.b16 %v638, %v637
      %v654 = vpack.c.b16 %v640, %v639
      %v655 = vpack.c.b16 %v642, %v641
      %v656 = vpack.c.b16 %v644, %v643
      %v657 = vpack.c.b16 %v646, %v645
      %v658 = vpack.c.b16 %v648, %v647
      %v659 = vpack.c.b16 %v650, %v649
      %v660 = vpack.c.b16 %v652, %v651
      %669 = vmatpush.bf16.msra.mxu0 %v660
      %670 = vmatpush.bf16.msra.mxu0 %v659
      %671 = vmatpush.bf16.msra.mxu0 %v658
      %672 = vmatpush.bf16.msra.mxu0 %v657
      %673 = vmatpush.bf16.msra.mxu0 %v656
      %674 = vmatpush.bf16.msra.mxu0 %v655
      %675 = vmatpush.bf16.msra.mxu0 %v654
      %676 = vmatpush.bf16.msra.mxu0 %v653
      %677 = vmatmul.bf16.gmra.mxu0 %v613
      %v678 = vpop.f32.mrf.mxu0
      %v679 = vadd.f32 0.0, %v678
      %v680 = vpop.f32.mrf.mxu0
      %v681 = vadd.f32 0.0, %v680
      %682 = vmatmul.bf16.gmra.mxu0 %v614
      %v683 = vpop.f32.mrf.mxu0
      %v684 = vadd.f32 0.0, %v683
      %v685 = vpop.f32.mrf.mxu0
      %v686 = vadd.f32 0.0, %v685
      %687 = vmatmul.bf16.gmra.mxu0 %v615
      %v688 = vpop.f32.mrf.mxu0
      %v689 = vadd.f32 0.0, %v688
      %v690 = vpop.f32.mrf.mxu0
      %v691 = vadd.f32 0.0, %v690
      %692 = vmatmul.bf16.gmra.mxu0 %v616
      %v693 = vpop.f32.mrf.mxu0
      %v694 = vadd.f32 0.0, %v693
      %v695 = vpop.f32.mrf.mxu0
      %v696 = vadd.f32 0.0, %v695
      %697 = vdwg.mxu0
      %v698 = vadd.f32 %v510, %v679
      %v699 = vadd.f32 %v512, %v681
      %v700 = vadd.f32 %v515, %v684
      %v701 = vadd.f32 %v517, %v686
      %v702 = vadd.f32 %v520, %v689
      %v703 = vadd.f32 %v522, %v691
      %v704 = vadd.f32 %v525, %v694
      %v705 = vadd.f32 %v527, %v696
      %s706 = scalar_lea.vmem %s165, 8
      %v707 = vld [vmem:[%s706] sm:$0xf]
      %v708 = vld [vmem:[%s706 + $0x8] sm:$0xf]
      %v709 = vld [vmem:[%s706 + $0x10] sm:$0xf]
      %v710 = vld [vmem:[%s706 + $0x18] sm:$0xf]
      %v711 = vld [vmem:[%s706 + $0x20] sm:$0xf]
      %v712 = vld [vmem:[%s706 + $0x28] sm:$0xf]
      %v713 = vld [vmem:[%s706 + $0x30] sm:$0xf]
      %v714 = vld [vmem:[%s706 + $0x38] sm:$0xf]
      %s715 = scalar_lea.vmem %s1, 192
      %v716 = vld [vmem:[%s715] sm:$0xf]
      %v717 = vld [vmem:[%s715 + $0x4] sm:$0xf]
      %v718 = vld [vmem:[%s715 + $0x8] sm:$0xf]
      %v719 = vld [vmem:[%s715 + $0xc] sm:$0xf]
      %v720 = vld [vmem:[%s715 + $0x10] sm:$0xf]
      %v721 = vld [vmem:[%s715 + $0x14] sm:$0xf]
      %v722 = vld [vmem:[%s715 + $0x18] sm:$0xf]
      %v723 = vld [vmem:[%s715 + $0x1c] sm:$0xf]
      %v724 = vld [vmem:[%s715 + $0x20] sm:$0xf]
      %v725 = vld [vmem:[%s715 + $0x24] sm:$0xf]
      %v726 = vld [vmem:[%s715 + $0x28] sm:$0xf]
      %v727 = vld [vmem:[%s715 + $0x2c] sm:$0xf]
      %v728 = vld [vmem:[%s715 + $0x30] sm:$0xf]
      %v729 = vld [vmem:[%s715 + $0x34] sm:$0xf]
      %v730 = vld [vmem:[%s715 + $0x38] sm:$0xf]
      %v731 = vld [vmem:[%s715 + $0x3c] sm:$0xf]
      %v740 = vunpack.c.l.b16 %v707
      %v741 = vunpack.c.l.b16 %v708
      %v742 = vunpack.c.l.b16 %v709
      %v743 = vunpack.c.l.b16 %v710
      %v744 = vunpack.c.l.b16 %v711
      %v745 = vunpack.c.l.b16 %v712
      %v746 = vunpack.c.l.b16 %v713
      %v747 = vunpack.c.l.b16 %v714
      %v748 = vpack.c.b16 %v741, %v740
      %v749 = vpack.c.b16 %v743, %v742
      %v750 = vpack.c.b16 %v745, %v744
      %v751 = vpack.c.b16 %v747, %v746
      %v772 = vunpack.c.l.b16 %v716
      %v773 = vunpack.c.l.b16 %v717
      %v774 = vunpack.c.l.b16 %v718
      %v775 = vunpack.c.l.b16 %v719
      %v776 = vunpack.c.l.b16 %v720
      %v777 = vunpack.c.l.b16 %v721
      %v778 = vunpack.c.l.b16 %v722
      %v779 = vunpack.c.l.b16 %v723
      %v780 = vunpack.c.l.b16 %v724
      %v781 = vunpack.c.l.b16 %v725
      %v782 = vunpack.c.l.b16 %v726
      %v783 = vunpack.c.l.b16 %v727
      %v784 = vunpack.c.l.b16 %v728
      %v785 = vunpack.c.l.b16 %v729
      %v786 = vunpack.c.l.b16 %v730
      %v787 = vunpack.c.l.b16 %v731
      %v788 = vpack.c.b16 %v773, %v772
      %v789 = vpack.c.b16 %v775, %v774
      %v790 = vpack.c.b16 %v777, %v776
      %v791 = vpack.c.b16 %v779, %v778
      %v792 = vpack.c.b16 %v781, %v780
      %v793 = vpack.c.b16 %v783, %v782
      %v794 = vpack.c.b16 %v785, %v784
      %v795 = vpack.c.b16 %v787, %v786
      %804 = vmatpush.bf16.msra.mxu0 %v795
      %805 = vmatpush.bf16.msra.mxu0 %v794
      %806 = vmatpush.bf16.msra.mxu0 %v793
      %807 = vmatpush.bf16.msra.mxu0 %v792
      %808 = vmatpush.bf16.msra.mxu0 %v791
      %809 = vmatpush.bf16.msra.mxu0 %v790
      %810 = vmatpush.bf16.msra.mxu0 %v789
      %811 = vmatpush.bf16.msra.mxu0 %v788
      %812 = vmatmul.bf16.gmra.mxu0 %v748
      %v813 = vpop.f32.mrf.mxu0
      %v814 = vadd.f32 0.0, %v813
      %v815 = vpop.f32.mrf.mxu0
      %v816 = vadd.f32 0.0, %v815
      %817 = vmatmul.bf16.gmra.mxu0 %v749
      %v818 = vpop.f32.mrf.mxu0
      %v819 = vadd.f32 0.0, %v818
      %v820 = vpop.f32.mrf.mxu0
      %v821 = vadd.f32 0.0, %v820
      %822 = vmatmul.bf16.gmra.mxu0 %v750
      %v823 = vpop.f32.mrf.mxu0
      %v824 = vadd.f32 0.0, %v823
      %v825 = vpop.f32.mrf.mxu0
      %v826 = vadd.f32 0.0, %v825
      %827 = vmatmul.bf16.gmra.mxu0 %v751
      %v828 = vpop.f32.mrf.mxu0
      %v829 = vadd.f32 0.0, %v828
      %v830 = vpop.f32.mrf.mxu0
      %v831 = vadd.f32 0.0, %v830
      %832 = vdwg.mxu0
      %v833 = vadd.f32 %v698, %v814
      %v834 = vadd.f32 %v699, %v816
      %v835 = vadd.f32 %v700, %v819
      %v836 = vadd.f32 %v701, %v821
      %v837 = vadd.f32 %v702, %v824
      %v838 = vadd.f32 %v703, %v826
      %v839 = vadd.f32 %v704, %v829
      %v840 = vadd.f32 %v705, %v831
      %v841 = vld [vmem:[%s706] sm:$0xf]
      %v842 = vld [vmem:[%s706 + $0x4] sm:$0x1]
      %v843 = vld [vmem:[%s706 + $0x8] sm:$0xf]
      %v844 = vld [vmem:[%s706 + $0xc] sm:$0x1]
      %v845 = vld [vmem:[%s706 + $0x10] sm:$0xf]
      %v846 = vld [vmem:[%s706 + $0x14] sm:$0x1]
      %v847 = vld [vmem:[%s706 + $0x18] sm:$0xf]
      %v848 = vld [vmem:[%s706 + $0x1c] sm:$0x1]
      %v849 = vld [vmem:[%s706 + $0x20] sm:$0xf]
      %v850 = vld [vmem:[%s706 + $0x24] sm:$0x1]
      %v851 = vld [vmem:[%s706 + $0x28] sm:$0xf]
      %v852 = vld [vmem:[%s706 + $0x2c] sm:$0x1]
      %v853 = vld [vmem:[%s706 + $0x30] sm:$0xf]
      %v854 = vld [vmem:[%s706 + $0x34] sm:$0x1]
      %v855 = vld [vmem:[%s706 + $0x38] sm:$0xf]
      %v856 = vld [vmem:[%s706 + $0x3c] sm:$0x1]
      %v858 = vshrl.u32 %v841, 16
      %v860 = vrot.slane %v858, 4
      %v861 = vshll.u32 %v841, 16
      %v863 = vrot.slane %v861, 5
      %v864 = vor.u32 %v860, %v863
      %v865 = vrot.slane %v864, 4
      %v867 = vshll.u32 %v842, 16
      %v869 = vrot.slane %v867, 5
      %v870 = vsel %vm205, %v865, %v869
      %v872 = vshrl.u32 %v843, 16
      %v874 = vrot.slane %v872, 4
      %v875 = vshll.u32 %v843, 16
      %v877 = vrot.slane %v875, 5
      %v878 = vor.u32 %v874, %v877
      %v879 = vrot.slane %v878, 4
      %v881 = vshll.u32 %v844, 16
      %v883 = vrot.slane %v881, 5
      %v884 = vsel %vm205, %v879, %v883
      %v886 = vshrl.u32 %v845, 16
      %v888 = vrot.slane %v886, 4
      %v889 = vshll.u32 %v845, 16
      %v891 = vrot.slane %v889, 5
      %v892 = vor.u32 %v888, %v891
      %v893 = vrot.slane %v892, 4
      %v895 = vshll.u32 %v846, 16
      %v897 = vrot.slane %v895, 5
      %v898 = vsel %vm205, %v893, %v897
      %v900 = vshrl.u32 %v847, 16
      %v902 = vrot.slane %v900, 4
      %v903 = vshll.u32 %v847, 16
      %v905 = vrot.slane %v903, 5
      %v906 = vor.u32 %v902, %v905
      %v907 = vrot.slane %v906, 4
      %v909 = vshll.u32 %v848, 16
      %v911 = vrot.slane %v909, 5
      %v912 = vsel %vm205, %v907, %v911
      %v914 = vshrl.u32 %v849, 16
      %v916 = vrot.slane %v914, 4
      %v917 = vshll.u32 %v849, 16
      %v919 = vrot.slane %v917, 5
      %v920 = vor.u32 %v916, %v919
      %v921 = vrot.slane %v920, 4
      %v923 = vshll.u32 %v850, 16
      %v925 = vrot.slane %v923, 5
      %v926 = vsel %vm205, %v921, %v925
      %v928 = vshrl.u32 %v851, 16
      %v930 = vrot.slane %v928, 4
      %v931 = vshll.u32 %v851, 16
      %v933 = vrot.slane %v931, 5
      %v934 = vor.u32 %v930, %v933
      %v935 = vrot.slane %v934, 4
      %v937 = vshll.u32 %v852, 16
      %v939 = vrot.slane %v937, 5
      %v940 = vsel %vm205, %v935, %v939
      %v942 = vshrl.u32 %v853, 16
      %v944 = vrot.slane %v942, 4
      %v945 = vshll.u32 %v853, 16
      %v947 = vrot.slane %v945, 5
      %v948 = vor.u32 %v944, %v947
      %v949 = vrot.slane %v948, 4
      %v951 = vshll.u32 %v854, 16
      %v953 = vrot.slane %v951, 5
      %v954 = vsel %vm205, %v949, %v953
      %v956 = vshrl.u32 %v855, 16
      %v958 = vrot.slane %v956, 4
      %v959 = vshll.u32 %v855, 16
      %v961 = vrot.slane %v959, 5
      %v962 = vor.u32 %v958, %v961
      %v963 = vrot.slane %v962, 4
      %v965 = vshll.u32 %v856, 16
      %v967 = vrot.slane %v965, 5
      %v968 = vsel %vm205, %v963, %v967
      %s969 = scalar_lea.vmem %s1, 256
      %v970 = vld [vmem:[%s969] sm:$0xf]
      %v971 = vld [vmem:[%s969 + $0x4] sm:$0xf]
      %v972 = vld [vmem:[%s969 + $0x8] sm:$0xf]
      %v973 = vld [vmem:[%s969 + $0xc] sm:$0xf]
      %v974 = vld [vmem:[%s969 + $0x10] sm:$0xf]
      %v975 = vld [vmem:[%s969 + $0x14] sm:$0xf]
      %v976 = vld [vmem:[%s969 + $0x18] sm:$0xf]
      %v977 = vld [vmem:[%s969 + $0x1c] sm:$0xf]
      %v978 = vld [vmem:[%s969 + $0x20] sm:$0xf]
      %v979 = vld [vmem:[%s969 + $0x24] sm:$0xf]
      %v980 = vld [vmem:[%s969 + $0x28] sm:$0xf]
      %v981 = vld [vmem:[%s969 + $0x2c] sm:$0xf]
      %v982 = vld [vmem:[%s969 + $0x30] sm:$0xf]
      %v983 = vld [vmem:[%s969 + $0x34] sm:$0xf]
      %v984 = vld [vmem:[%s969 + $0x38] sm:$0xf]
      %v985 = vld [vmem:[%s969 + $0x3c] sm:$0xf]
      %v986 = vunpack.c.l.b16 %v870
      %v987 = vunpack.c.l.b16 %v884
      %v988 = vunpack.c.l.b16 %v898
      %v989 = vunpack.c.l.b16 %v912
      %v990 = vunpack.c.l.b16 %v926
      %v991 = vunpack.c.l.b16 %v940
      %v992 = vunpack.c.l.b16 %v954
      %v993 = vunpack.c.l.b16 %v968
      %v994 = vpack.c.b16 %v987, %v986
      %v995 = vpack.c.b16 %v989, %v988
      %v996 = vpack.c.b16 %v991, %v990
      %v997 = vpack.c.b16 %v993, %v992
      %v1018 = vunpack.c.l.b16 %v970
      %v1019 = vunpack.c.l.b16 %v971
      %v1020 = vunpack.c.l.b16 %v972
      %v1021 = vunpack.c.l.b16 %v973
      %v1022 = vunpack.c.l.b16 %v974
      %v1023 = vunpack.c.l.b16 %v975
      %v1024 = vunpack.c.l.b16 %v976
      %v1025 = vunpack.c.l.b16 %v977
      %v1026 = vunpack.c.l.b16 %v978
      %v1027 = vunpack.c.l.b16 %v979
      %v1028 = vunpack.c.l.b16 %v980
      %v1029 = vunpack.c.l.b16 %v981
      %v1030 = vunpack.c.l.b16 %v982
      %v1031 = vunpack.c.l.b16 %v983
      %v1032 = vunpack.c.l.b16 %v984
      %v1033 = vunpack.c.l.b16 %v985
      %v1034 = vpack.c.b16 %v1019, %v1018
      %v1035 = vpack.c.b16 %v1021, %v1020
      %v1036 = vpack.c.b16 %v1023, %v1022
      %v1037 = vpack.c.b16 %v1025, %v1024
      %v1038 = vpack.c.b16 %v1027, %v1026
      %v1039 = vpack.c.b16 %v1029, %v1028
      %v1040 = vpack.c.b16 %v1031, %v1030
      %v1041 = vpack.c.b16 %v1033, %v1032
      %1050 = vmatpush.bf16.msra.mxu0 %v1041
      %1051 = vmatpush.bf16.msra.mxu0 %v1040
      %1052 = vmatpush.bf16.msra.mxu0 %v1039
      %1053 = vmatpush.bf16.msra.mxu0 %v1038
      %1054 = vmatpush.bf16.msra.mxu0 %v1037
      %1055 = vmatpush.bf16.msra.mxu0 %v1036
      %1056 = vmatpush.bf16.msra.mxu0 %v1035
      %1057 = vmatpush.bf16.msra.mxu0 %v1034
      %1058 = vmatmul.bf16.gmra.mxu0 %v994
      %v1059 = vpop.f32.mrf.mxu0
      %v1060 = vadd.f32 0.0, %v1059
      %v1061 = vpop.f32.mrf.mxu0
      %v1062 = vadd.f32 0.0, %v1061
      %1063 = vmatmul.bf16.gmra.mxu0 %v995
      %v1064 = vpop.f32.mrf.mxu0
      %v1065 = vadd.f32 0.0, %v1064
      %v1066 = vpop.f32.mrf.mxu0
      %v1067 = vadd.f32 0.0, %v1066
      %1068 = vmatmul.bf16.gmra.mxu0 %v996
      %v1069 = vpop.f32.mrf.mxu0
      %v1070 = vadd.f32 0.0, %v1069
      %v1071 = vpop.f32.mrf.mxu0
      %v1072 = vadd.f32 0.0, %v1071
      %1073 = vmatmul.bf16.gmra.mxu0 %v997
      %v1074 = vpop.f32.mrf.mxu0
      %v1075 = vadd.f32 0.0, %v1074
      %v1076 = vpop.f32.mrf.mxu0
      %v1077 = vadd.f32 0.0, %v1076
      %1078 = vdwg.mxu0
      %v1079 = vadd.f32 %v833, %v1060
      %v1080 = vadd.f32 %v834, %v1062
      %v1081 = vadd.f32 %v835, %v1065
      %v1082 = vadd.f32 %v836, %v1067
      %v1083 = vadd.f32 %v837, %v1070
      %v1084 = vadd.f32 %v838, %v1072
      %v1085 = vadd.f32 %v839, %v1075
      %v1086 = vadd.f32 %v840, %v1077
      %v1087 = vld [vmem:[%s706] sm:$0xe]
      %v1088 = vld [vmem:[%s706 + $0x8] sm:$0xe]
      %v1089 = vld [vmem:[%s706 + $0x10] sm:$0xe]
      %v1090 = vld [vmem:[%s706 + $0x18] sm:$0xe]
      %v1091 = vld [vmem:[%s706 + $0x20] sm:$0xe]
      %v1092 = vld [vmem:[%s706 + $0x28] sm:$0xe]
      %v1093 = vld [vmem:[%s706 + $0x30] sm:$0xe]
      %v1094 = vld [vmem:[%s706 + $0x38] sm:$0xe]
      %v1111 = vrot.slane %v1087, 5
      %v1112 = vrot.slane %v1111, 4
      %v1113 = vrot.slane %v842, 5
      %v1114 = vsel %vm555, %v1112, %v1113
      %v1115 = vrot.slane %v1088, 5
      %v1116 = vrot.slane %v1115, 4
      %v1117 = vrot.slane %v844, 5
      %v1118 = vsel %vm555, %v1116, %v1117
      %v1119 = vrot.slane %v1089, 5
      %v1120 = vrot.slane %v1119, 4
      %v1121 = vrot.slane %v846, 5
      %v1122 = vsel %vm555, %v1120, %v1121
      %v1123 = vrot.slane %v1090, 5
      %v1124 = vrot.slane %v1123, 4
      %v1125 = vrot.slane %v848, 5
      %v1126 = vsel %vm555, %v1124, %v1125
      %v1127 = vrot.slane %v1091, 5
      %v1128 = vrot.slane %v1127, 4
      %v1129 = vrot.slane %v850, 5
      %v1130 = vsel %vm555, %v1128, %v1129
      %v1131 = vrot.slane %v1092, 5
      %v1132 = vrot.slane %v1131, 4
      %v1133 = vrot.slane %v852, 5
      %v1134 = vsel %vm555, %v1132, %v1133
      %v1135 = vrot.slane %v1093, 5
      %v1136 = vrot.slane %v1135, 4
      %v1137 = vrot.slane %v854, 5
      %v1138 = vsel %vm555, %v1136, %v1137
      %v1139 = vrot.slane %v1094, 5
      %v1140 = vrot.slane %v1139, 4
      %v1141 = vrot.slane %v856, 5
      %v1142 = vsel %vm555, %v1140, %v1141
      %s1143 = scalar_lea.vmem %s1, 320
      %v1144 = vld [vmem:[%s1143] sm:$0xf]
      %v1145 = vld [vmem:[%s1143 + $0x4] sm:$0xf]
      %v1146 = vld [vmem:[%s1143 + $0x8] sm:$0xf]
      %v1147 = vld [vmem:[%s1143 + $0xc] sm:$0xf]
      %v1148 = vld [vmem:[%s1143 + $0x10] sm:$0xf]
      %v1149 = vld [vmem:[%s1143 + $0x14] sm:$0xf]
      %v1150 = vld [vmem:[%s1143 + $0x18] sm:$0xf]
      %v1151 = vld [vmem:[%s1143 + $0x1c] sm:$0xf]
      %v1152 = vld [vmem:[%s1143 + $0x20] sm:$0xf]
      %v1153 = vld [vmem:[%s1143 + $0x24] sm:$0xf]
      %v1154 = vld [vmem:[%s1143 + $0x28] sm:$0xf]
      %v1155 = vld [vmem:[%s1143 + $0x2c] sm:$0xf]
      %v1156 = vld [vmem:[%s1143 + $0x30] sm:$0xf]
      %v1157 = vld [vmem:[%s1143 + $0x34] sm:$0xf]
      %v1158 = vld [vmem:[%s1143 + $0x38] sm:$0xf]
      %v1159 = vld [vmem:[%s1143 + $0x3c] sm:$0xf]
      %v1160 = vunpack.c.l.b16 %v1114
      %v1161 = vunpack.c.l.b16 %v1118
      %v1162 = vunpack.c.l.b16 %v1122
      %v1163 = vunpack.c.l.b16 %v1126
      %v1164 = vunpack.c.l.b16 %v1130
      %v1165 = vunpack.c.l.b16 %v1134
      %v1166 = vunpack.c.l.b16 %v1138
      %v1167 = vunpack.c.l.b16 %v1142
      %v1168 = vpack.c.b16 %v1161, %v1160
      %v1169 = vpack.c.b16 %v1163, %v1162
      %v1170 = vpack.c.b16 %v1165, %v1164
      %v1171 = vpack.c.b16 %v1167, %v1166
      %v1192 = vunpack.c.l.b16 %v1144
      %v1193 = vunpack.c.l.b16 %v1145
      %v1194 = vunpack.c.l.b16 %v1146
      %v1195 = vunpack.c.l.b16 %v1147
      %v1196 = vunpack.c.l.b16 %v1148
      %v1197 = vunpack.c.l.b16 %v1149
      %v1198 = vunpack.c.l.b16 %v1150
      %v1199 = vunpack.c.l.b16 %v1151
      %v1200 = vunpack.c.l.b16 %v1152
      %v1201 = vunpack.c.l.b16 %v1153
      %v1202 = vunpack.c.l.b16 %v1154
      %v1203 = vunpack.c.l.b16 %v1155
      %v1204 = vunpack.c.l.b16 %v1156
      %v1205 = vunpack.c.l.b16 %v1157
      %v1206 = vunpack.c.l.b16 %v1158
      %v1207 = vunpack.c.l.b16 %v1159
      %v1208 = vpack.c.b16 %v1193, %v1192
      %v1209 = vpack.c.b16 %v1195, %v1194
      %v1210 = vpack.c.b16 %v1197, %v1196
      %v1211 = vpack.c.b16 %v1199, %v1198
      %v1212 = vpack.c.b16 %v1201, %v1200
      %v1213 = vpack.c.b16 %v1203, %v1202
      %v1214 = vpack.c.b16 %v1205, %v1204
      %v1215 = vpack.c.b16 %v1207, %v1206
      %1224 = vmatpush.bf16.msra.mxu0 %v1215
      %1225 = vmatpush.bf16.msra.mxu0 %v1214
      %1226 = vmatpush.bf16.msra.mxu0 %v1213
      %1227 = vmatpush.bf16.msra.mxu0 %v1212
      %1228 = vmatpush.bf16.msra.mxu0 %v1211
      %1229 = vmatpush.bf16.msra.mxu0 %v1210
      %1230 = vmatpush.bf16.msra.mxu0 %v1209
      %1231 = vmatpush.bf16.msra.mxu0 %v1208
      %1232 = vmatmul.bf16.gmra.mxu0 %v1168
      %v1233 = vpop.f32.mrf.mxu0
      %v1234 = vadd.f32 0.0, %v1233
      %v1235 = vpop.f32.mrf.mxu0
      %v1236 = vadd.f32 0.0, %v1235
      %1237 = vmatmul.bf16.gmra.mxu0 %v1169
      %v1238 = vpop.f32.mrf.mxu0
      %v1239 = vadd.f32 0.0, %v1238
      %v1240 = vpop.f32.mrf.mxu0
      %v1241 = vadd.f32 0.0, %v1240
      %1242 = vmatmul.bf16.gmra.mxu0 %v1170
      %v1243 = vpop.f32.mrf.mxu0
      %v1244 = vadd.f32 0.0, %v1243
      %v1245 = vpop.f32.mrf.mxu0
      %v1246 = vadd.f32 0.0, %v1245
      %1247 = vmatmul.bf16.gmra.mxu0 %v1171
      %v1248 = vpop.f32.mrf.mxu0
      %v1249 = vadd.f32 0.0, %v1248
      %v1250 = vpop.f32.mrf.mxu0
      %v1251 = vadd.f32 0.0, %v1250
      %1252 = vdwg.mxu0
      %v1253 = vadd.f32 %v1079, %v1234
      %v1254 = vadd.f32 %v1080, %v1236
      %v1255 = vadd.f32 %v1081, %v1239
      %v1256 = vadd.f32 %v1082, %v1241
      %v1257 = vadd.f32 %v1083, %v1244
      %v1258 = vadd.f32 %v1084, %v1246
      %v1259 = vadd.f32 %v1085, %v1249
      %v1260 = vadd.f32 %v1086, %v1251
      %s1261 = scalar_lea.vmem %s165, 16
      %v1262 = vld [vmem:[%s1261] sm:$0xf]
      %v1263 = vld [vmem:[%s1261 + $0x8] sm:$0xf]
      %v1264 = vld [vmem:[%s1261 + $0x10] sm:$0xf]
      %v1265 = vld [vmem:[%s1261 + $0x18] sm:$0xf]
      %v1266 = vld [vmem:[%s1261 + $0x20] sm:$0xf]
      %v1267 = vld [vmem:[%s1261 + $0x28] sm:$0xf]
      %v1268 = vld [vmem:[%s1261 + $0x30] sm:$0xf]
      %v1269 = vld [vmem:[%s1261 + $0x38] sm:$0xf]
      %s1270 = scalar_lea.vmem %s1, 384
      %v1271 = vld [vmem:[%s1270] sm:$0xf]
      %v1272 = vld [vmem:[%s1270 + $0x4] sm:$0xf]
      %v1273 = vld [vmem:[%s1270 + $0x8] sm:$0xf]
      %v1274 = vld [vmem:[%s1270 + $0xc] sm:$0xf]
      %v1275 = vld [vmem:[%s1270 + $0x10] sm:$0xf]
      %v1276 = vld [vmem:[%s1270 + $0x14] sm:$0xf]
      %v1277 = vld [vmem:[%s1270 + $0x18] sm:$0xf]
      %v1278 = vld [vmem:[%s1270 + $0x1c] sm:$0xf]
      %v1279 = vld [vmem:[%s1270 + $0x20] sm:$0xf]
      %v1280 = vld [vmem:[%s1270 + $0x24] sm:$0xf]
      %v1281 = vld [vmem:[%s1270 + $0x28] sm:$0xf]
      %v1282 = vld [vmem:[%s1270 + $0x2c] sm:$0xf]
      %v1283 = vld [vmem:[%s1270 + $0x30] sm:$0xf]
      %v1284 = vld [vmem:[%s1270 + $0x34] sm:$0xf]
      %v1285 = vld [vmem:[%s1270 + $0x38] sm:$0xf]
      %v1286 = vld [vmem:[%s1270 + $0x3c] sm:$0xf]
      %v1295 = vunpack.c.l.b16 %v1262
      %v1296 = vunpack.c.l.b16 %v1263
      %v1297 = vunpack.c.l.b16 %v1264
      %v1298 = vunpack.c.l.b16 %v1265
      %v1299 = vunpack.c.l.b16 %v1266
      %v1300 = vunpack.c.l.b16 %v1267
      %v1301 = vunpack.c.l.b16 %v1268
      %v1302 = vunpack.c.l.b16 %v1269
      %v1303 = vpack.c.b16 %v1296, %v1295
      %v1304 = vpack.c.b16 %v1298, %v1297
      %v1305 = vpack.c.b16 %v1300, %v1299
      %v1306 = vpack.c.b16 %v1302, %v1301
      %v1327 = vunpack.c.l.b16 %v1271
      %v1328 = vunpack.c.l.b16 %v1272
      %v1329 = vunpack.c.l.b16 %v1273
      %v1330 = vunpack.c.l.b16 %v1274
      %v1331 = vunpack.c.l.b16 %v1275
      %v1332 = vunpack.c.l.b16 %v1276
      %v1333 = vunpack.c.l.b16 %v1277
      %v1334 = vunpack.c.l.b16 %v1278
      %v1335 = vunpack.c.l.b16 %v1279
      %v1336 = vunpack.c.l.b16 %v1280
      %v1337 = vunpack.c.l.b16 %v1281
      %v1338 = vunpack.c.l.b16 %v1282
      %v1339 = vunpack.c.l.b16 %v1283
      %v1340 = vunpack.c.l.b16 %v1284
      %v1341 = vunpack.c.l.b16 %v1285
      %v1342 = vunpack.c.l.b16 %v1286
      %v1343 = vpack.c.b16 %v1328, %v1327
      %v1344 = vpack.c.b16 %v1330, %v1329
      %v1345 = vpack.c.b16 %v1332, %v1331
      %v1346 = vpack.c.b16 %v1334, %v1333
      %v1347 = vpack.c.b16 %v1336, %v1335
      %v1348 = vpack.c.b16 %v1338, %v1337
      %v1349 = vpack.c.b16 %v1340, %v1339
      %v1350 = vpack.c.b16 %v1342, %v1341
      %1359 = vmatpush.bf16.msra.mxu0 %v1350
      %1360 = vmatpush.bf16.msra.mxu0 %v1349
      %1361 = vmatpush.bf16.msra.mxu0 %v1348
      %1362 = vmatpush.bf16.msra.mxu0 %v1347
      %1363 = vmatpush.bf16.msra.mxu0 %v1346
      %1364 = vmatpush.bf16.msra.mxu0 %v1345
      %1365 = vmatpush.bf16.msra.mxu0 %v1344
      %1366 = vmatpush.bf16.msra.mxu0 %v1343
      %1367 = vmatmul.bf16.gmra.mxu0 %v1303
      %v1368 = vpop.f32.mrf.mxu0
      %v1369 = vadd.f32 0.0, %v1368
      %v1370 = vpop.f32.mrf.mxu0
      %v1371 = vadd.f32 0.0, %v1370
      %1372 = vmatmul.bf16.gmra.mxu0 %v1304
      %v1373 = vpop.f32.mrf.mxu0
      %v1374 = vadd.f32 0.0, %v1373
      %v1375 = vpop.f32.mrf.mxu0
      %v1376 = vadd.f32 0.0, %v1375
      %1377 = vmatmul.bf16.gmra.mxu0 %v1305
      %v1378 = vpop.f32.mrf.mxu0
      %v1379 = vadd.f32 0.0, %v1378
      %v1380 = vpop.f32.mrf.mxu0
      %v1381 = vadd.f32 0.0, %v1380
      %1382 = vmatmul.bf16.gmra.mxu0 %v1306
      %v1383 = vpop.f32.mrf.mxu0
      %v1384 = vadd.f32 0.0, %v1383
      %v1385 = vpop.f32.mrf.mxu0
      %v1386 = vadd.f32 0.0, %v1385
      %1387 = vdwg.mxu0
      %v1388 = vadd.f32 %v1253, %v1369
      %v1389 = vadd.f32 %v1254, %v1371
      %v1390 = vadd.f32 %v1255, %v1374
      %v1391 = vadd.f32 %v1256, %v1376
      %v1392 = vadd.f32 %v1257, %v1379
      %v1393 = vadd.f32 %v1258, %v1381
      %v1394 = vadd.f32 %v1259, %v1384
      %v1395 = vadd.f32 %v1260, %v1386
      %v1396 = vld [vmem:[%s1261] sm:$0xf]
      %v1397 = vld [vmem:[%s1261 + $0x4] sm:$0x1]
      %v1398 = vld [vmem:[%s1261 + $0x8] sm:$0xf]
      %v1399 = vld [vmem:[%s1261 + $0xc] sm:$0x1]
      %v1400 = vld [vmem:[%s1261 + $0x10] sm:$0xf]
      %v1401 = vld [vmem:[%s1261 + $0x14] sm:$0x1]
      %v1402 = vld [vmem:[%s1261 + $0x18] sm:$0xf]
      %v1403 = vld [vmem:[%s1261 + $0x1c] sm:$0x1]
      %v1404 = vld [vmem:[%s1261 + $0x20] sm:$0xf]
      %v1405 = vld [vmem:[%s1261 + $0x24] sm:$0x1]
      %v1406 = vld [vmem:[%s1261 + $0x28] sm:$0xf]
      %v1407 = vld [vmem:[%s1261 + $0x2c] sm:$0x1]
      %v1408 = vld [vmem:[%s1261 + $0x30] sm:$0xf]
      %v1409 = vld [vmem:[%s1261 + $0x34] sm:$0x1]
      %v1410 = vld [vmem:[%s1261 + $0x38] sm:$0xf]
      %v1411 = vld [vmem:[%s1261 + $0x3c] sm:$0x1]
      %v1413 = vshrl.u32 %v1396, 16
      %v1415 = vrot.slane %v1413, 4
      %v1416 = vshll.u32 %v1396, 16
      %v1418 = vrot.slane %v1416, 5
      %v1419 = vor.u32 %v1415, %v1418
      %v1420 = vrot.slane %v1419, 4
      %v1422 = vshll.u32 %v1397, 16
      %v1424 = vrot.slane %v1422, 5
      %v1425 = vsel %vm205, %v1420, %v1424
      %v1427 = vshrl.u32 %v1398, 16
      %v1429 = vrot.slane %v1427, 4
      %v1430 = vshll.u32 %v1398, 16
      %v1432 = vrot.slane %v1430, 5
      %v1433 = vor.u32 %v1429, %v1432
      %v1434 = vrot.slane %v1433, 4
      %v1436 = vshll.u32 %v1399, 16
      %v1438 = vrot.slane %v1436, 5
      %v1439 = vsel %vm205, %v1434, %v1438
      %v1441 = vshrl.u32 %v1400, 16
      %v1443 = vrot.slane %v1441, 4
      %v1444 = vshll.u32 %v1400, 16
      %v1446 = vrot.slane %v1444, 5
      %v1447 = vor.u32 %v1443, %v1446
      %v1448 = vrot.slane %v1447, 4
      %v1450 = vshll.u32 %v1401, 16
      %v1452 = vrot.slane %v1450, 5
      %v1453 = vsel %vm205, %v1448, %v1452
      %v1455 = vshrl.u32 %v1402, 16
      %v1457 = vrot.slane %v1455, 4
      %v1458 = vshll.u32 %v1402, 16
      %v1460 = vrot.slane %v1458, 5
      %v1461 = vor.u32 %v1457, %v1460
      %v1462 = vrot.slane %v1461, 4
      %v1464 = vshll.u32 %v1403, 16
      %v1466 = vrot.slane %v1464, 5
      %v1467 = vsel %vm205, %v1462, %v1466
      %v1469 = vshrl.u32 %v1404, 16
      %v1471 = vrot.slane %v1469, 4
      %v1472 = vshll.u32 %v1404, 16
      %v1474 = vrot.slane %v1472, 5
      %v1475 = vor.u32 %v1471, %v1474
      %v1476 = vrot.slane %v1475, 4
      %v1478 = vshll.u32 %v1405, 16
      %v1480 = vrot.slane %v1478, 5
      %v1481 = vsel %vm205, %v1476, %v1480
      %v1483 = vshrl.u32 %v1406, 16
      %v1485 = vrot.slane %v1483, 4
      %v1486 = vshll.u32 %v1406, 16
      %v1488 = vrot.slane %v1486, 5
      %v1489 = vor.u32 %v1485, %v1488
      %v1490 = vrot.slane %v1489, 4
      %v1492 = vshll.u32 %v1407, 16
      %v1494 = vrot.slane %v1492, 5
      %v1495 = vsel %vm205, %v1490, %v1494
      %v1497 = vshrl.u32 %v1408, 16
      %v1499 = vrot.slane %v1497, 4
      %v1500 = vshll.u32 %v1408, 16
      %v1502 = vrot.slane %v1500, 5
      %v1503 = vor.u32 %v1499, %v1502
      %v1504 = vrot.slane %v1503, 4
      %v1506 = vshll.u32 %v1409, 16
      %v1508 = vrot.slane %v1506, 5
      %v1509 = vsel %vm205, %v1504, %v1508
      %v1511 = vshrl.u32 %v1410, 16
      %v1513 = vrot.slane %v1511, 4
      %v1514 = vshll.u32 %v1410, 16
      %v1516 = vrot.slane %v1514, 5
      %v1517 = vor.u32 %v1513, %v1516
      %v1518 = vrot.slane %v1517, 4
      %v1520 = vshll.u32 %v1411, 16
      %v1522 = vrot.slane %v1520, 5
      %v1523 = vsel %vm205, %v1518, %v1522
      %s1524 = scalar_lea.vmem %s1, 448
      %v1525 = vld [vmem:[%s1524] sm:$0xf]
      %v1526 = vld [vmem:[%s1524 + $0x4] sm:$0xf]
      %v1527 = vld [vmem:[%s1524 + $0x8] sm:$0xf]
      %v1528 = vld [vmem:[%s1524 + $0xc] sm:$0xf]
      %v1529 = vld [vmem:[%s1524 + $0x10] sm:$0xf]
      %v1530 = vld [vmem:[%s1524 + $0x14] sm:$0xf]
      %v1531 = vld [vmem:[%s1524 + $0x18] sm:$0xf]
      %v1532 = vld [vmem:[%s1524 + $0x1c] sm:$0xf]
      %v1533 = vld [vmem:[%s1524 + $0x20] sm:$0xf]
      %v1534 = vld [vmem:[%s1524 + $0x24] sm:$0xf]
      %v1535 = vld [vmem:[%s1524 + $0x28] sm:$0xf]
      %v1536 = vld [vmem:[%s1524 + $0x2c] sm:$0xf]
      %v1537 = vld [vmem:[%s1524 + $0x30] sm:$0xf]
      %v1538 = vld [vmem:[%s1524 + $0x34] sm:$0xf]
      %v1539 = vld [vmem:[%s1524 + $0x38] sm:$0xf]
      %v1540 = vld [vmem:[%s1524 + $0x3c] sm:$0xf]
      %v1541 = vunpack.c.l.b16 %v1425
      %v1542 = vunpack.c.l.b16 %v1439
      %v1543 = vunpack.c.l.b16 %v1453
      %v1544 = vunpack.c.l.b16 %v1467
      %v1545 = vunpack.c.l.b16 %v1481
      %v1546 = vunpack.c.l.b16 %v1495
      %v1547 = vunpack.c.l.b16 %v1509
      %v1548 = vunpack.c.l.b16 %v1523
      %v1549 = vpack.c.b16 %v1542, %v1541
      %v1550 = vpack.c.b16 %v1544, %v1543
      %v1551 = vpack.c.b16 %v1546, %v1545
      %v1552 = vpack.c.b16 %v1548, %v1547
      %v1573 = vunpack.c.l.b16 %v1525
      %v1574 = vunpack.c.l.b16 %v1526
      %v1575 = vunpack.c.l.b16 %v1527
      %v1576 = vunpack.c.l.b16 %v1528
      %v1577 = vunpack.c.l.b16 %v1529
      %v1578 = vunpack.c.l.b16 %v1530
      %v1579 = vunpack.c.l.b16 %v1531
      %v1580 = vunpack.c.l.b16 %v1532
      %v1581 = vunpack.c.l.b16 %v1533
      %v1582 = vunpack.c.l.b16 %v1534
      %v1583 = vunpack.c.l.b16 %v1535
      %v1584 = vunpack.c.l.b16 %v1536
      %v1585 = vunpack.c.l.b16 %v1537
      %v1586 = vunpack.c.l.b16 %v1538
      %v1587 = vunpack.c.l.b16 %v1539
      %v1588 = vunpack.c.l.b16 %v1540
      %v1589 = vpack.c.b16 %v1574, %v1573
      %v1590 = vpack.c.b16 %v1576, %v1575
      %v1591 = vpack.c.b16 %v1578, %v1577
      %v1592 = vpack.c.b16 %v1580, %v1579
      %v1593 = vpack.c.b16 %v1582, %v1581
      %v1594 = vpack.c.b16 %v1584, %v1583
      %v1595 = vpack.c.b16 %v1586, %v1585
      %v1596 = vpack.c.b16 %v1588, %v1587
      %1605 = vmatpush.bf16.msra.mxu0 %v1596
      %1606 = vmatpush.bf16.msra.mxu0 %v1595
      %1607 = vmatpush.bf16.msra.mxu0 %v1594
      %1608 = vmatpush.bf16.msra.mxu0 %v1593
      %1609 = vmatpush.bf16.msra.mxu0 %v1592
      %1610 = vmatpush.bf16.msra.mxu0 %v1591
      %1611 = vmatpush.bf16.msra.mxu0 %v1590
      %1612 = vmatpush.bf16.msra.mxu0 %v1589
      %1613 = vmatmul.bf16.gmra.mxu0 %v1549
      %v1614 = vpop.f32.mrf.mxu0
      %v1615 = vadd.f32 0.0, %v1614
      %v1616 = vpop.f32.mrf.mxu0
      %v1617 = vadd.f32 0.0, %v1616
      %1618 = vmatmul.bf16.gmra.mxu0 %v1550
      %v1619 = vpop.f32.mrf.mxu0
      %v1620 = vadd.f32 0.0, %v1619
      %v1621 = vpop.f32.mrf.mxu0
      %v1622 = vadd.f32 0.0, %v1621
      %1623 = vmatmul.bf16.gmra.mxu0 %v1551
      %v1624 = vpop.f32.mrf.mxu0
      %v1625 = vadd.f32 0.0, %v1624
      %v1626 = vpop.f32.mrf.mxu0
      %v1627 = vadd.f32 0.0, %v1626
      %1628 = vmatmul.bf16.gmra.mxu0 %v1552
      %v1629 = vpop.f32.mrf.mxu0
      %v1630 = vadd.f32 0.0, %v1629
      %v1631 = vpop.f32.mrf.mxu0
      %v1632 = vadd.f32 0.0, %v1631
      %1633 = vdwg.mxu0
      %v1634 = vadd.f32 %v1388, %v1615
      %v1635 = vadd.f32 %v1389, %v1617
      %v1636 = vadd.f32 %v1390, %v1620
      %v1637 = vadd.f32 %v1391, %v1622
      %v1638 = vadd.f32 %v1392, %v1625
      %v1639 = vadd.f32 %v1393, %v1627
      %v1640 = vadd.f32 %v1394, %v1630
      %v1641 = vadd.f32 %v1395, %v1632
      %v1642 = vld [vmem:[%s1261] sm:$0xe]
      %v1643 = vld [vmem:[%s1261 + $0x8] sm:$0xe]
      %v1644 = vld [vmem:[%s1261 + $0x10] sm:$0xe]
      %v1645 = vld [vmem:[%s1261 + $0x18] sm:$0xe]
      %v1646 = vld [vmem:[%s1261 + $0x20] sm:$0xe]
      %v1647 = vld [vmem:[%s1261 + $0x28] sm:$0xe]
      %v1648 = vld [vmem:[%s1261 + $0x30] sm:$0xe]
      %v1649 = vld [vmem:[%s1261 + $0x38] sm:$0xe]
      %v1666 = vrot.slane %v1642, 5
      %v1667 = vrot.slane %v1666, 4
      %v1668 = vrot.slane %v1397, 5
      %v1669 = vsel %vm555, %v1667, %v1668
      %v1670 = vrot.slane %v1643, 5
      %v1671 = vrot.slane %v1670, 4
      %v1672 = vrot.slane %v1399, 5
      %v1673 = vsel %vm555, %v1671, %v1672
      %v1674 = vrot.slane %v1644, 5
      %v1675 = vrot.slane %v1674, 4
      %v1676 = vrot.slane %v1401, 5
      %v1677 = vsel %vm555, %v1675, %v1676
      %v1678 = vrot.slane %v1645, 5
      %v1679 = vrot.slane %v1678, 4
      %v1680 = vrot.slane %v1403, 5
      %v1681 = vsel %vm555, %v1679, %v1680
      %v1682 = vrot.slane %v1646, 5
      %v1683 = vrot.slane %v1682, 4
      %v1684 = vrot.slane %v1405, 5
      %v1685 = vsel %vm555, %v1683, %v1684
      %v1686 = vrot.slane %v1647, 5
      %v1687 = vrot.slane %v1686, 4
      %v1688 = vrot.slane %v1407, 5
      %v1689 = vsel %vm555, %v1687, %v1688
      %v1690 = vrot.slane %v1648, 5
      %v1691 = vrot.slane %v1690, 4
      %v1692 = vrot.slane %v1409, 5
      %v1693 = vsel %vm555, %v1691, %v1692
      %v1694 = vrot.slane %v1649, 5
      %v1695 = vrot.slane %v1694, 4
      %v1696 = vrot.slane %v1411, 5
      %v1697 = vsel %vm555, %v1695, %v1696
      %s1698 = scalar_lea.vmem %s1, 512
      %v1699 = vld [vmem:[%s1698] sm:$0xf]
      %v1700 = vld [vmem:[%s1698 + $0x4] sm:$0xf]
      %v1701 = vld [vmem:[%s1698 + $0x8] sm:$0xf]
      %v1702 = vld [vmem:[%s1698 + $0xc] sm:$0xf]
      %v1703 = vld [vmem:[%s1698 + $0x10] sm:$0xf]
      %v1704 = vld [vmem:[%s1698 + $0x14] sm:$0xf]
      %v1705 = vld [vmem:[%s1698 + $0x18] sm:$0xf]
      %v1706 = vld [vmem:[%s1698 + $0x1c] sm:$0xf]
      %v1707 = vld [vmem:[%s1698 + $0x20] sm:$0xf]
      %v1708 = vld [vmem:[%s1698 + $0x24] sm:$0xf]
      %v1709 = vld [vmem:[%s1698 + $0x28] sm:$0xf]
      %v1710 = vld [vmem:[%s1698 + $0x2c] sm:$0xf]
      %v1711 = vld [vmem:[%s1698 + $0x30] sm:$0xf]
      %v1712 = vld [vmem:[%s1698 + $0x34] sm:$0xf]
      %v1713 = vld [vmem:[%s1698 + $0x38] sm:$0xf]
      %v1714 = vld [vmem:[%s1698 + $0x3c] sm:$0xf]
      %v1715 = vunpack.c.l.b16 %v1669
      %v1716 = vunpack.c.l.b16 %v1673
      %v1717 = vunpack.c.l.b16 %v1677
      %v1718 = vunpack.c.l.b16 %v1681
      %v1719 = vunpack.c.l.b16 %v1685
      %v1720 = vunpack.c.l.b16 %v1689
      %v1721 = vunpack.c.l.b16 %v1693
      %v1722 = vunpack.c.l.b16 %v1697
      %v1723 = vpack.c.b16 %v1716, %v1715
      %v1724 = vpack.c.b16 %v1718, %v1717
      %v1725 = vpack.c.b16 %v1720, %v1719
      %v1726 = vpack.c.b16 %v1722, %v1721
      %v1747 = vunpack.c.l.b16 %v1699
      %v1748 = vunpack.c.l.b16 %v1700
      %v1749 = vunpack.c.l.b16 %v1701
      %v1750 = vunpack.c.l.b16 %v1702
      %v1751 = vunpack.c.l.b16 %v1703
      %v1752 = vunpack.c.l.b16 %v1704
      %v1753 = vunpack.c.l.b16 %v1705
      %v1754 = vunpack.c.l.b16 %v1706
      %v1755 = vunpack.c.l.b16 %v1707
      %v1756 = vunpack.c.l.b16 %v1708
      %v1757 = vunpack.c.l.b16 %v1709
      %v1758 = vunpack.c.l.b16 %v1710
      %v1759 = vunpack.c.l.b16 %v1711
      %v1760 = vunpack.c.l.b16 %v1712
      %v1761 = vunpack.c.l.b16 %v1713
      %v1762 = vunpack.c.l.b16 %v1714
      %v1763 = vpack.c.b16 %v1748, %v1747
      %v1764 = vpack.c.b16 %v1750, %v1749
      %v1765 = vpack.c.b16 %v1752, %v1751
      %v1766 = vpack.c.b16 %v1754, %v1753
      %v1767 = vpack.c.b16 %v1756, %v1755
      %v1768 = vpack.c.b16 %v1758, %v1757
      %v1769 = vpack.c.b16 %v1760, %v1759
      %v1770 = vpack.c.b16 %v1762, %v1761
      %1779 = vmatpush.bf16.msra.mxu0 %v1770
      %1780 = vmatpush.bf16.msra.mxu0 %v1769
      %1781 = vmatpush.bf16.msra.mxu0 %v1768
      %1782 = vmatpush.bf16.msra.mxu0 %v1767
      %1783 = vmatpush.bf16.msra.mxu0 %v1766
      %1784 = vmatpush.bf16.msra.mxu0 %v1765
      %1785 = vmatpush.bf16.msra.mxu0 %v1764
      %1786 = vmatpush.bf16.msra.mxu0 %v1763
      %1787 = vmatmul.bf16.gmra.mxu0 %v1723
      %v1788 = vpop.f32.mrf.mxu0
      %v1789 = vadd.f32 0.0, %v1788
      %v1790 = vpop.f32.mrf.mxu0
      %v1791 = vadd.f32 0.0, %v1790
      %1792 = vmatmul.bf16.gmra.mxu0 %v1724
      %v1793 = vpop.f32.mrf.mxu0
      %v1794 = vadd.f32 0.0, %v1793
      %v1795 = vpop.f32.mrf.mxu0
      %v1796 = vadd.f32 0.0, %v1795
      %1797 = vmatmul.bf16.gmra.mxu0 %v1725
      %v1798 = vpop.f32.mrf.mxu0
      %v1799 = vadd.f32 0.0, %v1798
      %v1800 = vpop.f32.mrf.mxu0
      %v1801 = vadd.f32 0.0, %v1800
      %1802 = vmatmul.bf16.gmra.mxu0 %v1726
      %v1803 = vpop.f32.mrf.mxu0
      %v1804 = vadd.f32 0.0, %v1803
      %v1805 = vpop.f32.mrf.mxu0
      %v1806 = vadd.f32 0.0, %v1805
      %1807 = vdwg.mxu0
      %v1808 = vadd.f32 %v1634, %v1789
      %v1809 = vadd.f32 %v1635, %v1791
      %v1810 = vadd.f32 %v1636, %v1794
      %v1811 = vadd.f32 %v1637, %v1796
      %v1812 = vadd.f32 %v1638, %v1799
      %v1813 = vadd.f32 %v1639, %v1801
      %v1814 = vadd.f32 %v1640, %v1804
      %v1815 = vadd.f32 %v1641, %v1806
      %v1816 = vld [vmem:[%s2] sm:$0x1]
      %v1818 = vperm.slane %v1816, 0
      %v1820 = vadd.f32 %v1808, %v1818
      %v1821 = vadd.f32 %v1809, %v1818
      %v1822 = vadd.f32 %v1810, %v1818
      %v1823 = vadd.f32 %v1811, %v1818
      %v1824 = vadd.f32 %v1812, %v1818
      %v1825 = vadd.f32 %v1813, %v1818
      %v1826 = vadd.f32 %v1814, %v1818
      %v1827 = vadd.f32 %v1815, %v1818
      %v1828 = vmax.f32 %v1820, 0.0
      %v1829 = vmax.f32 %v1821, 0.0
      %v1830 = vmax.f32 %v1822, 0.0
      %v1831 = vmax.f32 %v1823, 0.0
      %v1832 = vmax.f32 %v1824, 0.0
      %v1833 = vmax.f32 %v1825, 0.0
      %v1834 = vmax.f32 %v1826, 0.0
      %v1835 = vmax.f32 %v1827, 0.0
      %v1836 = vpack.c.bf16 %v1828, %v1828
      %v1837 = vpack.c.bf16 %v1829, %v1829
      %v1838 = vpack.c.bf16 %v1830, %v1830
      %v1839 = vpack.c.bf16 %v1831, %v1831
      %v1840 = vpack.c.bf16 %v1832, %v1832
      %v1841 = vpack.c.bf16 %v1833, %v1833
      %v1842 = vpack.c.bf16 %v1834, %v1834
      %v1843 = vpack.c.bf16 %v1835, %v1835
      %1844 = vst [vmem:[%s170] sm:$0xf] %v1836
      %1845 = vst [vmem:[%s170 + $0x4] sm:$0xf] %v1837
      %1846 = vst [vmem:[%s170 + $0x8] sm:$0xf] %v1838
      %1847 = vst [vmem:[%s170 + $0xc] sm:$0xf] %v1839
      %1848 = vst [vmem:[%s170 + $0x10] sm:$0xf] %v1840
      %1849 = vst [vmem:[%s170 + $0x14] sm:$0xf] %v1841
      %1850 = vst [vmem:[%s170 + $0x18] sm:$0xf] %v1842
      %1851 = vst [vmem:[%s170 + $0x1c] sm:$0xf] %v1843
      %p1852 = scmp.lt.s32.totalorder %s14, 1
      %s1853 = scalar_select %p1852, %s14, 1
      %s1854 = smul.addr %s1853, 8
      %s1855 = smul.addr %s1854, 4
      %s1856 = scalar_lea.vmem %s3, %s1855
      // Predicated region
      $region33: #{resnext_forward.12} parent=31 // pred_check
        %p1857 = pneg %p100
      $region34: #{resnext_forward.12} parent=31 // pred_check_branch
        %1859 = sbr.rel (%p1857) target = $region36
      $region35: #{resnext_forward.12} parent=31 // pred_region
        _
      $region36: #{resnext_forward.12} parent=31 // pred_fallthru
        _
    $region32: #{resnext_forward.12} parent=5 // pred_fallthru
      _
    %p1860 = scmp.le.s32.totalorder 2, %s9
    // Predicated region
    $region37: #{resnext_forward.12} parent=5 // pred_check
      %p1861 = pneg %p1860
    $region38: #{resnext_forward.12} parent=5 // pred_check_branch
      %1863 = sbr.rel (%p1861) target = $region40
    $region39: #{resnext_forward.12} parent=5 // pred_region
      %s1864 = ssub.s32 %s9, 2
      // Predicated region
      $region41: #{resnext_forward.12} parent=39 // pred_check
        %p1865 = pneg %p106
      $region42: #{resnext_forward.12} parent=39 // pred_check_branch
        %1867 = sbr.rel (%p1865) target = $region44
      $region43: #{resnext_forward.12} parent=39 // pred_region
        %p1868 = scmp.lt.s32.totalorder %s15, 1
        %s1869 = scalar_select %p1868, %s15, 1
        %s1870 = smul.addr %s1869, 8
        %s1871 = smul.addr %s1870, 4
        %s1872 = scalar_lea.vmem %s3, %s1871
      $region44: #{resnext_forward.12} parent=39 // pred_fallthru
        _
    $region40: #{resnext_forward.12} parent=5 // pred_fallthru
      _
  $region6: #{resnext_forward.12} parent=0 // loop_footer
    %s13 = sadd.s32 1, %s9
  $region7: #{resnext_forward.12} parent=0 // loop_footer_branch
    %8 = sbr.rel target = $region3
  $region8: #{resnext_forward.12} parent=0 // loop_exit
    _

// kernel: resnext_forward.16
$region0: #{resnext_forward.16}
  #allocation0 [shape = 'u32[]', space=smem, size = 0x4, offset = 0x4, fixed_abs, tag = 'smem constant byte address 0x4 - core index']
  #allocation1 [shape = 'u32[72,128]{1,0:T(1,128)}', space=vmem, size = 0x9000, scoped, tag = 'internal scratch']
  %s0 = inlined_call_operand.vmem [shape: bf16[32,128], index: 0, kind: input, shape index: {}]
  %s1 = inlined_call_operand.vmem [shape: bf16[128,128], index: 1, kind: input, shape index: {}]
  %s2 = inlined_call_operand.vmem [shape: f32[1,128], index: 2, kind: input, shape index: {}]
  %s3 = inlined_call_operand.vmem [shape: bf16[32,128], index: 3, kind: input, shape index: {}]
  %s4 = inlined_call_operand.vmem [shape: bf16[128,128], index: 4, kind: input, shape index: {}]
  %s5 = inlined_call_operand.vmem [shape: f32[1,128], index: 5, kind: input, shape index: {}]
  %s6 = inlined_call_operand.vmem [shape: bf16[32,128], index: 6, kind: output, shape index: {}]
  %s7 = sld [smem:[#allocation0]]
  $region34: #{resnext_forward.16} parent=0
    _
  %s9 = ssub.s32 1, %s7
  %s10 = scalar_select 0, %s9, %s7
  // Predicated region
  $region2: #{resnext_forward.16} parent=0 // pred_check
    _
  $region3: #{resnext_forward.16} parent=0 // pred_check_branch
    %12 = sbr.rel (0) target = $region5
  $region4: #{resnext_forward.16} parent=0 // pred_region
    _
  $region5: #{resnext_forward.16} parent=0 // pred_fallthru
    _
  // Predicated region
  $region6: #{resnext_forward.16} parent=0 // pred_check
    _
  $region7: #{resnext_forward.16} parent=0 // pred_check_branch
    %14 = sbr.rel (0) target = $region9
  $region8: #{resnext_forward.16} parent=0 // pred_region
    _
  $region9: #{resnext_forward.16} parent=0 // pred_fallthru
    _
  // Predicated region
  $region10: #{resnext_forward.16} parent=0 // pred_check
    _
  $region11: #{resnext_forward.16} parent=0 // pred_check_branch
    %16 = sbr.rel (0) target = $region13
  $region12: #{resnext_forward.16} parent=0 // pred_region
    _
  $region13: #{resnext_forward.16} parent=0 // pred_fallthru
    _
  // Predicated region
  $region14: #{resnext_forward.16} parent=0 // pred_check
    _
  $region15: #{resnext_forward.16} parent=0 // pred_check_branch
    %18 = sbr.rel (0) target = $region17
  $region16: #{resnext_forward.16} parent=0 // pred_region
    _
  $region17: #{resnext_forward.16} parent=0 // pred_fallthru
    _
  // Predicated region
  $region18: #{resnext_forward.16} parent=0 // pred_check
    _
  $region19: #{resnext_forward.16} parent=0 // pred_check_branch
    %20 = sbr.rel (0) target = $region21
  $region20: #{resnext_forward.16} parent=0 // pred_region
    _
  $region21: #{resnext_forward.16} parent=0 // pred_fallthru
    _
  // Predicated region
  $region22: #{resnext_forward.16} parent=0 // pred_check
    _
  $region23: #{resnext_forward.16} parent=0 // pred_check_branch
    %22 = sbr.rel (0) target = $region25
  $region24: #{resnext_forward.16} parent=0 // pred_region
    _
  $region25: #{resnext_forward.16} parent=0 // pred_fallthru
    _
  %v23 = vld [vmem:[%s0] sm:$0xf]
  %v24 = vld [vmem:[%s0 + $0x4] sm:$0xf]
  %v25 = vld [vmem:[%s0 + $0x8] sm:$0xf]
  %v26 = vld [vmem:[%s0 + $0xc] sm:$0xf]
  %v27 = vld [vmem:[%s1] sm:$0xf]
  %v28 = vld [vmem:[%s1 + $0x4] sm:$0xf]
  %v29 = vld [vmem:[%s1 + $0x8] sm:$0xf]
  %v30 = vld [vmem:[%s1 + $0xc] sm:$0xf]
  %v31 = vld [vmem:[%s1 + $0x10] sm:$0xf]
  %v32 = vld [vmem:[%s1 + $0x14] sm:$0xf]
  %v33 = vld [vmem:[%s1 + $0x18] sm:$0xf]
  %v34 = vld [vmem:[%s1 + $0x1c] sm:$0xf]
  %v35 = vld [vmem:[%s1 + $0x20] sm:$0xf]
  %v36 = vld [vmem:[%s1 + $0x24] sm:$0xf]
  %v37 = vld [vmem:[%s1 + $0x28] sm:$0xf]
  %v38 = vld [vmem:[%s1 + $0x2c] sm:$0xf]
  %v39 = vld [vmem:[%s1 + $0x30] sm:$0xf]
  %v40 = vld [vmem:[%s1 + $0x34] sm:$0xf]
  %v41 = vld [vmem:[%s1 + $0x38] sm:$0xf]
  %v42 = vld [vmem:[%s1 + $0x3c] sm:$0xf]
  %v43 = vld [vmem:[%s3] sm:$0xf]
  %v44 = vld [vmem:[%s3 + $0x4] sm:$0xf]
  %v45 = vld [vmem:[%s3 + $0x8] sm:$0xf]
  %v46 = vld [vmem:[%s3 + $0xc] sm:$0xf]
  %v47 = vld [vmem:[%s4] sm:$0xf]
  %v48 = vld [vmem:[%s4 + $0x4] sm:$0xf]
  %v49 = vld [vmem:[%s4 + $0x8] sm:$0xf]
  %v50 = vld [vmem:[%s4 + $0xc] sm:$0xf]
  %v51 = vld [vmem:[%s4 + $0x10] sm:$0xf]
  %v52 = vld [vmem:[%s4 + $0x14] sm:$0xf]
  %v53 = vld [vmem:[%s4 + $0x18] sm:$0xf]
  %v54 = vld [vmem:[%s4 + $0x1c] sm:$0xf]
  %v55 = vld [vmem:[%s4 + $0x20] sm:$0xf]
  %v56 = vld [vmem:[%s4 + $0x24] sm:$0xf]
  %v57 = vld [vmem:[%s4 + $0x28] sm:$0xf]
  %v58 = vld [vmem:[%s4 + $0x2c] sm:$0xf]
  %v59 = vld [vmem:[%s4 + $0x30] sm:$0xf]
  %v60 = vld [vmem:[%s4 + $0x34] sm:$0xf]
  %v61 = vld [vmem:[%s4 + $0x38] sm:$0xf]
  %v62 = vld [vmem:[%s4 + $0x3c] sm:$0xf]
  %v67 = vunpack.c.l.b16 %v43
  %v68 = vunpack.c.l.b16 %v44
  %v69 = vunpack.c.l.b16 %v45
  %v70 = vunpack.c.l.b16 %v46
  %v71 = vpack.c.b16 %v68, %v67
  %v72 = vpack.c.b16 %v70, %v69
  %v91 = vunpack.c.l.b16 %v47
  %v92 = vunpack.c.l.b16 %v48
  %v93 = vunpack.c.l.b16 %v49
  %v94 = vunpack.c.l.b16 %v50
  %v95 = vunpack.c.l.b16 %v51
  %v96 = vunpack.c.l.b16 %v52
  %v97 = vunpack.c.l.b16 %v53
  %v98 = vunpack.c.l.b16 %v54
  %v99 = vunpack.c.l.b16 %v55
  %v100 = vunpack.c.l.b16 %v56
  %v101 = vunpack.c.l.b16 %v57
  %v102 = vunpack.c.l.b16 %v58
  %v103 = vunpack.c.l.b16 %v59
  %v104 = vunpack.c.l.b16 %v60
  %v105 = vunpack.c.l.b16 %v61
  %v106 = vunpack.c.l.b16 %v62
  %v107 = vpack.c.b16 %v92, %v91
  %v108 = vpack.c.b16 %v94, %v93
  %v109 = vpack.c.b16 %v96, %v95
  %v110 = vpack.c.b16 %v98, %v97
  %v111 = vpack.c.b16 %v100, %v99
  %v112 = vpack.c.b16 %v102, %v101
  %v113 = vpack.c.b16 %v104, %v103
  %v114 = vpack.c.b16 %v106, %v105
  %123 = vmatpush.bf16.msra.mxu0 %v114
  %124 = vmatpush.bf16.msra.mxu0 %v113
  %125 = vmatpush.bf16.msra.mxu0 %v112
  %126 = vmatpush.bf16.msra.mxu0 %v111
  %127 = vmatpush.bf16.msra.mxu0 %v110
  %128 = vmatpush.bf16.msra.mxu0 %v109
  %129 = vmatpush.bf16.msra.mxu0 %v108
  %130 = vmatpush.bf16.msra.mxu0 %v107
  %131 = vmatmul.bf16.gmra.mxu0 %v71
  %v132 = vpop.f32.mrf.mxu0
  %v133 = vadd.f32 0.0, %v132
  %v134 = vpop.f32.mrf.mxu0
  %v135 = vadd.f32 0.0, %v134
  %136 = vmatmul.bf16.gmra.mxu0 %v72
  %v137 = vpop.f32.mrf.mxu0
  %v138 = vadd.f32 0.0, %v137
  %v139 = vpop.f32.mrf.mxu0
  %v140 = vadd.f32 0.0, %v139
  %141 = vdwg.mxu0
  %v146 = vunpack.c.l.b16 %v23
  %v147 = vunpack.c.l.b16 %v24
  %v148 = vunpack.c.l.b16 %v25
  %v149 = vunpack.c.l.b16 %v26
  %v150 = vpack.c.b16 %v147, %v146
  %v151 = vpack.c.b16 %v149, %v148
  %v170 = vunpack.c.l.b16 %v27
  %v171 = vunpack.c.l.b16 %v28
  %v172 = vunpack.c.l.b16 %v29
  %v173 = vunpack.c.l.b16 %v30
  %v174 = vunpack.c.l.b16 %v31
  %v175 = vunpack.c.l.b16 %v32
  %v176 = vunpack.c.l.b16 %v33
  %v177 = vunpack.c.l.b16 %v34
  %v178 = vunpack.c.l.b16 %v35
  %v179 = vunpack.c.l.b16 %v36
  %v180 = vunpack.c.l.b16 %v37
  %v181 = vunpack.c.l.b16 %v38
  %v182 = vunpack.c.l.b16 %v39
  %v183 = vunpack.c.l.b16 %v40
  %v184 = vunpack.c.l.b16 %v41
  %v185 = vunpack.c.l.b16 %v42
  %v186 = vpack.c.b16 %v171, %v170
  %v187 = vpack.c.b16 %v173, %v172
  %v188 = vpack.c.b16 %v175, %v174
  %v189 = vpack.c.b16 %v177, %v176
  %v190 = vpack.c.b16 %v179, %v178
  %v191 = vpack.c.b16 %v181, %v180
  %v192 = vpack.c.b16 %v183, %v182
  %v193 = vpack.c.b16 %v185, %v184
  %202 = vmatpush.bf16.msra.mxu0 %v193
  %203 = vmatpush.bf16.msra.mxu0 %v192
  %204 = vmatpush.bf16.msra.mxu0 %v191
  %205 = vmatpush.bf16.msra.mxu0 %v190
  %206 = vmatpush.bf16.msra.mxu0 %v189
  %207 = vmatpush.bf16.msra.mxu0 %v188
  %208 = vmatpush.bf16.msra.mxu0 %v187
  %209 = vmatpush.bf16.msra.mxu0 %v186
  %210 = vmatmul.bf16.gmra.mxu0 %v150
  %v211 = vpop.f32.mrf.mxu0
  %v212 = vadd.f32 %v133, %v211
  %v213 = vpop.f32.mrf.mxu0
  %v214 = vadd.f32 %v135, %v213
  %215 = vmatmul.bf16.gmra.mxu0 %v151
  %v216 = vpop.f32.mrf.mxu0
  %v217 = vadd.f32 %v138, %v216
  %v218 = vpop.f32.mrf.mxu0
  %v219 = vadd.f32 %v140, %v218
  %220 = vdwg.mxu0
  %v221 = vld [vmem:[%s2] sm:$0x1]
  %v223 = vperm.slane %v221, 0
  %v225 = vadd.f32 %v212, %v223
  %v226 = vadd.f32 %v214, %v223
  %v227 = vadd.f32 %v217, %v223
  %v228 = vadd.f32 %v219, %v223
  %v229 = vld [vmem:[%s5] sm:$0x1]
  %v231 = vperm.slane %v229, 0
  %v233 = vadd.f32 %v225, %v231
  %v234 = vadd.f32 %v226, %v231
  %v235 = vadd.f32 %v227, %v231
  %v236 = vadd.f32 %v228, %v231
  %v237 = vmax.f32 %v233, 0.0
  %v238 = vmax.f32 %v234, 0.0
  %v239 = vmax.f32 %v235, 0.0
  %v240 = vmax.f32 %v236, 0.0
  %v241 = vpack.c.bf16 %v237, %v237
  %v242 = vpack.c.bf16 %v238, %v238
  %v243 = vpack.c.bf16 %v239, %v239
  %v244 = vpack.c.bf16 %v240, %v240
  %245 = vst [vmem:[%s6] sm:$0xf] %v241
  %246 = vst [vmem:[%s6 + $0x4] sm:$0xf] %v242
  %247 = vst [vmem:[%s6 + $0x8] sm:$0xf] %v243
  %248 = vst [vmem:[%s6 + $0xc] sm:$0xf] %v244
  // Predicated region
  $region26: #{resnext_forward.16} parent=0 // pred_check
    _
  $region27: #{resnext_forward.16} parent=0 // pred_check_branch
    %250 = sbr.rel (0) target = $region29
  $region28: #{resnext_forward.16} parent=0 // pred_region
    _
  $region29: #{resnext_forward.16} parent=0 // pred_fallthru
    _
  // Predicated region
  $region30: #{resnext_forward.16} parent=0 // pred_check
    _
  $region31: #{resnext_forward.16} parent=0 // pred_check_branch
    %252 = sbr.rel (0) target = $region33
  $region32: #{resnext_forward.16} parent=0 // pred_region
    _
  $region33: #{resnext_forward.16} parent=0 // pred_fallthru
    _

// kernel: resnext_forward.17
$region0: #{resnext_forward.17}
  #allocation0 [shape = 'u32[]', space=smem, size = 0x4, offset = 0x4, fixed_abs, tag = 'smem constant byte address 0x4 - core index']
  #allocation1 [shape = 'u32[72,128]{1,0:T(1,128)}', space=vmem, size = 0x9000, scoped, tag = 'internal scratch']
  %s0 = inlined_call_operand.vmem [shape: bf16[2,16,128], index: 0, kind: input, shape index: {}]
  %s1 = inlined_call_operand.vmem [shape: bf16[128,128], index: 1, kind: input, shape index: {}]
  %s2 = inlined_call_operand.vmem [shape: f32[1,128], index: 2, kind: input, shape index: {}]
  %s3 = inlined_call_operand.hbm [shape: f32[2,128], index: 3, kind: output, shape index: {}]
  %s4 = sld [smem:[#allocation0]]
  $region22: #{resnext_forward.17} parent=0
    _
  %s6 = ssub.s32 1, %s4
  %s7 = scalar_select 0, %s6, %s4
  $region1: #{resnext_forward.17} parent=0
    #allocation2 [shape = 'u8[1024]{0}', space=vmem, size = 0x400, scoped, tag = 'output window, operand 0, single buffered']
    #allocation3 [shape = 's32[1]{0}', space=sflag, size = 0x4, scoped, tag = 'scoped memory for resnext_forward.17']
    %8 = vsyncpa [#allocation3], 0
    // Predicated region
    $region2: #{resnext_forward.17} parent=1 // pred_check
      _
    $region3: #{resnext_forward.17} parent=1 // pred_check_branch
      %10 = sbr.rel (0) target = $region5
    $region4: #{resnext_forward.17} parent=1 // pred_region
      _
    $region5: #{resnext_forward.17} parent=1 // pred_fallthru
      _
    // Predicated region
    $region6: #{resnext_forward.17} parent=1 // pred_check
      _
    $region7: #{resnext_forward.17} parent=1 // pred_check_branch
      %12 = sbr.rel (0) target = $region9
    $region8: #{resnext_forward.17} parent=1 // pred_region
      _
    $region9: #{resnext_forward.17} parent=1 // pred_fallthru
      _
    // Predicated region
    $region10: #{resnext_forward.17} parent=1 // pred_check
      _
    $region11: #{resnext_forward.17} parent=1 // pred_check_branch
      %14 = sbr.rel (0) target = $region13
    $region12: #{resnext_forward.17} parent=1 // pred_region
      _
    $region13: #{resnext_forward.17} parent=1 // pred_fallthru
      _
    %v15 = vld [vmem:[%s0] sm:$0xf]
    %v16 = vld [vmem:[%s0 + $0x4] sm:$0xf]
    %v17 = vld [vmem:[%s0 + $0x8] sm:$0xf]
    %v18 = vld [vmem:[%s0 + $0xc] sm:$0xf]
    %v19 = vunpack.c.l.bf16 %v15
    %v20 = vunpack.c.l.bf16 %v16
    %v21 = vunpack.c.l.bf16 %v17
    %v22 = vunpack.c.l.bf16 %v18
    %v23 = vadd.f32 %v19, %v20
    %v24 = vrot.slane %v23, 4
    %v25 = vadd.f32 %v23, %v24
    %v26 = vrot.slane %v25, 2
    %v27 = vadd.f32 %v25, %v26
    %v28 = vrot.slane %v27, 1
    %v29 = vadd.f32 %v27, %v28
    %v30 = vadd.f32 %v21, %v22
    %v31 = vrot.slane %v30, 4
    %v32 = vadd.f32 %v30, %v31
    %v33 = vrot.slane %v32, 2
    %v34 = vadd.f32 %v32, %v33
    %v35 = vrot.slane %v34, 1
    %v36 = vadd.f32 %v34, %v35
    %v37 = vrcp.pop 16.0
    %v38 = vmul.f32 16.0, %v37
    %v39 = vsub.f32 1.0, %v38
    %v40 = vmul.f32 %v37, %v39
    %v41 = vadd.f32 %v37, %v40
    %vm42 = vweird.f32 %v37
    %v43 = vsel %vm42, %v37, %v41
    %v44 = vmul.f32 %v29, %v43
    %v45 = vmul.f32 %v36, %v43
    %v46 = vpack.c.bf16 %v44, %v44
    %v47 = vpack.c.bf16 %v45, %v45
    %v48 = vld [vmem:[%s1] sm:$0xf]
    %v49 = vld [vmem:[%s1 + $0x4] sm:$0xf]
    %v50 = vld [vmem:[%s1 + $0x8] sm:$0xf]
    %v51 = vld [vmem:[%s1 + $0xc] sm:$0xf]
    %v52 = vld [vmem:[%s1 + $0x10] sm:$0xf]
    %v53 = vld [vmem:[%s1 + $0x14] sm:$0xf]
    %v54 = vld [vmem:[%s1 + $0x18] sm:$0xf]
    %v55 = vld [vmem:[%s1 + $0x1c] sm:$0xf]
    %v56 = vld [vmem:[%s1 + $0x20] sm:$0xf]
    %v57 = vld [vmem:[%s1 + $0x24] sm:$0xf]
    %v58 = vld [vmem:[%s1 + $0x28] sm:$0xf]
    %v59 = vld [vmem:[%s1 + $0x2c] sm:$0xf]
    %v60 = vld [vmem:[%s1 + $0x30] sm:$0xf]
    %v61 = vld [vmem:[%s1 + $0x34] sm:$0xf]
    %v62 = vld [vmem:[%s1 + $0x38] sm:$0xf]
    %v63 = vld [vmem:[%s1 + $0x3c] sm:$0xf]
    %v64 = vld [vmem:[%s2] sm:$0x1]
    %v66 = vperm.slane %v64, 0
    %v70 = vunpack.c.l.b16 %v46
    %v71 = vunpack.c.l.b16 %v47
    %vm72 = vcmask 1041409
    %v73 = vsel %vm72, %v71, %v70
    %v74 = vpack.c.b16 %v73, %v73
    %v92 = vunpack.c.l.b16 %v48
    %v93 = vunpack.c.l.b16 %v49
    %v94 = vunpack.c.l.b16 %v50
    %v95 = vunpack.c.l.b16 %v51
    %v96 = vunpack.c.l.b16 %v52
    %v97 = vunpack.c.l.b16 %v53
    %v98 = vunpack.c.l.b16 %v54
    %v99 = vunpack.c.l.b16 %v55
    %v100 = vunpack.c.l.b16 %v56
    %v101 = vunpack.c.l.b16 %v57
    %v102 = vunpack.c.l.b16 %v58
    %v103 = vunpack.c.l.b16 %v59
    %v104 = vunpack.c.l.b16 %v60
    %v105 = vunpack.c.l.b16 %v61
    %v106 = vunpack.c.l.b16 %v62
    %v107 = vunpack.c.l.b16 %v63
    %v108 = vpack.c.b16 %v93, %v92
    %v109 = vpack.c.b16 %v95, %v94
    %v110 = vpack.c.b16 %v97, %v96
    %v111 = vpack.c.b16 %v99, %v98
    %v112 = vpack.c.b16 %v101, %v100
    %v113 = vpack.c.b16 %v103, %v102
    %v114 = vpack.c.b16 %v105, %v104
    %v115 = vpack.c.b16 %v107, %v106
    %124 = vmatpush.bf16.msra.mxu0 %v115
    %125 = vmatpush.bf16.msra.mxu0 %v114
    %126 = vmatpush.bf16.msra.mxu0 %v113
    %127 = vmatpush.bf16.msra.mxu0 %v112
    %128 = vmatpush.bf16.msra.mxu0 %v111
    %129 = vmatpush.bf16.msra.mxu0 %v110
    %130 = vmatpush.bf16.msra.mxu0 %v109
    %131 = vmatpush.bf16.msra.mxu0 %v108
    %132 = vmatmul.bf16.gmra.mxu0 %v74
    %v133 = vpop.f32.mrf.mxu0
    %v134 = vadd.f32 %v66, %v133
    %v135 = vpop.f32.mrf.mxu0
    %136 = vdwg.mxu0
    %137 = vst [vmem:[#allocation2] sm:$0x3] %v134
    // Predicated region
    $region14: #{resnext_forward.17} parent=1 // pred_check
      _
    $region15: #{resnext_forward.17} parent=1 // pred_check_branch
      %139 = sbr.rel (0) target = $region17
    $region16: #{resnext_forward.17} parent=1 // pred_region
      %141 = vsyncadd [#allocation3], 0
      %s143 = sshll.u32 [#allocation2], 4
      %s144 = int_to_ptr.vmem [resolvable:$true] %s143
      %s145 = sshll.u32 %s3, 4
      %s146 = int_to_ptr.hbm [resolvable:$true] %s145
      %148 = dma.vmem_to_hbm [thread:$0]  %s144, 32, %s146, [#allocation3]
    $region17: #{resnext_forward.17} parent=1 // pred_fallthru
      _
    // Predicated region
    $region18: #{resnext_forward.17} parent=1 // pred_check
      _
    $region19: #{resnext_forward.17} parent=1 // pred_check_branch
      %150 = sbr.rel (0) target = $region21
    $region20: #{resnext_forward.17} parent=1 // pred_region
      %152 = dma.done [#allocation3], 32
    $region21: #{resnext_forward.17} parent=1 // pred_fallthru
      _
    %153 = vsyncpa [#allocation3], 1

// kernel: resnext_forward.15
$region0: #{resnext_forward.15}
  #allocation0 [shape = 'u32[]', space=smem, size = 0x4, offset = 0x4, fixed_abs, tag = 'smem constant byte address 0x4 - core index']
  #allocation1 [shape = 'u32[72,128]{1,0:T(1,128)}', space=vmem, size = 0x9000, scoped, tag = 'internal scratch']
  %s0 = inlined_call_operand.vmem [shape: bf16[2,20,9,128], index: 0, kind: input, shape index: {}]
  %s1 = inlined_call_operand.vmem [shape: bf16[9,128,128], index: 1, kind: input, shape index: {}]
  %s2 = inlined_call_operand.vmem [shape: f32[1,128], index: 2, kind: input, shape index: {}]
  %s3 = inlined_call_operand.vmem [shape: bf16[2,32,128], index: 3, kind: output, shape index: {}]
  %s4 = sld [smem:[#allocation0]]
  $region45: #{resnext_forward.15} parent=0
    _
  %s6 = ssub.s32 1, %s4
  %s7 = scalar_select 0, %s6, %s4
  loop: start=0, step=1, limit=4
  $region2: #{resnext_forward.15} parent=0 // loop_pre_header
    _
  $region3: #{resnext_forward.15} parent=0 // loop_header
    %s9 = sphi 0, %s13
    %p10 = scmp.ge.s32.totalorder %s9, 4
    %s19 = sphi 0, %s21
    %s22 = sphi 0, %s19
    %s23 = sphi 0, %s22
    %s39 = sphi 0, %s23
    %s43 = sphi 0, %s43
    %s45 = sphi 0, %s43
    %s46 = sphi 0, %s45
    %s60 = sphi 0, %s46
    %s64 = sphi 0, %s64
    %s66 = sphi 0, %s64
    %s67 = sphi 0, %s66
    %s81 = sphi 0, %s67
    %s87 = sphi 0, %s89
    %s90 = sphi 0, %s87
    %s91 = sphi 0, %s90
    %s107 = sphi 0, %s91
  $region4: #{resnext_forward.15} parent=0 // loop_header_branch
    %12 = sbr.rel (%p10) target = $region8
  $region5: #{resnext_forward.15} parent=0 // loop_body
    %s14 = ssub.s32 %s9, 1
    %s15 = ssub.s32 %s9, 2
    %s16 = sadd.s32 %s9, 1
    %s17 = ssub.s32 %s9, %s16
    %p18 = scmp.eq.s32.totalorder %s17, 0
    %s20 = sadd.s32 %s19, 1
    %s21 = scalar_select %p18, %s19, %s20
    %p24 = pneg %p18
    %p25 = scmp.eq.s32.totalorder %s9, 1
    %p26 = por %p24, %p25
    %p27 = scmp.ne.s32.totalorder %s19, %s22
    %p28 = scmp.eq.s32.totalorder %s9, 0
    %p29 = por %p27, %p28
    %p30 = scmp.ne.s32.totalorder %s19, %s22
    %p31 = scmp.eq.s32.totalorder %s14, 1
    %p32 = por %p30, %p31
    %p33 = scmp.ne.s32.totalorder %s22, %s23
    %p34 = scmp.eq.s32.totalorder %s14, 0
    %p35 = por %p33, %p34
    %p36 = scmp.ne.s32.totalorder %s22, %s23
    %p37 = scmp.eq.s32.totalorder %s15, 1
    %p38 = por %p36, %p37
    %p40 = scmp.ne.s32.totalorder %s23, %s39
    %p41 = scmp.eq.s32.totalorder %s15, 0
    %p42 = por %p40, %p41
    %s44 = sadd.s32 %s43, 1
    %p47 = scmp.eq.s32.totalorder %s9, 1
    %p48 = scmp.ne.s32.totalorder %s43, %s45
    %p49 = scmp.eq.s32.totalorder %s9, 0
    %p50 = por %p48, %p49
    %p51 = scmp.ne.s32.totalorder %s43, %s45
    %p52 = scmp.eq.s32.totalorder %s14, 1
    %p53 = por %p51, %p52
    %p54 = scmp.ne.s32.totalorder %s45, %s46
    %p55 = scmp.eq.s32.totalorder %s14, 0
    %p56 = por %p54, %p55
    %p57 = scmp.ne.s32.totalorder %s45, %s46
    %p58 = scmp.eq.s32.totalorder %s15, 1
    %p59 = por %p57, %p58
    %p61 = scmp.ne.s32.totalorder %s46, %s60
    %p62 = scmp.eq.s32.totalorder %s15, 0
    %p63 = por %p61, %p62
    %s65 = sadd.s32 %s64, 1
    %p68 = scmp.eq.s32.totalorder %s9, 1
    %p69 = scmp.ne.s32.totalorder %s64, %s66
    %p70 = scmp.eq.s32.totalorder %s9, 0
    %p71 = por %p69, %p70
    %p72 = scmp.ne.s32.totalorder %s64, %s66
    %p73 = scmp.eq.s32.totalorder %s14, 1
    %p74 = por %p72, %p73
    %p75 = scmp.ne.s32.totalorder %s66, %s67
    %p76 = scmp.eq.s32.totalorder %s14, 0
    %p77 = por %p75, %p76
    %p78 = scmp.ne.s32.totalorder %s66, %s67
    %p79 = scmp.eq.s32.totalorder %s15, 1
    %p80 = por %p78, %p79
    %p82 = scmp.ne.s32.totalorder %s67, %s81
    %p83 = scmp.eq.s32.totalorder %s15, 0
    %p84 = por %p82, %p83
    %s85 = ssub.s32 %s9, %s16
    %p86 = scmp.eq.s32.totalorder %s85, 0
    %s88 = sadd.s32 %s87, 1
    %s89 = scalar_select %p86, %s87, %s88
    %p92 = pneg %p86
    %p93 = scmp.eq.s32.totalorder %s9, 1
    %p94 = por %p92, %p93
    %p95 = scmp.ne.s32.totalorder %s87, %s90
    %p96 = scmp.eq.s32.totalorder %s9, 0
    %p97 = por %p95, %p96
    %p98 = scmp.ne.s32.totalorder %s87, %s90
    %p99 = scmp.eq.s32.totalorder %s14, 1
    %p100 = por %p98, %p99
    %p101 = scmp.ne.s32.totalorder %s90, %s91
    %p102 = scmp.eq.s32.totalorder %s14, 0
    %p103 = por %p101, %p102
    %p104 = scmp.ne.s32.totalorder %s90, %s91
    %p105 = scmp.eq.s32.totalorder %s15, 1
    %p106 = por %p104, %p105
    %p108 = scmp.ne.s32.totalorder %s91, %s107
    %p109 = scmp.eq.s32.totalorder %s15, 0
    %p110 = por %p108, %p109
    %p111 = scmp.le.s32.totalorder 1, %s9
    %p112 = scmp.lt.s32.totalorder %s9, 3
    %p113 = pnand %p111, %p112
    %p114 = pneg %p113
    // Predicated region
    $region9: #{resnext_forward.15} parent=5 // pred_check
      _
    $region10: #{resnext_forward.15} parent=5 // pred_check_branch
      %116 = sbr.rel (%p113) target = $region12
    $region11: #{resnext_forward.15} parent=5 // pred_region
      %s117 = ssub.s32 %s9, 1
      // Predicated region
      $region13: #{resnext_forward.15} parent=11 // pred_check
        %p118 = pneg %p56
      $region14: #{resnext_forward.15} parent=11 // pred_check_branch
        %120 = sbr.rel (%p118) target = $region16
      $region15: #{resnext_forward.15} parent=11 // pred_region
        _
      $region16: #{resnext_forward.15} parent=11 // pred_fallthru
        _
      // Predicated region
      $region17: #{resnext_forward.15} parent=11 // pred_check
        %p121 = pneg %p77
      $region18: #{resnext_forward.15} parent=11 // pred_check_branch
        %123 = sbr.rel (%p121) target = $region20
      $region19: #{resnext_forward.15} parent=11 // pred_region
        _
      $region20: #{resnext_forward.15} parent=11 // pred_fallthru
        _
    $region12: #{resnext_forward.15} parent=5 // pred_fallthru
      _
    %p124 = scmp.lt.s32.totalorder %s9, 2
    // Predicated region
    $region21: #{resnext_forward.15} parent=5 // pred_check
      %p125 = pneg %p124
    $region22: #{resnext_forward.15} parent=5 // pred_check_branch
      %127 = sbr.rel (%p125) target = $region24
    $region23: #{resnext_forward.15} parent=5 // pred_region
      // Predicated region
      $region25: #{resnext_forward.15} parent=23 // pred_check
        %p128 = pneg %p29
      $region26: #{resnext_forward.15} parent=23 // pred_check_branch
        %130 = sbr.rel (%p128) target = $region28
      $region27: #{resnext_forward.15} parent=23 // pred_region
        %p131 = scmp.lt.s32.totalorder %s9, 1
        %s132 = scalar_select %p131, %s9, 1
        %s133 = smul.addr %s132, 40
        %s134 = smul.addr %s133, 4
        %s135 = scalar_lea.vmem %s0, %s134
      $region28: #{resnext_forward.15} parent=23 // pred_fallthru
        _
    $region24: #{resnext_forward.15} parent=5 // pred_fallthru
      _
    %p136 = scmp.le.s32.totalorder 1, %s9
    %p137 = scmp.lt.s32.totalorder %s9, 3
    %p138 = pnand %p136, %p137
    %p139 = pneg %p138
    // Predicated region
    $region29: #{resnext_forward.15} parent=5 // pred_check
      _
    $region30: #{resnext_forward.15} parent=5 // pred_check_branch
      %141 = sbr.rel (%p138) target = $region32
    $region31: #{resnext_forward.15} parent=5 // pred_region
      %s142 = ssub.s32 %s9, 1
      %p143 = scmp.lt.s32.totalorder %s14, 1
      %s144 = scalar_select %p143, %s14, 1
      %s145 = smul.addr %s144, 40
      %s146 = smul.addr %s145, 4
      %s147 = scalar_lea.vmem %s0, %s146
      %p148 = pneg %p35
      %p149 = pneg %p32
      %p150 = pneg %p56
      %p151 = pneg %p53
      %p152 = pneg %p77
      %p153 = pneg %p74
      %p154 = pneg %p103
      %p155 = pneg %p100
      %p156 = scmp.lt.s32.totalorder %s14, 1
      %s157 = scalar_select %p156, %s14, 1
      %s158 = smul.addr %s157, 4
      %s159 = smul.addr %s158, 4
      %s160 = scalar_lea.vmem %s3, %s159
      %p161 = scmp.lt.s32.totalorder %s14, 1
      %s162 = scalar_select %p161, %s14, 1
      %s163 = smul.addr %s162, 40
      %s164 = smul.addr %s163, 4
      %s165 = scalar_lea.vmem %s0, %s164
      %p166 = scmp.lt.s32.totalorder %s14, 1
      %s167 = scalar_select %p166, %s14, 1
      %s168 = smul.addr %s167, 4
      %s169 = smul.addr %s168, 4
      %s170 = scalar_lea.vmem %s3, %s169
      %v171 = vld [vmem:[%s165] sm:$0xf]
      %v172 = vld [vmem:[%s165 + $0x8] sm:$0xf]
      %v173 = vld [vmem:[%s165 + $0x10] sm:$0xf]
      %v174 = vld [vmem:[%s165 + $0x18] sm:$0xf]
      %v175 = vld [vmem:[%s1] sm:$0xf]
      %v176 = vld [vmem:[%s1 + $0x4] sm:$0xf]
      %v177 = vld [vmem:[%s1 + $0x8] sm:$0xf]
      %v178 = vld [vmem:[%s1 + $0xc] sm:$0xf]
      %v179 = vld [vmem:[%s1 + $0x10] sm:$0xf]
      %v180 = vld [vmem:[%s1 + $0x14] sm:$0xf]
      %v181 = vld [vmem:[%s1 + $0x18] sm:$0xf]
      %v182 = vld [vmem:[%s1 + $0x1c] sm:$0xf]
      %v183 = vld [vmem:[%s1 + $0x20] sm:$0xf]
      %v184 = vld [vmem:[%s1 + $0x24] sm:$0xf]
      %v185 = vld [vmem:[%s1 + $0x28] sm:$0xf]
      %v186 = vld [vmem:[%s1 + $0x2c] sm:$0xf]
      %v187 = vld [vmem:[%s1 + $0x30] sm:$0xf]
      %v188 = vld [vmem:[%s1 + $0x34] sm:$0xf]
      %v189 = vld [vmem:[%s1 + $0x38] sm:$0xf]
      %v190 = vld [vmem:[%s1 + $0x3c] sm:$0xf]
      %s191 = scalar_lea.vmem %s165, 40
      %v192 = vld [vmem:[%s191] sm:$0xf]
      %v193 = vld [vmem:[%s191 + $0x8] sm:$0xf]
      %v194 = vld [vmem:[%s191 + $0x10] sm:$0xf]
      %v195 = vld [vmem:[%s191 + $0x18] sm:$0xf]
      %s196 = scalar_lea.vmem %s1, 64
      %v197 = vld [vmem:[%s196] sm:$0xf]
      %v198 = vld [vmem:[%s196 + $0x4] sm:$0xf]
      %v199 = vld [vmem:[%s196 + $0x8] sm:$0xf]
      %v200 = vld [vmem:[%s196 + $0xc] sm:$0xf]
      %v201 = vld [vmem:[%s196 + $0x10] sm:$0xf]
      %v202 = vld [vmem:[%s196 + $0x14] sm:$0xf]
      %v203 = vld [vmem:[%s196 + $0x18] sm:$0xf]
      %v204 = vld [vmem:[%s196 + $0x1c] sm:$0xf]
      %v205 = vld [vmem:[%s196 + $0x20] sm:$0xf]
      %v206 = vld [vmem:[%s196 + $0x24] sm:$0xf]
      %v207 = vld [vmem:[%s196 + $0x28] sm:$0xf]
      %v208 = vld [vmem:[%s196 + $0x2c] sm:$0xf]
      %v209 = vld [vmem:[%s196 + $0x30] sm:$0xf]
      %v210 = vld [vmem:[%s196 + $0x34] sm:$0xf]
      %v211 = vld [vmem:[%s196 + $0x38] sm:$0xf]
      %v212 = vld [vmem:[%s196 + $0x3c] sm:$0xf]
      %v217 = vunpack.c.l.b16 %v192
      %v218 = vunpack.c.l.b16 %v193
      %v219 = vunpack.c.l.b16 %v194
      %v220 = vunpack.c.l.b16 %v195
      %v221 = vpack.c.b16 %v218, %v217
      %v222 = vpack.c.b16 %v220, %v219
      %v241 = vunpack.c.l.b16 %v197
      %v242 = vunpack.c.l.b16 %v198
      %v243 = vunpack.c.l.b16 %v199
      %v244 = vunpack.c.l.b16 %v200
      %v245 = vunpack.c.l.b16 %v201
      %v246 = vunpack.c.l.b16 %v202
      %v247 = vunpack.c.l.b16 %v203
      %v248 = vunpack.c.l.b16 %v204
      %v249 = vunpack.c.l.b16 %v205
      %v250 = vunpack.c.l.b16 %v206
      %v251 = vunpack.c.l.b16 %v207
      %v252 = vunpack.c.l.b16 %v208
      %v253 = vunpack.c.l.b16 %v209
      %v254 = vunpack.c.l.b16 %v210
      %v255 = vunpack.c.l.b16 %v211
      %v256 = vunpack.c.l.b16 %v212
      %v257 = vpack.c.b16 %v242, %v241
      %v258 = vpack.c.b16 %v244, %v243
      %v259 = vpack.c.b16 %v246, %v245
      %v260 = vpack.c.b16 %v248, %v247
      %v261 = vpack.c.b16 %v250, %v249
      %v262 = vpack.c.b16 %v252, %v251
      %v263 = vpack.c.b16 %v254, %v253
      %v264 = vpack.c.b16 %v256, %v255
      %273 = vmatpush.bf16.msra.mxu0 %v264
      %274 = vmatpush.bf16.msra.mxu0 %v263
      %275 = vmatpush.bf16.msra.mxu0 %v262
      %276 = vmatpush.bf16.msra.mxu0 %v261
      %277 = vmatpush.bf16.msra.mxu0 %v260
      %278 = vmatpush.bf16.msra.mxu0 %v259
      %279 = vmatpush.bf16.msra.mxu0 %v258
      %280 = vmatpush.bf16.msra.mxu0 %v257
      %281 = vmatmul.bf16.gmra.mxu0 %v221
      %v282 = vpop.f32.mrf.mxu0
      %v283 = vadd.f32 0.0, %v282
      %v284 = vpop.f32.mrf.mxu0
      %v285 = vadd.f32 0.0, %v284
      %286 = vmatmul.bf16.gmra.mxu0 %v222
      %v287 = vpop.f32.mrf.mxu0
      %v288 = vadd.f32 0.0, %v287
      %v289 = vpop.f32.mrf.mxu0
      %v290 = vadd.f32 0.0, %v289
      %291 = vdwg.mxu0
      %v296 = vunpack.c.l.b16 %v171
      %v297 = vunpack.c.l.b16 %v172
      %v298 = vunpack.c.l.b16 %v173
      %v299 = vunpack.c.l.b16 %v174
      %v300 = vpack.c.b16 %v297, %v296
      %v301 = vpack.c.b16 %v299, %v298
      %v320 = vunpack.c.l.b16 %v175
      %v321 = vunpack.c.l.b16 %v176
      %v322 = vunpack.c.l.b16 %v177
      %v323 = vunpack.c.l.b16 %v178
      %v324 = vunpack.c.l.b16 %v179
      %v325 = vunpack.c.l.b16 %v180
      %v326 = vunpack.c.l.b16 %v181
      %v327 = vunpack.c.l.b16 %v182
      %v328 = vunpack.c.l.b16 %v183
      %v329 = vunpack.c.l.b16 %v184
      %v330 = vunpack.c.l.b16 %v185
      %v331 = vunpack.c.l.b16 %v186
      %v332 = vunpack.c.l.b16 %v187
      %v333 = vunpack.c.l.b16 %v188
      %v334 = vunpack.c.l.b16 %v189
      %v335 = vunpack.c.l.b16 %v190
      %v336 = vpack.c.b16 %v321, %v320
      %v337 = vpack.c.b16 %v323, %v322
      %v338 = vpack.c.b16 %v325, %v324
      %v339 = vpack.c.b16 %v327, %v326
      %v340 = vpack.c.b16 %v329, %v328
      %v341 = vpack.c.b16 %v331, %v330
      %v342 = vpack.c.b16 %v333, %v332
      %v343 = vpack.c.b16 %v335, %v334
      %352 = vmatpush.bf16.msra.mxu0 %v343
      %353 = vmatpush.bf16.msra.mxu0 %v342
      %354 = vmatpush.bf16.msra.mxu0 %v341
      %355 = vmatpush.bf16.msra.mxu0 %v340
      %356 = vmatpush.bf16.msra.mxu0 %v339
      %357 = vmatpush.bf16.msra.mxu0 %v338
      %358 = vmatpush.bf16.msra.mxu0 %v337
      %359 = vmatpush.bf16.msra.mxu0 %v336
      %360 = vmatmul.bf16.gmra.mxu0 %v300
      %v361 = vpop.f32.mrf.mxu0
      %v362 = vadd.f32 %v283, %v361
      %v363 = vpop.f32.mrf.mxu0
      %v364 = vadd.f32 %v285, %v363
      %365 = vmatmul.bf16.gmra.mxu0 %v301
      %v366 = vpop.f32.mrf.mxu0
      %v367 = vadd.f32 %v288, %v366
      %v368 = vpop.f32.mrf.mxu0
      %v369 = vadd.f32 %v290, %v368
      %370 = vdwg.mxu0
      %v371 = vld [vmem:[%s165] sm:$0xf]
      %v372 = vld [vmem:[%s165 + $0x4] sm:$0x1]
      %v373 = vld [vmem:[%s165 + $0x8] sm:$0xf]
      %v374 = vld [vmem:[%s165 + $0xc] sm:$0x1]
      %v375 = vld [vmem:[%s165 + $0x10] sm:$0xf]
      %v376 = vld [vmem:[%s165 + $0x14] sm:$0x1]
      %v377 = vld [vmem:[%s165 + $0x18] sm:$0xf]
      %v378 = vld [vmem:[%s165 + $0x1c] sm:$0x1]
      %vm379 = vsmask.f32 3328
      %vm380 = vsmask.f32 7440
      %vm381 = vmor %vm379, %vm380
      %v383 = vshrl.u32 %v371, 16
      %v385 = vrot.slane %v383, 4
      %v386 = vshll.u32 %v371, 16
      %v388 = vrot.slane %v386, 5
      %v389 = vor.u32 %v385, %v388
      %v390 = vrot.slane %v389, 4
      %v392 = vshll.u32 %v372, 16
      %v394 = vrot.slane %v392, 5
      %v395 = vsel %vm381, %v390, %v394
      %v397 = vshrl.u32 %v373, 16
      %v399 = vrot.slane %v397, 4
      %v400 = vshll.u32 %v373, 16
      %v402 = vrot.slane %v400, 5
      %v403 = vor.u32 %v399, %v402
      %v404 = vrot.slane %v403, 4
      %v406 = vshll.u32 %v374, 16
      %v408 = vrot.slane %v406, 5
      %v409 = vsel %vm381, %v404, %v408
      %v411 = vshrl.u32 %v375, 16
      %v413 = vrot.slane %v411, 4
      %v414 = vshll.u32 %v375, 16
      %v416 = vrot.slane %v414, 5
      %v417 = vor.u32 %v413, %v416
      %v418 = vrot.slane %v417, 4
      %v420 = vshll.u32 %v376, 16
      %v422 = vrot.slane %v420, 5
      %v423 = vsel %vm381, %v418, %v422
      %v425 = vshrl.u32 %v377, 16
      %v427 = vrot.slane %v425, 4
      %v428 = vshll.u32 %v377, 16
      %v430 = vrot.slane %v428, 5
      %v431 = vor.u32 %v427, %v430
      %v432 = vrot.slane %v431, 4
      %v434 = vshll.u32 %v378, 16
      %v436 = vrot.slane %v434, 5
      %v437 = vsel %vm381, %v432, %v436
      %s438 = scalar_lea.vmem %s1, 128
      %v439 = vld [vmem:[%s438] sm:$0xf]
      %v440 = vld [vmem:[%s438 + $0x4] sm:$0xf]
      %v441 = vld [vmem:[%s438 + $0x8] sm:$0xf]
      %v442 = vld [vmem:[%s438 + $0xc] sm:$0xf]
      %v443 = vld [vmem:[%s438 + $0x10] sm:$0xf]
      %v444 = vld [vmem:[%s438 + $0x14] sm:$0xf]
      %v445 = vld [vmem:[%s438 + $0x18] sm:$0xf]
      %v446 = vld [vmem:[%s438 + $0x1c] sm:$0xf]
      %v447 = vld [vmem:[%s438 + $0x20] sm:$0xf]
      %v448 = vld [vmem:[%s438 + $0x24] sm:$0xf]
      %v449 = vld [vmem:[%s438 + $0x28] sm:$0xf]
      %v450 = vld [vmem:[%s438 + $0x2c] sm:$0xf]
      %v451 = vld [vmem:[%s438 + $0x30] sm:$0xf]
      %v452 = vld [vmem:[%s438 + $0x34] sm:$0xf]
      %v453 = vld [vmem:[%s438 + $0x38] sm:$0xf]
      %v454 = vld [vmem:[%s438 + $0x3c] sm:$0xf]
      %v455 = vunpack.c.l.b16 %v395
      %v456 = vunpack.c.l.b16 %v409
      %v457 = vunpack.c.l.b16 %v423
      %v458 = vunpack.c.l.b16 %v437
      %v459 = vpack.c.b16 %v456, %v455
      %v460 = vpack.c.b16 %v458, %v457
      %v479 = vunpack.c.l.b16 %v439
      %v480 = vunpack.c.l.b16 %v440
      %v481 = vunpack.c.l.b16 %v441
      %v482 = vunpack.c.l.b16 %v442
      %v483 = vunpack.c.l.b16 %v443
      %v484 = vunpack.c.l.b16 %v444
      %v485 = vunpack.c.l.b16 %v445
      %v486 = vunpack.c.l.b16 %v446
      %v487 = vunpack.c.l.b16 %v447
      %v488 = vunpack.c.l.b16 %v448
      %v489 = vunpack.c.l.b16 %v449
      %v490 = vunpack.c.l.b16 %v450
      %v491 = vunpack.c.l.b16 %v451
      %v492 = vunpack.c.l.b16 %v452
      %v493 = vunpack.c.l.b16 %v453
      %v494 = vunpack.c.l.b16 %v454
      %v495 = vpack.c.b16 %v480, %v479
      %v496 = vpack.c.b16 %v482, %v481
      %v497 = vpack.c.b16 %v484, %v483
      %v498 = vpack.c.b16 %v486, %v485
      %v499 = vpack.c.b16 %v488, %v487
      %v500 = vpack.c.b16 %v490, %v489
      %v501 = vpack.c.b16 %v492, %v491
      %v502 = vpack.c.b16 %v494, %v493
      %511 = vmatpush.bf16.msra.mxu0 %v502
      %512 = vmatpush.bf16.msra.mxu0 %v501
      %513 = vmatpush.bf16.msra.mxu0 %v500
      %514 = vmatpush.bf16.msra.mxu0 %v499
      %515 = vmatpush.bf16.msra.mxu0 %v498
      %516 = vmatpush.bf16.msra.mxu0 %v497
      %517 = vmatpush.bf16.msra.mxu0 %v496
      %518 = vmatpush.bf16.msra.mxu0 %v495
      %519 = vmatmul.bf16.gmra.mxu0 %v459
      %v520 = vpop.f32.mrf.mxu0
      %v521 = vadd.f32 0.0, %v520
      %v522 = vpop.f32.mrf.mxu0
      %v523 = vadd.f32 0.0, %v522
      %524 = vmatmul.bf16.gmra.mxu0 %v460
      %v525 = vpop.f32.mrf.mxu0
      %v526 = vadd.f32 0.0, %v525
      %v527 = vpop.f32.mrf.mxu0
      %v528 = vadd.f32 0.0, %v527
      %529 = vdwg.mxu0
      %v530 = vadd.f32 %v362, %v521
      %v531 = vadd.f32 %v364, %v523
      %v532 = vadd.f32 %v367, %v526
      %v533 = vadd.f32 %v369, %v528
      %s534 = scalar_lea.vmem %s165, 80
      %v535 = vld [vmem:[%s534] sm:$0xf]
      %v536 = vld [vmem:[%s534 + $0x8] sm:$0xf]
      %v537 = vld [vmem:[%s534 + $0x10] sm:$0xf]
      %v538 = vld [vmem:[%s534 + $0x18] sm:$0xf]
      %s539 = scalar_lea.vmem %s1, 192
      %v540 = vld [vmem:[%s539] sm:$0xf]
      %v541 = vld [vmem:[%s539 + $0x4] sm:$0xf]
      %v542 = vld [vmem:[%s539 + $0x8] sm:$0xf]
      %v543 = vld [vmem:[%s539 + $0xc] sm:$0xf]
      %v544 = vld [vmem:[%s539 + $0x10] sm:$0xf]
      %v545 = vld [vmem:[%s539 + $0x14] sm:$0xf]
      %v546 = vld [vmem:[%s539 + $0x18] sm:$0xf]
      %v547 = vld [vmem:[%s539 + $0x1c] sm:$0xf]
      %v548 = vld [vmem:[%s539 + $0x20] sm:$0xf]
      %v549 = vld [vmem:[%s539 + $0x24] sm:$0xf]
      %v550 = vld [vmem:[%s539 + $0x28] sm:$0xf]
      %v551 = vld [vmem:[%s539 + $0x2c] sm:$0xf]
      %v552 = vld [vmem:[%s539 + $0x30] sm:$0xf]
      %v553 = vld [vmem:[%s539 + $0x34] sm:$0xf]
      %v554 = vld [vmem:[%s539 + $0x38] sm:$0xf]
      %v555 = vld [vmem:[%s539 + $0x3c] sm:$0xf]
      %v560 = vunpack.c.l.b16 %v535
      %v561 = vunpack.c.l.b16 %v536
      %v562 = vunpack.c.l.b16 %v537
      %v563 = vunpack.c.l.b16 %v538
      %v564 = vpack.c.b16 %v561, %v560
      %v565 = vpack.c.b16 %v563, %v562
      %v584 = vunpack.c.l.b16 %v540
      %v585 = vunpack.c.l.b16 %v541
      %v586 = vunpack.c.l.b16 %v542
      %v587 = vunpack.c.l.b16 %v543
      %v588 = vunpack.c.l.b16 %v544
      %v589 = vunpack.c.l.b16 %v545
      %v590 = vunpack.c.l.b16 %v546
      %v591 = vunpack.c.l.b16 %v547
      %v592 = vunpack.c.l.b16 %v548
      %v593 = vunpack.c.l.b16 %v549
      %v594 = vunpack.c.l.b16 %v550
      %v595 = vunpack.c.l.b16 %v551
      %v596 = vunpack.c.l.b16 %v552
      %v597 = vunpack.c.l.b16 %v553
      %v598 = vunpack.c.l.b16 %v554
      %v599 = vunpack.c.l.b16 %v555
      %v600 = vpack.c.b16 %v585, %v584
      %v601 = vpack.c.b16 %v587, %v586
      %v602 = vpack.c.b16 %v589, %v588
      %v603 = vpack.c.b16 %v591, %v590
      %v604 = vpack.c.b16 %v593, %v592
      %v605 = vpack.c.b16 %v595, %v594
      %v606 = vpack.c.b16 %v597, %v596
      %v607 = vpack.c.b16 %v599, %v598
      %616 = vmatpush.bf16.msra.mxu0 %v607
      %617 = vmatpush.bf16.msra.mxu0 %v606
      %618 = vmatpush.bf16.msra.mxu0 %v605
      %619 = vmatpush.bf16.msra.mxu0 %v604
      %620 = vmatpush.bf16.msra.mxu0 %v603
      %621 = vmatpush.bf16.msra.mxu0 %v602
      %622 = vmatpush.bf16.msra.mxu0 %v601
      %623 = vmatpush.bf16.msra.mxu0 %v600
      %624 = vmatmul.bf16.gmra.mxu0 %v564
      %v625 = vpop.f32.mrf.mxu0
      %v626 = vadd.f32 0.0, %v625
      %v627 = vpop.f32.mrf.mxu0
      %v628 = vadd.f32 0.0, %v627
      %629 = vmatmul.bf16.gmra.mxu0 %v565
      %v630 = vpop.f32.mrf.mxu0
      %v631 = vadd.f32 0.0, %v630
      %v632 = vpop.f32.mrf.mxu0
      %v633 = vadd.f32 0.0, %v632
      %634 = vdwg.mxu0
      %v635 = vadd.f32 %v530, %v626
      %v636 = vadd.f32 %v531, %v628
      %v637 = vadd.f32 %v532, %v631
      %v638 = vadd.f32 %v533, %v633
      %s639 = scalar_lea.vmem %s165, 120
      %v640 = vld [vmem:[%s639] sm:$0xf]
      %v641 = vld [vmem:[%s639 + $0x8] sm:$0xf]
      %v642 = vld [vmem:[%s639 + $0x10] sm:$0xf]
      %v643 = vld [vmem:[%s639 + $0x18] sm:$0xf]
      %s644 = scalar_lea.vmem %s1, 256
      %v645 = vld [vmem:[%s644] sm:$0xf]
      %v646 = vld [vmem:[%s644 + $0x4] sm:$0xf]
      %v647 = vld [vmem:[%s644 + $0x8] sm:$0xf]
      %v648 = vld [vmem:[%s644 + $0xc] sm:$0xf]
      %v649 = vld [vmem:[%s644 + $0x10] sm:$0xf]
      %v650 = vld [vmem:[%s644 + $0x14] sm:$0xf]
      %v651 = vld [vmem:[%s644 + $0x18] sm:$0xf]
      %v652 = vld [vmem:[%s644 + $0x1c] sm:$0xf]
      %v653 = vld [vmem:[%s644 + $0x20] sm:$0xf]
      %v654 = vld [vmem:[%s644 + $0x24] sm:$0xf]
      %v655 = vld [vmem:[%s644 + $0x28] sm:$0xf]
      %v656 = vld [vmem:[%s644 + $0x2c] sm:$0xf]
      %v657 = vld [vmem:[%s644 + $0x30] sm:$0xf]
      %v658 = vld [vmem:[%s644 + $0x34] sm:$0xf]
      %v659 = vld [vmem:[%s644 + $0x38] sm:$0xf]
      %v660 = vld [vmem:[%s644 + $0x3c] sm:$0xf]
      %v665 = vunpack.c.l.b16 %v640
      %v666 = vunpack.c.l.b16 %v641
      %v667 = vunpack.c.l.b16 %v642
      %v668 = vunpack.c.l.b16 %v643
      %v669 = vpack.c.b16 %v666, %v665
      %v670 = vpack.c.b16 %v668, %v667
      %v689 = vunpack.c.l.b16 %v645
      %v690 = vunpack.c.l.b16 %v646
      %v691 = vunpack.c.l.b16 %v647
      %v692 = vunpack.c.l.b16 %v648
      %v693 = vunpack.c.l.b16 %v649
      %v694 = vunpack.c.l.b16 %v650
      %v695 = vunpack.c.l.b16 %v651
      %v696 = vunpack.c.l.b16 %v652
      %v697 = vunpack.c.l.b16 %v653
      %v698 = vunpack.c.l.b16 %v654
      %v699 = vunpack.c.l.b16 %v655
      %v700 = vunpack.c.l.b16 %v656
      %v701 = vunpack.c.l.b16 %v657
      %v702 = vunpack.c.l.b16 %v658
      %v703 = vunpack.c.l.b16 %v659
      %v704 = vunpack.c.l.b16 %v660
      %v705 = vpack.c.b16 %v690, %v689
      %v706 = vpack.c.b16 %v692, %v691
      %v707 = vpack.c.b16 %v694, %v693
      %v708 = vpack.c.b16 %v696, %v695
      %v709 = vpack.c.b16 %v698, %v697
      %v710 = vpack.c.b16 %v700, %v699
      %v711 = vpack.c.b16 %v702, %v701
      %v712 = vpack.c.b16 %v704, %v703
      %721 = vmatpush.bf16.msra.mxu0 %v712
      %722 = vmatpush.bf16.msra.mxu0 %v711
      %723 = vmatpush.bf16.msra.mxu0 %v710
      %724 = vmatpush.bf16.msra.mxu0 %v709
      %725 = vmatpush.bf16.msra.mxu0 %v708
      %726 = vmatpush.bf16.msra.mxu0 %v707
      %727 = vmatpush.bf16.msra.mxu0 %v706
      %728 = vmatpush.bf16.msra.mxu0 %v705
      %729 = vmatmul.bf16.gmra.mxu0 %v669
      %v730 = vpop.f32.mrf.mxu0
      %v731 = vadd.f32 0.0, %v730
      %v732 = vpop.f32.mrf.mxu0
      %v733 = vadd.f32 0.0, %v732
      %734 = vmatmul.bf16.gmra.mxu0 %v670
      %v735 = vpop.f32.mrf.mxu0
      %v736 = vadd.f32 0.0, %v735
      %v737 = vpop.f32.mrf.mxu0
      %v738 = vadd.f32 0.0, %v737
      %739 = vdwg.mxu0
      %v740 = vadd.f32 %v635, %v731
      %v741 = vadd.f32 %v636, %v733
      %v742 = vadd.f32 %v637, %v736
      %v743 = vadd.f32 %v638, %v738
      %v744 = vld [vmem:[%s534] sm:$0xf]
      %v745 = vld [vmem:[%s534 + $0x4] sm:$0x1]
      %v746 = vld [vmem:[%s534 + $0x8] sm:$0xf]
      %v747 = vld [vmem:[%s534 + $0xc] sm:$0x1]
      %v748 = vld [vmem:[%s534 + $0x10] sm:$0xf]
      %v749 = vld [vmem:[%s534 + $0x14] sm:$0x1]
      %v750 = vld [vmem:[%s534 + $0x18] sm:$0xf]
      %v751 = vld [vmem:[%s534 + $0x1c] sm:$0x1]
      %v753 = vshrl.u32 %v744, 16
      %v755 = vrot.slane %v753, 4
      %v756 = vshll.u32 %v744, 16
      %v758 = vrot.slane %v756, 5
      %v759 = vor.u32 %v755, %v758
      %v760 = vrot.slane %v759, 4
      %v762 = vshll.u32 %v745, 16
      %v764 = vrot.slane %v762, 5
      %v765 = vsel %vm381, %v760, %v764
      %v767 = vshrl.u32 %v746, 16
      %v769 = vrot.slane %v767, 4
      %v770 = vshll.u32 %v746, 16
      %v772 = vrot.slane %v770, 5
      %v773 = vor.u32 %v769, %v772
      %v774 = vrot.slane %v773, 4
      %v776 = vshll.u32 %v747, 16
      %v778 = vrot.slane %v776, 5
      %v779 = vsel %vm381, %v774, %v778
      %v781 = vshrl.u32 %v748, 16
      %v783 = vrot.slane %v781, 4
      %v784 = vshll.u32 %v748, 16
      %v786 = vrot.slane %v784, 5
      %v787 = vor.u32 %v783, %v786
      %v788 = vrot.slane %v787, 4
      %v790 = vshll.u32 %v749, 16
      %v792 = vrot.slane %v790, 5
      %v793 = vsel %vm381, %v788, %v792
      %v795 = vshrl.u32 %v750, 16
      %v797 = vrot.slane %v795, 4
      %v798 = vshll.u32 %v750, 16
      %v800 = vrot.slane %v798, 5
      %v801 = vor.u32 %v797, %v800
      %v802 = vrot.slane %v801, 4
      %v804 = vshll.u32 %v751, 16
      %v806 = vrot.slane %v804, 5
      %v807 = vsel %vm381, %v802, %v806
      %s808 = scalar_lea.vmem %s1, 320
      %v809 = vld [vmem:[%s808] sm:$0xf]
      %v810 = vld [vmem:[%s808 + $0x4] sm:$0xf]
      %v811 = vld [vmem:[%s808 + $0x8] sm:$0xf]
      %v812 = vld [vmem:[%s808 + $0xc] sm:$0xf]
      %v813 = vld [vmem:[%s808 + $0x10] sm:$0xf]
      %v814 = vld [vmem:[%s808 + $0x14] sm:$0xf]
      %v815 = vld [vmem:[%s808 + $0x18] sm:$0xf]
      %v816 = vld [vmem:[%s808 + $0x1c] sm:$0xf]
      %v817 = vld [vmem:[%s808 + $0x20] sm:$0xf]
      %v818 = vld [vmem:[%s808 + $0x24] sm:$0xf]
      %v819 = vld [vmem:[%s808 + $0x28] sm:$0xf]
      %v820 = vld [vmem:[%s808 + $0x2c] sm:$0xf]
      %v821 = vld [vmem:[%s808 + $0x30] sm:$0xf]
      %v822 = vld [vmem:[%s808 + $0x34] sm:$0xf]
      %v823 = vld [vmem:[%s808 + $0x38] sm:$0xf]
      %v824 = vld [vmem:[%s808 + $0x3c] sm:$0xf]
      %v825 = vunpack.c.l.b16 %v765
      %v826 = vunpack.c.l.b16 %v779
      %v827 = vunpack.c.l.b16 %v793
      %v828 = vunpack.c.l.b16 %v807
      %v829 = vpack.c.b16 %v826, %v825
      %v830 = vpack.c.b16 %v828, %v827
      %v849 = vunpack.c.l.b16 %v809
      %v850 = vunpack.c.l.b16 %v810
      %v851 = vunpack.c.l.b16 %v811
      %v852 = vunpack.c.l.b16 %v812
      %v853 = vunpack.c.l.b16 %v813
      %v854 = vunpack.c.l.b16 %v814
      %v855 = vunpack.c.l.b16 %v815
      %v856 = vunpack.c.l.b16 %v816
      %v857 = vunpack.c.l.b16 %v817
      %v858 = vunpack.c.l.b16 %v818
      %v859 = vunpack.c.l.b16 %v819
      %v860 = vunpack.c.l.b16 %v820
      %v861 = vunpack.c.l.b16 %v821
      %v862 = vunpack.c.l.b16 %v822
      %v863 = vunpack.c.l.b16 %v823
      %v864 = vunpack.c.l.b16 %v824
      %v865 = vpack.c.b16 %v850, %v849
      %v866 = vpack.c.b16 %v852, %v851
      %v867 = vpack.c.b16 %v854, %v853
      %v868 = vpack.c.b16 %v856, %v855
      %v869 = vpack.c.b16 %v858, %v857
      %v870 = vpack.c.b16 %v860, %v859
      %v871 = vpack.c.b16 %v862, %v861
      %v872 = vpack.c.b16 %v864, %v863
      %881 = vmatpush.bf16.msra.mxu0 %v872
      %882 = vmatpush.bf16.msra.mxu0 %v871
      %883 = vmatpush.bf16.msra.mxu0 %v870
      %884 = vmatpush.bf16.msra.mxu0 %v869
      %885 = vmatpush.bf16.msra.mxu0 %v868
      %886 = vmatpush.bf16.msra.mxu0 %v867
      %887 = vmatpush.bf16.msra.mxu0 %v866
      %888 = vmatpush.bf16.msra.mxu0 %v865
      %889 = vmatmul.bf16.gmra.mxu0 %v829
      %v890 = vpop.f32.mrf.mxu0
      %v891 = vadd.f32 0.0, %v890
      %v892 = vpop.f32.mrf.mxu0
      %v893 = vadd.f32 0.0, %v892
      %894 = vmatmul.bf16.gmra.mxu0 %v830
      %v895 = vpop.f32.mrf.mxu0
      %v896 = vadd.f32 0.0, %v895
      %v897 = vpop.f32.mrf.mxu0
      %v898 = vadd.f32 0.0, %v897
      %899 = vdwg.mxu0
      %v900 = vadd.f32 %v740, %v891
      %v901 = vadd.f32 %v741, %v893
      %v902 = vadd.f32 %v742, %v896
      %v903 = vadd.f32 %v743, %v898
      %s904 = scalar_lea.vmem %s165, 8
      %v905 = vld [vmem:[%s904] sm:$0xf]
      %v906 = vld [vmem:[%s904 + $0x8] sm:$0xf]
      %v907 = vld [vmem:[%s904 + $0x10] sm:$0xf]
      %v908 = vld [vmem:[%s904 + $0x18] sm:$0xf]
      %s909 = scalar_lea.vmem %s1, 384
      %v910 = vld [vmem:[%s909] sm:$0xf]
      %v911 = vld [vmem:[%s909 + $0x4] sm:$0xf]
      %v912 = vld [vmem:[%s909 + $0x8] sm:$0xf]
      %v913 = vld [vmem:[%s909 + $0xc] sm:$0xf]
      %v914 = vld [vmem:[%s909 + $0x10] sm:$0xf]
      %v915 = vld [vmem:[%s909 + $0x14] sm:$0xf]
      %v916 = vld [vmem:[%s909 + $0x18] sm:$0xf]
      %v917 = vld [vmem:[%s909 + $0x1c] sm:$0xf]
      %v918 = vld [vmem:[%s909 + $0x20] sm:$0xf]
      %v919 = vld [vmem:[%s909 + $0x24] sm:$0xf]
      %v920 = vld [vmem:[%s909 + $0x28] sm:$0xf]
      %v921 = vld [vmem:[%s909 + $0x2c] sm:$0xf]
      %v922 = vld [vmem:[%s909 + $0x30] sm:$0xf]
      %v923 = vld [vmem:[%s909 + $0x34] sm:$0xf]
      %v924 = vld [vmem:[%s909 + $0x38] sm:$0xf]
      %v925 = vld [vmem:[%s909 + $0x3c] sm:$0xf]
      %v930 = vunpack.c.l.b16 %v905
      %v931 = vunpack.c.l.b16 %v906
      %v932 = vunpack.c.l.b16 %v907
      %v933 = vunpack.c.l.b16 %v908
      %v934 = vpack.c.b16 %v931, %v930
      %v935 = vpack.c.b16 %v933, %v932
      %v954 = vunpack.c.l.b16 %v910
      %v955 = vunpack.c.l.b16 %v911
      %v956 = vunpack.c.l.b16 %v912
      %v957 = vunpack.c.l.b16 %v913
      %v958 = vunpack.c.l.b16 %v914
      %v959 = vunpack.c.l.b16 %v915
      %v960 = vunpack.c.l.b16 %v916
      %v961 = vunpack.c.l.b16 %v917
      %v962 = vunpack.c.l.b16 %v918
      %v963 = vunpack.c.l.b16 %v919
      %v964 = vunpack.c.l.b16 %v920
      %v965 = vunpack.c.l.b16 %v921
      %v966 = vunpack.c.l.b16 %v922
      %v967 = vunpack.c.l.b16 %v923
      %v968 = vunpack.c.l.b16 %v924
      %v969 = vunpack.c.l.b16 %v925
      %v970 = vpack.c.b16 %v955, %v954
      %v971 = vpack.c.b16 %v957, %v956
      %v972 = vpack.c.b16 %v959, %v958
      %v973 = vpack.c.b16 %v961, %v960
      %v974 = vpack.c.b16 %v963, %v962
      %v975 = vpack.c.b16 %v965, %v964
      %v976 = vpack.c.b16 %v967, %v966
      %v977 = vpack.c.b16 %v969, %v968
      %986 = vmatpush.bf16.msra.mxu0 %v977
      %987 = vmatpush.bf16.msra.mxu0 %v976
      %988 = vmatpush.bf16.msra.mxu0 %v975
      %989 = vmatpush.bf16.msra.mxu0 %v974
      %990 = vmatpush.bf16.msra.mxu0 %v973
      %991 = vmatpush.bf16.msra.mxu0 %v972
      %992 = vmatpush.bf16.msra.mxu0 %v971
      %993 = vmatpush.bf16.msra.mxu0 %v970
      %994 = vmatmul.bf16.gmra.mxu0 %v934
      %v995 = vpop.f32.mrf.mxu0
      %v996 = vadd.f32 0.0, %v995
      %v997 = vpop.f32.mrf.mxu0
      %v998 = vadd.f32 0.0, %v997
      %999 = vmatmul.bf16.gmra.mxu0 %v935
      %v1000 = vpop.f32.mrf.mxu0
      %v1001 = vadd.f32 0.0, %v1000
      %v1002 = vpop.f32.mrf.mxu0
      %v1003 = vadd.f32 0.0, %v1002
      %1004 = vdwg.mxu0
      %v1005 = vadd.f32 %v900, %v996
      %v1006 = vadd.f32 %v901, %v998
      %v1007 = vadd.f32 %v902, %v1001
      %v1008 = vadd.f32 %v903, %v1003
      %s1009 = scalar_lea.vmem %s165, 48
      %v1010 = vld [vmem:[%s1009] sm:$0xf]
      %v1011 = vld [vmem:[%s1009 + $0x8] sm:$0xf]
      %v1012 = vld [vmem:[%s1009 + $0x10] sm:$0xf]
      %v1013 = vld [vmem:[%s1009 + $0x18] sm:$0xf]
      %s1014 = scalar_lea.vmem %s1, 448
      %v1015 = vld [vmem:[%s1014] sm:$0xf]
      %v1016 = vld [vmem:[%s1014 + $0x4] sm:$0xf]
      %v1017 = vld [vmem:[%s1014 + $0x8] sm:$0xf]
      %v1018 = vld [vmem:[%s1014 + $0xc] sm:$0xf]
      %v1019 = vld [vmem:[%s1014 + $0x10] sm:$0xf]
      %v1020 = vld [vmem:[%s1014 + $0x14] sm:$0xf]
      %v1021 = vld [vmem:[%s1014 + $0x18] sm:$0xf]
      %v1022 = vld [vmem:[%s1014 + $0x1c] sm:$0xf]
      %v1023 = vld [vmem:[%s1014 + $0x20] sm:$0xf]
      %v1024 = vld [vmem:[%s1014 + $0x24] sm:$0xf]
      %v1025 = vld [vmem:[%s1014 + $0x28] sm:$0xf]
      %v1026 = vld [vmem:[%s1014 + $0x2c] sm:$0xf]
      %v1027 = vld [vmem:[%s1014 + $0x30] sm:$0xf]
      %v1028 = vld [vmem:[%s1014 + $0x34] sm:$0xf]
      %v1029 = vld [vmem:[%s1014 + $0x38] sm:$0xf]
      %v1030 = vld [vmem:[%s1014 + $0x3c] sm:$0xf]
      %v1035 = vunpack.c.l.b16 %v1010
      %v1036 = vunpack.c.l.b16 %v1011
      %v1037 = vunpack.c.l.b16 %v1012
      %v1038 = vunpack.c.l.b16 %v1013
      %v1039 = vpack.c.b16 %v1036, %v1035
      %v1040 = vpack.c.b16 %v1038, %v1037
      %v1059 = vunpack.c.l.b16 %v1015
      %v1060 = vunpack.c.l.b16 %v1016
      %v1061 = vunpack.c.l.b16 %v1017
      %v1062 = vunpack.c.l.b16 %v1018
      %v1063 = vunpack.c.l.b16 %v1019
      %v1064 = vunpack.c.l.b16 %v1020
      %v1065 = vunpack.c.l.b16 %v1021
      %v1066 = vunpack.c.l.b16 %v1022
      %v1067 = vunpack.c.l.b16 %v1023
      %v1068 = vunpack.c.l.b16 %v1024
      %v1069 = vunpack.c.l.b16 %v1025
      %v1070 = vunpack.c.l.b16 %v1026
      %v1071 = vunpack.c.l.b16 %v1027
      %v1072 = vunpack.c.l.b16 %v1028
      %v1073 = vunpack.c.l.b16 %v1029
      %v1074 = vunpack.c.l.b16 %v1030
      %v1075 = vpack.c.b16 %v1060, %v1059
      %v1076 = vpack.c.b16 %v1062, %v1061
      %v1077 = vpack.c.b16 %v1064, %v1063
      %v1078 = vpack.c.b16 %v1066, %v1065
      %v1079 = vpack.c.b16 %v1068, %v1067
      %v1080 = vpack.c.b16 %v1070, %v1069
      %v1081 = vpack.c.b16 %v1072, %v1071
      %v1082 = vpack.c.b16 %v1074, %v1073
      %1091 = vmatpush.bf16.msra.mxu0 %v1082
      %1092 = vmatpush.bf16.msra.mxu0 %v1081
      %1093 = vmatpush.bf16.msra.mxu0 %v1080
      %1094 = vmatpush.bf16.msra.mxu0 %v1079
      %1095 = vmatpush.bf16.msra.mxu0 %v1078
      %1096 = vmatpush.bf16.msra.mxu0 %v1077
      %1097 = vmatpush.bf16.msra.mxu0 %v1076
      %1098 = vmatpush.bf16.msra.mxu0 %v1075
      %1099 = vmatmul.bf16.gmra.mxu0 %v1039
      %v1100 = vpop.f32.mrf.mxu0
      %v1101 = vadd.f32 0.0, %v1100
      %v1102 = vpop.f32.mrf.mxu0
      %v1103 = vadd.f32 0.0, %v1102
      %1104 = vmatmul.bf16.gmra.mxu0 %v1040
      %v1105 = vpop.f32.mrf.mxu0
      %v1106 = vadd.f32 0.0, %v1105
      %v1107 = vpop.f32.mrf.mxu0
      %v1108 = vadd.f32 0.0, %v1107
      %1109 = vdwg.mxu0
      %v1110 = vadd.f32 %v1005, %v1101
      %v1111 = vadd.f32 %v1006, %v1103
      %v1112 = vadd.f32 %v1007, %v1106
      %v1113 = vadd.f32 %v1008, %v1108
      %v1114 = vld [vmem:[%s904] sm:$0xf]
      %v1115 = vld [vmem:[%s904 + $0x4] sm:$0x1]
      %v1116 = vld [vmem:[%s904 + $0x8] sm:$0xf]
      %v1117 = vld [vmem:[%s904 + $0xc] sm:$0x1]
      %v1118 = vld [vmem:[%s904 + $0x10] sm:$0xf]
      %v1119 = vld [vmem:[%s904 + $0x14] sm:$0x1]
      %v1120 = vld [vmem:[%s904 + $0x18] sm:$0xf]
      %v1121 = vld [vmem:[%s904 + $0x1c] sm:$0x1]
      %v1123 = vshrl.u32 %v1114, 16
      %v1125 = vrot.slane %v1123, 4
      %v1126 = vshll.u32 %v1114, 16
      %v1128 = vrot.slane %v1126, 5
      %v1129 = vor.u32 %v1125, %v1128
      %v1130 = vrot.slane %v1129, 4
      %v1132 = vshll.u32 %v1115, 16
      %v1134 = vrot.slane %v1132, 5
      %v1135 = vsel %vm381, %v1130, %v1134
      %v1137 = vshrl.u32 %v1116, 16
      %v1139 = vrot.slane %v1137, 4
      %v1140 = vshll.u32 %v1116, 16
      %v1142 = vrot.slane %v1140, 5
      %v1143 = vor.u32 %v1139, %v1142
      %v1144 = vrot.slane %v1143, 4
      %v1146 = vshll.u32 %v1117, 16
      %v1148 = vrot.slane %v1146, 5
      %v1149 = vsel %vm381, %v1144, %v1148
      %v1151 = vshrl.u32 %v1118, 16
      %v1153 = vrot.slane %v1151, 4
      %v1154 = vshll.u32 %v1118, 16
      %v1156 = vrot.slane %v1154, 5
      %v1157 = vor.u32 %v1153, %v1156
      %v1158 = vrot.slane %v1157, 4
      %v1160 = vshll.u32 %v1119, 16
      %v1162 = vrot.slane %v1160, 5
      %v1163 = vsel %vm381, %v1158, %v1162
      %v1165 = vshrl.u32 %v1120, 16
      %v1167 = vrot.slane %v1165, 4
      %v1168 = vshll.u32 %v1120, 16
      %v1170 = vrot.slane %v1168, 5
      %v1171 = vor.u32 %v1167, %v1170
      %v1172 = vrot.slane %v1171, 4
      %v1174 = vshll.u32 %v1121, 16
      %v1176 = vrot.slane %v1174, 5
      %v1177 = vsel %vm381, %v1172, %v1176
      %s1178 = scalar_lea.vmem %s1, 512
      %v1179 = vld [vmem:[%s1178] sm:$0xf]
      %v1180 = vld [vmem:[%s1178 + $0x4] sm:$0xf]
      %v1181 = vld [vmem:[%s1178 + $0x8] sm:$0xf]
      %v1182 = vld [vmem:[%s1178 + $0xc] sm:$0xf]
      %v1183 = vld [vmem:[%s1178 + $0x10] sm:$0xf]
      %v1184 = vld [vmem:[%s1178 + $0x14] sm:$0xf]
      %v1185 = vld [vmem:[%s1178 + $0x18] sm:$0xf]
      %v1186 = vld [vmem:[%s1178 + $0x1c] sm:$0xf]
      %v1187 = vld [vmem:[%s1178 + $0x20] sm:$0xf]
      %v1188 = vld [vmem:[%s1178 + $0x24] sm:$0xf]
      %v1189 = vld [vmem:[%s1178 + $0x28] sm:$0xf]
      %v1190 = vld [vmem:[%s1178 + $0x2c] sm:$0xf]
      %v1191 = vld [vmem:[%s1178 + $0x30] sm:$0xf]
      %v1192 = vld [vmem:[%s1178 + $0x34] sm:$0xf]
      %v1193 = vld [vmem:[%s1178 + $0x38] sm:$0xf]
      %v1194 = vld [vmem:[%s1178 + $0x3c] sm:$0xf]
      %v1195 = vunpack.c.l.b16 %v1135
      %v1196 = vunpack.c.l.b16 %v1149
      %v1197 = vunpack.c.l.b16 %v1163
      %v1198 = vunpack.c.l.b16 %v1177
      %v1199 = vpack.c.b16 %v1196, %v1195
      %v1200 = vpack.c.b16 %v1198, %v1197
      %v1219 = vunpack.c.l.b16 %v1179
      %v1220 = vunpack.c.l.b16 %v1180
      %v1221 = vunpack.c.l.b16 %v1181
      %v1222 = vunpack.c.l.b16 %v1182
      %v1223 = vunpack.c.l.b16 %v1183
      %v1224 = vunpack.c.l.b16 %v1184
      %v1225 = vunpack.c.l.b16 %v1185
      %v1226 = vunpack.c.l.b16 %v1186
      %v1227 = vunpack.c.l.b16 %v1187
      %v1228 = vunpack.c.l.b16 %v1188
      %v1229 = vunpack.c.l.b16 %v1189
      %v1230 = vunpack.c.l.b16 %v1190
      %v1231 = vunpack.c.l.b16 %v1191
      %v1232 = vunpack.c.l.b16 %v1192
      %v1233 = vunpack.c.l.b16 %v1193
      %v1234 = vunpack.c.l.b16 %v1194
      %v1235 = vpack.c.b16 %v1220, %v1219
      %v1236 = vpack.c.b16 %v1222, %v1221
      %v1237 = vpack.c.b16 %v1224, %v1223
      %v1238 = vpack.c.b16 %v1226, %v1225
      %v1239 = vpack.c.b16 %v1228, %v1227
      %v1240 = vpack.c.b16 %v1230, %v1229
      %v1241 = vpack.c.b16 %v1232, %v1231
      %v1242 = vpack.c.b16 %v1234, %v1233
      %1251 = vmatpush.bf16.msra.mxu0 %v1242
      %1252 = vmatpush.bf16.msra.mxu0 %v1241
      %1253 = vmatpush.bf16.msra.mxu0 %v1240
      %1254 = vmatpush.bf16.msra.mxu0 %v1239
      %1255 = vmatpush.bf16.msra.mxu0 %v1238
      %1256 = vmatpush.bf16.msra.mxu0 %v1237
      %1257 = vmatpush.bf16.msra.mxu0 %v1236
      %1258 = vmatpush.bf16.msra.mxu0 %v1235
      %1259 = vmatmul.bf16.gmra.mxu0 %v1199
      %v1260 = vpop.f32.mrf.mxu0
      %v1261 = vadd.f32 0.0, %v1260
      %v1262 = vpop.f32.mrf.mxu0
      %v1263 = vadd.f32 0.0, %v1262
      %1264 = vmatmul.bf16.gmra.mxu0 %v1200
      %v1265 = vpop.f32.mrf.mxu0
      %v1266 = vadd.f32 0.0, %v1265
      %v1267 = vpop.f32.mrf.mxu0
      %v1268 = vadd.f32 0.0, %v1267
      %1269 = vdwg.mxu0
      %v1270 = vadd.f32 %v1110, %v1261
      %v1271 = vadd.f32 %v1111, %v1263
      %v1272 = vadd.f32 %v1112, %v1266
      %v1273 = vadd.f32 %v1113, %v1268
      %v1274 = vld [vmem:[%s2] sm:$0x1]
      %v1276 = vperm.slane %v1274, 0
      %v1278 = vadd.f32 %v1270, %v1276
      %v1279 = vadd.f32 %v1271, %v1276
      %v1280 = vadd.f32 %v1272, %v1276
      %v1281 = vadd.f32 %v1273, %v1276
      %v1282 = vmax.f32 %v1278, 0.0
      %v1283 = vmax.f32 %v1279, 0.0
      %v1284 = vmax.f32 %v1280, 0.0
      %v1285 = vmax.f32 %v1281, 0.0
      %v1286 = vpack.c.bf16 %v1282, %v1282
      %v1287 = vpack.c.bf16 %v1283, %v1283
      %v1288 = vpack.c.bf16 %v1284, %v1284
      %v1289 = vpack.c.bf16 %v1285, %v1285
      %1290 = vst [vmem:[%s170] sm:$0xf] %v1286
      %1291 = vst [vmem:[%s170 + $0x4] sm:$0xf] %v1287
      %1292 = vst [vmem:[%s170 + $0x8] sm:$0xf] %v1288
      %1293 = vst [vmem:[%s170 + $0xc] sm:$0xf] %v1289
      %p1294 = scmp.lt.s32.totalorder %s14, 1
      %s1295 = scalar_select %p1294, %s14, 1
      %s1296 = smul.addr %s1295, 4
      %s1297 = smul.addr %s1296, 4
      %s1298 = scalar_lea.vmem %s3, %s1297
      // Predicated region
      $region33: #{resnext_forward.15} parent=31 // pred_check
        %p1299 = pneg %p100
      $region34: #{resnext_forward.15} parent=31 // pred_check_branch
        %1301 = sbr.rel (%p1299) target = $region36
      $region35: #{resnext_forward.15} parent=31 // pred_region
        _
      $region36: #{resnext_forward.15} parent=31 // pred_fallthru
        _
    $region32: #{resnext_forward.15} parent=5 // pred_fallthru
      _
    %p1302 = scmp.le.s32.totalorder 2, %s9
    // Predicated region
    $region37: #{resnext_forward.15} parent=5 // pred_check
      %p1303 = pneg %p1302
    $region38: #{resnext_forward.15} parent=5 // pred_check_branch
      %1305 = sbr.rel (%p1303) target = $region40
    $region39: #{resnext_forward.15} parent=5 // pred_region
      %s1306 = ssub.s32 %s9, 2
      // Predicated region
      $region41: #{resnext_forward.15} parent=39 // pred_check
        %p1307 = pneg %p106
      $region42: #{resnext_forward.15} parent=39 // pred_check_branch
        %1309 = sbr.rel (%p1307) target = $region44
      $region43: #{resnext_forward.15} parent=39 // pred_region
        %p1310 = scmp.lt.s32.totalorder %s15, 1
        %s1311 = scalar_select %p1310, %s15, 1
        %s1312 = smul.addr %s1311, 4
        %s1313 = smul.addr %s1312, 4
        %s1314 = scalar_lea.vmem %s3, %s1313
      $region44: #{resnext_forward.15} parent=39 // pred_fallthru
        _
    $region40: #{resnext_forward.15} parent=5 // pred_fallthru
      _
  $region6: #{resnext_forward.15} parent=0 // loop_footer
    %s13 = sadd.s32 1, %s9
  $region7: #{resnext_forward.15} parent=0 // loop_footer_branch
    %8 = sbr.rel target = $region3
  $region8: #{resnext_forward.15} parent=0 // loop_exit
    _

</llo_original>
